<compile_context>
chip_gen: v7x
topology: tpu7x:2x2x1
jax: 0.10.0
libtpu: 0.0.40
codegen_flags: <defaults>
</compile_context>

<pallas_src>
import functools

import jax
import jax.numpy as jnp
from jax import lax
from jax.experimental import pallas as pl
from jax.experimental.pallas import tpu as pltpu


# -------------------------- helpers --------------------------

def _layernorm(h, g, b, eps=1e-5):
    # One-pass LayerNorm: mean and mean-of-squares are independent cross-lane
    # reductions (they can overlap on the XLU instead of serializing).
    m = jnp.mean(h, axis=-1, keepdims=True)
    m2 = jnp.mean(h * h, axis=-1, keepdims=True)
    var = m2 - m * m
    return (h - m) * lax.rsqrt(var + eps) * g + b


def pick_tile_s(S, cap=512):
    """Largest multiple-of-8 divisor of S (<= cap).

    No forced '>=2 grid steps': splitting small S across the two v7x cores
    starves the 256-wide MXU and doubles per-step overhead, so a single big
    tile wins for small S.  For S=128 this returns 128 (also a multiple of 128,
    which suits v5e's 4x128^2 MXU)."""
    best = min(S, 8)
    for t in range(8, min(S, cap) + 1, 8):
        if S % t == 0:
            best = t
    return best


def _vmem_limit_bytes(tile_s, D, FF, L, Cpad):
    resident = (L * (D * D + 2 * D * FF) * 2        # wvo, w1, w2 stacks (bf16)
                + L * (6 * D + FF) * 4              # per-layer biases / LN params (f32)
                + 2 * D * 4                          # shared encoder_norm
                + D * Cpad * 2)                      # padded final weight (bf16)
    per_step = (tile_s * D * 2                       # x tile (bf16)
                + 2 * tile_s * 4                     # two row-mask tiles
                + tile_s * Cpad * 4)                 # out tile (f32)
    temps = tile_s * (2 * D + FF) * 4                # h / ff / carry temporaries (f32)
    est = resident + 2 * per_step + temps            # in/out tiles double-buffered
    # TODO(synk): if the resident weight stack approaches v7x's 64 MiB VMEM
    # (e.g. d_model=512, FF=2048, L=10 ~ 52 MB), switch W1/W2 to per-layer
    # streamed blocks with pipeline_mode=pl.Buffered(3) instead of residency.
    return int(min(64 * 2**20, max(32 * 2**20, int(est * 1.5))))


# -------------------------- pre_conv kernel --------------------------

def _pre_conv_kernel(x_ref, w_ref, o_ref):
    # y[d, hw] = sum_cin W[d, cin] * x[cin, hw]  (1x1 conv on the NCHW layout),
    # so the later PyTorch-style raw x.view(B*H*W, C) is a free reshape.
    y = jnp.dot(w_ref[...], x_ref[...].astype(jnp.bfloat16),
                preferred_element_type=jnp.float32)
    o_ref[...] = y.astype(jnp.bfloat16)


def pre_conv_pallas(x_nchw, w_bf16):
    B, Cin, H, W = x_nchw.shape
    D = w_bf16.shape[0]
    HW = H * W
    x2 = x_nchw.reshape(B, Cin, HW)
    # TODO(synk): with HW < 128 the (D, HW) writeback uses masked lane stores;
    # padding HW would change the raw x.view(B*H*W, C) semantics and the whole
    # array is tiny (bf16 output already halves the traffic), so we accept it.
    y = pl.pallas_call(
        _pre_conv_kernel,
        out_shape=jax.ShapeDtypeStruct((B, D, HW), jnp.bfloat16),
        grid=(B,),
        in_specs=[pl.BlockSpec((None, Cin, HW), lambda b: (b, 0, 0)),
                  pl.BlockSpec((D, Cin), lambda b: (0, 0))],
        out_specs=pl.BlockSpec((None, D, HW), lambda b: (b, 0, 0)),
        compiler_params=pltpu.CompilerParams(dimension_semantics=("parallel",)),
    )(x2, w_bf16)
    # Row-major reshape of the NCHW buffer == PyTorch x.view(B*H*W, C).
    return y.reshape(B * HW, D)


# -------------------------- fused transformer kernel --------------------------

def _fused_utrans_kernel(x_ref, rm2_ref, rm3_ref,
                         wvo_ref, bvo_ref,
                         g1_ref, be1_ref, w1_ref, b1_ref,
                         w2_ref, b2_ref, g2_ref, be2_ref,
                         gn_ref, bn_ref, wf_ref,
                         o_ref, *, n_per_block, cols2):
    # ---- mask_level2: zero first `cols2` feature cols + level-2 rows ----
    x = x_ref[...].astype(jnp.float32)
    col_ids = lax.broadcasted_iota(jnp.int32, x.shape, 1)
    x = jnp.where(col_ids < cols2, 0.0, x)
    x = jnp.where(rm2_ref[...] > 0.0, x, 0.0)

    def layer(l, x):
        # seq_len == 1 => MHA(x,x,x) == x @ (Wv^T Wo^T) + (bv Wo^T + bo); the
        # fold is precomputed at init so one D x D matmul does the attention.
        xb = x.astype(jnp.bfloat16)
        attn = jnp.dot(xb, wvo_ref[l], preferred_element_type=jnp.float32) + bvo_ref[l]
        h = _layernorm(x + attn, g1_ref[l], be1_ref[l])                  # norm1 (post-norm)
        ff = jnp.dot(h.astype(jnp.bfloat16), w1_ref[l],
                     preferred_element_type=jnp.float32) + b1_ref[l]
        ff = jnp.maximum(ff, 0.0)                                        # activation = relu
        ff = jnp.dot(ff.astype(jnp.bfloat16), w2_ref[l],
                     preferred_element_type=jnp.float32) + b2_ref[l]
        return _layernorm(h + ff, g2_ref[l], be2_ref[l])                 # norm2

    # ---- encoder block 1 (layers [0, N)) + shared encoder_norm ----
    x = lax.fori_loop(0, n_per_block, layer, x)
    x = _layernorm(x, gn_ref[...], bn_ref[...])
    # ---- mask_level3: zero level-3 rows ----
    x = jnp.where(rm3_ref[...] > 0.0, x, 0.0)
    # ---- encoder block 2 (layers [N, 2N)) + shared encoder_norm ----
    x = lax.fori_loop(n_per_block, 2 * n_per_block, layer, x)
    x = _layernorm(x, gn_ref[...], bn_ref[...])
    # ---- final 1x1 conv, lane-dense (weight zero-padded to Cpad columns) ----
    o_ref[...] = jnp.dot(x.astype(jnp.bfloat16), wf_ref[...],
                         preferred_element_type=jnp.float32)


def fused_utransformer_pallas(x, rm2, rm3, p, *, n_per_block, cols2, tile_s):
    S, D = x.shape
    L = 2 * n_per_block
    FF = p["w1_t"].shape[-1]
    Cpad = p["final_w_pad"].shape[-1]
    assert S % tile_s == 0, (S, tile_s)
    assert p["wvo_t"].shape[0] == L

    def resident(arr):
        # Full-array block, constant index_map: DMA'd once, VMEM-resident for
        # the whole call (Pallas skips refetch when the block index repeats).
        nd = arr.ndim
        return pl.BlockSpec(arr.shape, lambda i, _nd=nd: (0,) * _nd)

    x_spec = pl.BlockSpec((tile_s, D), lambda i: (i, 0))
    row_spec = pl.BlockSpec((tile_s, 1), lambda i: (i, 0))
    out_spec = pl.BlockSpec((tile_s, Cpad), lambda i: (i, 0))

    kernel = functools.partial(_fused_utrans_kernel,
                               n_per_block=n_per_block, cols2=cols2)
    return pl.pallas_call(
        kernel,
        out_shape=jax.ShapeDtypeStruct((S, Cpad), jnp.float32),
        grid=(S // tile_s,),
        in_specs=[
            x_spec, row_spec, row_spec,
            resident(p["wvo_t"]), resident(p["bvo"]),
            resident(p["g1"]), resident(p["be1"]),
            resident(p["w1_t"]), resident(p["b1"]),
            resident(p["w2_t"]), resident(p["b2"]),
            resident(p["g2"]), resident(p["be2"]),
            resident(p["enc_norm_g"]), resident(p["enc_norm_b"]),
            resident(p["final_w_pad"]),
        ],
        out_specs=out_spec,
        compiler_params=pltpu.CompilerParams(
            dimension_semantics=("parallel",),
            vmem_limit_bytes=_vmem_limit_bytes(tile_s, D, FF, L, Cpad)),
    )(x, rm2, rm3,
      p["wvo_t"], p["bvo"], p["g1"], p["be1"], p["w1_t"], p["b1"],
      p["w2_t"], p["b2"], p["g2"], p["be2"],
      p["enc_norm_g"], p["enc_norm_b"], p["final_w_pad"])


# -------------------------- parameters (deterministic, synthetic) --------------------------

def init_params(key, *, input_dim, d_model, dim_ff, n_layers_per_block):
    L = 2 * n_layers_per_block          # layers [0,N) = encoder[1], [N,2N) = encoder[2]
    keys = iter(jax.random.split(key, 32))
    nrm = lambda k, shape, scale: scale * jax.random.normal(k, shape, jnp.float32)
    p = {}
    # pre_conv: Conv2d(input_dim, d_model, 1, bias=False); weight (d_model, input_dim), bf16.
    p["pre_conv_w"] = nrm(next(keys), (d_model, input_dim), 0.1).astype(jnp.bfloat16)
    # final_layer1: Conv2d(d_model, input_dim, 1, bias=False); weight^T, zero-padded on the
    # output-channel axis to a multiple of 128 so the fused epilogue store is lane-dense.
    c_pad = max(128, -(-input_dim // 128) * 128)
    fw = nrm(next(keys), (d_model, input_dim), 0.1)
    p["final_w_pad"] = (jnp.zeros((d_model, c_pad), jnp.float32)
                        .at[:, :input_dim].set(fw).astype(jnp.bfloat16))
    # Shared encoder_norm (same LayerNorm is the final norm of encoder[1] AND encoder[2]).
    p["enc_norm_g"] = jnp.ones((1, d_model), jnp.float32)
    p["enc_norm_b"] = jnp.zeros((1, d_model), jnp.float32)
    # Per-layer attention weights, folded (seq_len == 1 makes MHA purely linear):
    #   attn = x @ Wv^T @ Wo^T + (bv @ Wo^T + bo)
    wv_t = nrm(next(keys), (L, d_model, d_model), 0.05)
    bv = nrm(next(keys), (L, 1, d_model), 0.02)
    wo_t = nrm(next(keys), (L, d_model, d_model), 0.05)
    bo = nrm(next(keys), (L, 1, d_model), 0.02)
    p["wvo_t"] = jnp.einsum("lij,ljk->lik", wv_t, wo_t).astype(jnp.bfloat16)
    p["bvo"] = jnp.einsum("lij,ljk->lik", bv, wo_t) + bo
    # Per-layer FFN / LayerNorm params stacked on the leading layer axis.
    p["g1"] = jnp.ones((L, 1, d_model), jnp.float32)
    p["be1"] = jnp.zeros((L, 1, d_model), jnp.float32)
    p["w1_t"] = nrm(next(keys), (L, d_model, dim_ff), 0.05).astype(jnp.bfloat16)
    p["b1"] = nrm(next(keys), (L, 1, dim_ff), 0.02)
    p["w2_t"] = nrm(next(keys), (L, dim_ff, d_model), 0.05).astype(jnp.bfloat16)
    p["b2"] = nrm(next(keys), (L, 1, d_model), 0.02)
    p["g2"] = jnp.ones((L, 1, d_model), jnp.float32)
    p["be2"] = jnp.zeros((L, 1, d_model), jnp.float32)
    return p


# -------------------------- forward --------------------------

def utransformer_forward(params, x_nchw, rm2, rm3, *, cols2, n_per_block, tile_s):
    Cin = x_nchw.shape[1]
    # pre_conv (1x1, no bias) computed directly in NCHW; the PyTorch
    # x.view(B*H*W, C).unsqueeze(0) raw reshape happens inside pre_conv_pallas.
    x = pre_conv_pallas(x_nchw, params["pre_conv_w"])            # (B*H*W, d_model) bf16
    # Masks, both encoder blocks (layer loop in-kernel, resident weights),
    # shared encoder_norm, and the final 1x1 conv are a single fused pallas_call.
    out = fused_utransformer_pallas(x, rm2, rm3, params,
                                    n_per_block=n_per_block,
                                    cols2=cols2, tile_s=tile_s)  # (B*H*W, Cpad) f32
    # TODO(synk): PyTorch's final_layer1 (Conv2d) would raise on the 3-D
    # (1, S, d_model) tensor; we apply the 1x1 conv as the equivalent pointwise
    # linear over the channel dim (fused above), giving (1, S, input_dim).
    return out[:, :Cin][None]                                    # (1, S, input_dim)


# -------------------------- demo --------------------------

if __name__ == "__main__":
    # Small shapes consistent with the module (scaled down from the defaults).
    B, Cin, H, W = 2, 8, 8, 8          # input_dim = Cin
    D, FF = 128, 256                   # d_model, dim_feedforward (nhead moot: seq_len==1)
    N_LAYERS = 2                       # layers per encoder block (module default is 5)
    S = B * H * W                      # 128 tokens after the view
    LEVEL2_ROWS, LEVEL2_COLS, LEVEL3_ROWS = 70, 5, 15

    tile_s = pick_tile_s(S)            # 128 at S=128: one MXU-friendly tile, one grid step

    key = jax.random.PRNGKey(0)
    kx, kp, k2, k3 = jax.random.split(key, 4)
    x = jax.random.normal(kx, (B, Cin, H, W), jnp.float32)
    params = init_params(kp, input_dim=Cin, d_model=D, dim_ff=FF,
                         n_layers_per_block=N_LAYERS)

    # Deterministic stand-in for random.sample in mask_level{2,3}: 0/1 row masks
    # (exactly "set those rows to zero", applied with jnp.where in-kernel).
    rows2 = jax.random.choice(k2, S, (LEVEL2_ROWS,), replace=False)
    rows3 = jax.random.choice(k3, S, (LEVEL3_ROWS,), replace=False)
    rm2 = jnp.ones((S, 1), jnp.float32).at[rows2].set(0.0)
    rm3 = jnp.ones((S, 1), jnp.float32).at[rows3].set(0.0)

    fwd = jax.jit(functools.partial(utransformer_forward, cols2=LEVEL2_COLS,
                                    n_per_block=N_LAYERS, tile_s=tile_s))
    out = fwd(params, x, rm2, rm3)
    out = jax.block_until_ready(out)
    assert out.shape == (1, S, Cin), out.shape
    assert out.dtype == jnp.float32
    assert bool(jnp.all(jnp.isfinite(out)))
    print("KERNEL_OK")
</pallas_src>

<mosaic_0001>
module attributes {stable_mosaic.version = 11 : i64} {
  func.func @_pre_conv_kernel(%arg0: i32, %arg1: memref<1x8x64xf32, #tpu.memory_space<vmem>>, %arg2: memref<128x8xbf16, #tpu.memory_space<vmem>>, %arg3: memref<1x128x64xbf16, #tpu.memory_space<vmem>>) attributes {dimension_semantics = [#tpu.dimension_semantics<parallel>], iteration_bounds = array<i64: 2>, scalar_prefetch = 0 : i64, scratch_operands = 0 : i64, tpu.core_type = #tpu.core_type<tc>, window_params = [{transform_indices = @transform_0, window_bounds = array<i64: 1, 8, 64>}, {pipeline_mode = #tpu.pipeline_mode<synchronous>, transform_indices = @transform_1, window_bounds = array<i64: 128, 8>}, {transform_indices = @transform_2, window_bounds = array<i64: 1, 128, 64>}]} {
    %c0 = arith.constant 0 : index
    %c0_0 = arith.constant 0 : index
    %0 = vector.load %arg2[%c0, %c0_0] : memref<128x8xbf16, #tpu.memory_space<vmem>>, vector<128x8xbf16>
    %c0_1 = arith.constant 0 : index
    %c0_2 = arith.constant 0 : index
    %c0_3 = arith.constant 0 : index
    %1 = vector.load %arg1[%c0_1, %c0_2, %c0_3] : memref<1x8x64xf32, #tpu.memory_space<vmem>>, vector<1x8x64xf32>
    %2 = vector.shape_cast %1 : vector<1x8x64xf32> to vector<8x64xf32>
    %3 = arith.truncf %2 : vector<8x64xf32> to vector<8x64xbf16>
    %cst = arith.constant dense<0.000000e+00> : vector<128x64xf32>
    %4 = tpu.matmul %0, %3, %cst {dimension_numbers = #tpu.dot_dimension_numbers<[1], [0], [0], [1], [0, 0, 1, 1], [], []>} : vector<128x8xbf16>, vector<8x64xbf16>, vector<128x64xf32> -> vector<128x64xf32>
    %5 = arith.truncf %4 : vector<128x64xf32> to vector<128x64xbf16>
    %c0_4 = arith.constant 0 : index
    %c0_5 = arith.constant 0 : index
    %c0_6 = arith.constant 0 : index
    %6 = vector.load %arg3[%c0_4, %c0_5, %c0_6] : memref<1x128x64xbf16, #tpu.memory_space<vmem>>, vector<1x128x64xbf16>
    %7 = vector.shape_cast %6 : vector<1x128x64xbf16> to vector<128x64xbf16>
    %8 = vector.shape_cast %5 : vector<128x64xbf16> to vector<1x128x64xbf16>
    tpu.vector_store %arg3[%c0_4, %c0_5, %c0_6], %8 {strides = array<i32>} : memref<1x128x64xbf16, #tpu.memory_space<vmem>>, vector<1x128x64xbf16>,
    return
  }
  func.func @transform_0(%arg0: i32) -> (i32, i32, i32) {
    %c0_i32 = arith.constant 0 : i32
    %c0_i32_0 = arith.constant 0 : i32
    %c0_i32_1 = arith.constant 0 : i32
    return %arg0, %c0_i32, %c0_i32_0 : i32, i32, i32
  }
  func.func @transform_1(%arg0: i32) -> (i32, i32) {
    %c0_i32 = arith.constant 0 : i32
    %c0_i32_0 = arith.constant 0 : i32
    %c0_i32_1 = arith.constant 0 : i32
    return %c0_i32, %c0_i32_0 : i32, i32
  }
  func.func @transform_2(%arg0: i32) -> (i32, i32, i32) {
    %c0_i32 = arith.constant 0 : i32
    %c0_i32_0 = arith.constant 0 : i32
    %c0_i32_1 = arith.constant 0 : i32
    return %arg0, %c0_i32, %c0_i32_0 : i32, i32, i32
  }
}

module attributes {stable_mosaic.version = 11 : i64} {
  func.func @_fused_utrans_kernel(%arg0: i32, %arg1: memref<128x128xbf16, #tpu.memory_space<vmem>>, %arg2: memref<128x1xf32, #tpu.memory_space<vmem>>, %arg3: memref<128x1xf32, #tpu.memory_space<vmem>>, %arg4: memref<4x128x128xbf16, #tpu.memory_space<vmem>>, %arg5: memref<4x1x128xf32, #tpu.memory_space<vmem>>, %arg6: memref<4x1x128xf32, #tpu.memory_space<vmem>>, %arg7: memref<4x1x128xf32, #tpu.memory_space<vmem>>, %arg8: memref<4x128x256xbf16, #tpu.memory_space<vmem>>, %arg9: memref<4x1x256xf32, #tpu.memory_space<vmem>>, %arg10: memref<4x256x128xbf16, #tpu.memory_space<vmem>>, %arg11: memref<4x1x128xf32, #tpu.memory_space<vmem>>, %arg12: memref<4x1x128xf32, #tpu.memory_space<vmem>>, %arg13: memref<4x1x128xf32, #tpu.memory_space<vmem>>, %arg14: memref<1x128xf32, #tpu.memory_space<vmem>>, %arg15: memref<1x128xf32, #tpu.memory_space<vmem>>, %arg16: memref<128x128xbf16, #tpu.memory_space<vmem>>, %arg17: memref<128x128xf32, #tpu.memory_space<vmem>>) attributes {dimension_semantics = [#tpu.dimension_semantics<parallel>], iteration_bounds = array<i64: 1>, scalar_prefetch = 0 : i64, scratch_operands = 0 : i64, tpu.core_type = #tpu.core_type<tc>, window_params = [{transform_indices = @transform_0, window_bounds = array<i64: 128, 128>}, {transform_indices = @transform_1, window_bounds = array<i64: 128, 1>}, {transform_indices = @transform_2, window_bounds = array<i64: 128, 1>}, {pipeline_mode = #tpu.pipeline_mode<synchronous>, transform_indices = @transform_3, window_bounds = array<i64: 4, 128, 128>}, {pipeline_mode = #tpu.pipeline_mode<synchronous>, transform_indices = @transform_4, window_bounds = array<i64: 4, 1, 128>}, {pipeline_mode = #tpu.pipeline_mode<synchronous>, transform_indices = @transform_5, window_bounds = array<i64: 4, 1, 128>}, {pipeline_mode = #tpu.pipeline_mode<synchronous>, transform_indices = @transform_6, window_bounds = array<i64: 4, 1, 128>}, {pipeline_mode = #tpu.pipeline_mode<synchronous>, transform_indices = @transform_7, window_bounds = array<i64: 4, 128, 256>}, {pipeline_mode = #tpu.pipeline_mode<synchronous>, transform_indices = @transform_8, window_bounds = array<i64: 4, 1, 256>}, {pipeline_mode = #tpu.pipeline_mode<synchronous>, transform_indices = @transform_9, window_bounds = array<i64: 4, 256, 128>}, {pipeline_mode = #tpu.pipeline_mode<synchronous>, transform_indices = @transform_10, window_bounds = array<i64: 4, 1, 128>}, {pipeline_mode = #tpu.pipeline_mode<synchronous>, transform_indices = @transform_11, window_bounds = array<i64: 4, 1, 128>}, {pipeline_mode = #tpu.pipeline_mode<synchronous>, transform_indices = @transform_12, window_bounds = array<i64: 4, 1, 128>}, {pipeline_mode = #tpu.pipeline_mode<synchronous>, transform_indices = @transform_13, window_bounds = array<i64: 1, 128>}, {pipeline_mode = #tpu.pipeline_mode<synchronous>, transform_indices = @transform_14, window_bounds = array<i64: 1, 128>}, {pipeline_mode = #tpu.pipeline_mode<synchronous>, transform_indices = @transform_15, window_bounds = array<i64: 128, 128>}, {transform_indices = @transform_16, window_bounds = array<i64: 128, 128>}]} {
    %c0 = arith.constant 0 : index
    %c0_0 = arith.constant 0 : index
    %0 = vector.load %arg1[%c0, %c0_0] : memref<128x128xbf16, #tpu.memory_space<vmem>>, vector<128x128xbf16>
    %1 = arith.extf %0 : vector<128x128xbf16> to vector<128x128xf32>
    %2 = tpu.iota {dimensions = array<i32: 1>} : vector<128x128xi32>
    %c5_i32 = arith.constant 5 : i32
    %3 = vector.broadcast %c5_i32 : i32 to vector<128x128xi32>
    %4 = arith.cmpi slt, %2, %3 : vector<128x128xi32>
    %cst = arith.constant 0.000000e+00 : f32
    %5 = vector.broadcast %cst : f32 to vector<128x128xf32>
    %6 = arith.select %4, %5, %1 : vector<128x128xi1>, vector<128x128xf32>
    %c0_1 = arith.constant 0 : index
    %c0_2 = arith.constant 0 : index
    %7 = vector.load %arg2[%c0_1, %c0_2] : memref<128x1xf32, #tpu.memory_space<vmem>>, vector<128x1xf32>
    %cst_3 = arith.constant 0.000000e+00 : f32
    %8 = vector.broadcast %cst_3 : f32 to vector<128x1xf32>
    %9 = arith.cmpf ogt, %7, %8 : vector<128x1xf32>
    %cst_4 = arith.constant 0.000000e+00 : f32
    %10 = vector.shape_cast %9 : vector<128x1xi1> to vector<128x1xi1>
    %11 = vector.broadcast %10 : vector<128x1xi1> to vector<128x128xi1>
    %12 = vector.broadcast %cst_4 : f32 to vector<128x128xf32>
    %13 = arith.select %11, %6, %12 : vector<128x128xi1>, vector<128x128xf32>
    %c0_i32 = arith.constant 0 : i32
    %c2_i32 = arith.constant 2 : i32
    %14 = arith.addi %c0_i32, %c2_i32 : i32
    %c1_i32 = arith.constant 1 : i32
    %15 = scf.for %arg18 = %c0_i32 to %14 step %c1_i32 iter_args(%arg19 = %13) -> (vector<128x128xf32>)  : i32 {
      %77 = arith.truncf %arg19 : vector<128x128xf32> to vector<128x128xbf16>
      %78 = arith.index_cast %arg18 : i32 to index
      %c0_37 = arith.constant 0 : index
      %c0_38 = arith.constant 0 : index
      %79 = vector.load %arg4[%78, %c0_37, %c0_38] : memref<4x128x128xbf16, #tpu.memory_space<vmem>>, vector<1x128x128xbf16>
      %80 = vector.shape_cast %79 : vector<1x128x128xbf16> to vector<128x128xbf16>
      %cst_39 = arith.constant dense<0.000000e+00> : vector<128x128xf32>
      %81 = tpu.matmul %77, %80, %cst_39 {dimension_numbers = #tpu.dot_dimension_numbers<[1], [0], [0], [1], [0, 0, 1, 1], [], []>} : vector<128x128xbf16>, vector<128x128xbf16>, vector<128x128xf32> -> vector<128x128xf32>
      %82 = arith.index_cast %arg18 : i32 to index
      %c0_40 = arith.constant 0 : index
      %c0_41 = arith.constant 0 : index
      %83 = vector.load %arg5[%82, %c0_40, %c0_41] : memref<4x1x128xf32, #tpu.memory_space<vmem>>, vector<1x1x128xf32>
      %84 = vector.shape_cast %83 : vector<1x1x128xf32> to vector<1x128xf32>
      %85 = vector.broadcast %84 : vector<1x128xf32> to vector<128x128xf32>
      %86 = arith.addf %81, %85 : vector<128x128xf32>
      %87 = arith.addf %arg19, %86 : vector<128x128xf32>
      %88 = arith.index_cast %arg18 : i32 to index
      %c0_42 = arith.constant 0 : index
      %c0_43 = arith.constant 0 : index
      %89 = vector.load %arg6[%88, %c0_42, %c0_43] : memref<4x1x128xf32, #tpu.memory_space<vmem>>, vector<1x1x128xf32>
      %90 = vector.shape_cast %89 : vector<1x1x128xf32> to vector<1x128xf32>
      %91 = arith.index_cast %arg18 : i32 to index
      %c0_44 = arith.constant 0 : index
      %c0_45 = arith.constant 0 : index
      %92 = vector.load %arg7[%91, %c0_44, %c0_45] : memref<4x1x128xf32, #tpu.memory_space<vmem>>, vector<1x1x128xf32>
      %93 = vector.shape_cast %92 : vector<1x1x128xf32> to vector<1x128xf32>
      %cst_46 = arith.constant dense<0.000000e+00> : vector<128xf32>
      %94 = vector.multi_reduction <add>, %87, %cst_46 [1] : vector<128x128xf32> to vector<128xf32>
      %95 = vector.shape_cast %94 : vector<128xf32> to vector<128x1xf32>
      %cst_47 = arith.constant 1.280000e+02 : f32
      %96 = vector.broadcast %cst_47 : f32 to vector<128x1xf32>
      %97 = arith.divf %95, %96 : vector<128x1xf32>
      %98 = arith.mulf %87, %87 : vector<128x128xf32>
      %cst_48 = arith.constant dense<0.000000e+00> : vector<128xf32>
      %99 = vector.multi_reduction <add>, %98, %cst_48 [1] : vector<128x128xf32> to vector<128xf32>
      %100 = vector.shape_cast %99 : vector<128xf32> to vector<128x1xf32>
      %cst_49 = arith.constant 1.280000e+02 : f32
      %101 = vector.broadcast %cst_49 : f32 to vector<128x1xf32>
      %102 = arith.divf %100, %101 : vector<128x1xf32>
      %103 = arith.mulf %97, %97 : vector<128x1xf32>
      %104 = arith.subf %102, %103 : vector<128x1xf32>
      %105 = vector.broadcast %97 : vector<128x1xf32> to vector<128x128xf32>
      %106 = arith.subf %87, %105 : vector<128x128xf32>
      %cst_50 = arith.constant 9.99999974E-6 : f32
      %107 = vector.broadcast %cst_50 : f32 to vector<128x1xf32>
      %108 = arith.addf %104, %107 : vector<128x1xf32>
      %109 = math.rsqrt %108 : vector<128x1xf32>
      %110 = vector.broadcast %109 : vector<128x1xf32> to vector<128x128xf32>
      %111 = arith.mulf %106, %110 : vector<128x128xf32>
      %112 = vector.broadcast %90 : vector<1x128xf32> to vector<128x128xf32>
      %113 = arith.mulf %111, %112 : vector<128x128xf32>
      %114 = vector.broadcast %93 : vector<1x128xf32> to vector<128x128xf32>
      %115 = arith.addf %113, %114 : vector<128x128xf32>
      %116 = arith.truncf %115 : vector<128x128xf32> to vector<128x128xbf16>
      %117 = arith.index_cast %arg18 : i32 to index
      %c0_51 = arith.constant 0 : index
      %c0_52 = arith.constant 0 : index
      %118 = vector.load %arg8[%117, %c0_51, %c0_52] : memref<4x128x256xbf16, #tpu.memory_space<vmem>>, vector<1x128x256xbf16>
      %119 = vector.shape_cast %118 : vector<1x128x256xbf16> to vector<128x256xbf16>
      %cst_53 = arith.constant dense<0.000000e+00> : vector<128x256xf32>
      %120 = tpu.matmul %116, %119, %cst_53 {dimension_numbers = #tpu.dot_dimension_numbers<[1], [0], [0], [1], [0, 0, 1, 1], [], []>} : vector<128x128xbf16>, vector<128x256xbf16>, vector<128x256xf32> -> vector<128x256xf32>
      %121 = arith.index_cast %arg18 : i32 to index
      %c0_54 = arith.constant 0 : index
      %c0_55 = arith.constant 0 : index
      %122 = vector.load %arg9[%121, %c0_54, %c0_55] : memref<4x1x256xf32, #tpu.memory_space<vmem>>, vector<1x1x256xf32>
      %123 = vector.shape_cast %122 : vector<1x1x256xf32> to vector<1x256xf32>
      %124 = vector.broadcast %123 : vector<1x256xf32> to vector<128x256xf32>
      %125 = arith.addf %120, %124 : vector<128x256xf32>
      %cst_56 = arith.constant 0.000000e+00 : f32
      %126 = vector.broadcast %cst_56 : f32 to vector<128x256xf32>
      %127 = arith.maximumf %125, %126 : vector<128x256xf32>
      %128 = arith.truncf %127 : vector<128x256xf32> to vector<128x256xbf16>
      %129 = arith.index_cast %arg18 : i32 to index
      %c0_57 = arith.constant 0 : index
      %c0_58 = arith.constant 0 : index
      %130 = vector.load %arg10[%129, %c0_57, %c0_58] : memref<4x256x128xbf16, #tpu.memory_space<vmem>>, vector<1x256x128xbf16>
      %131 = vector.shape_cast %130 : vector<1x256x128xbf16> to vector<256x128xbf16>
      %cst_59 = arith.constant dense<0.000000e+00> : vector<128x128xf32>
      %132 = tpu.matmul %128, %131, %cst_59 {dimension_numbers = #tpu.dot_dimension_numbers<[1], [0], [0], [1], [0, 0, 1, 1], [], []>} : vector<128x256xbf16>, vector<256x128xbf16>, vector<128x128xf32> -> vector<128x128xf32>
      %133 = arith.index_cast %arg18 : i32 to index
      %c0_60 = arith.constant 0 : index
      %c0_61 = arith.constant 0 : index
      %134 = vector.load %arg11[%133, %c0_60, %c0_61] : memref<4x1x128xf32, #tpu.memory_space<vmem>>, vector<1x1x128xf32>
      %135 = vector.shape_cast %134 : vector<1x1x128xf32> to vector<1x128xf32>
      %136 = vector.broadcast %135 : vector<1x128xf32> to vector<128x128xf32>
      %137 = arith.addf %132, %136 : vector<128x128xf32>
      %138 = arith.addf %115, %137 : vector<128x128xf32>
      %139 = arith.index_cast %arg18 : i32 to index
      %c0_62 = arith.constant 0 : index
      %c0_63 = arith.constant 0 : index
      %140 = vector.load %arg12[%139, %c0_62, %c0_63] : memref<4x1x128xf32, #tpu.memory_space<vmem>>, vector<1x1x128xf32>
      %141 = vector.shape_cast %140 : vector<1x1x128xf32> to vector<1x128xf32>
      %142 = arith.index_cast %arg18 : i32 to index
      %c0_64 = arith.constant 0 : index
      %c0_65 = arith.constant 0 : index
      %143 = vector.load %arg13[%142, %c0_64, %c0_65] : memref<4x1x128xf32, #tpu.memory_space<vmem>>, vector<1x1x128xf32>
      %144 = vector.shape_cast %143 : vector<1x1x128xf32> to vector<1x128xf32>
      %cst_66 = arith.constant dense<0.000000e+00> : vector<128xf32>
      %145 = vector.multi_reduction <add>, %138, %cst_66 [1] : vector<128x128xf32> to vector<128xf32>
      %146 = vector.shape_cast %145 : vector<128xf32> to vector<128x1xf32>
      %cst_67 = arith.constant 1.280000e+02 : f32
      %147 = vector.broadcast %cst_67 : f32 to vector<128x1xf32>
      %148 = arith.divf %146, %147 : vector<128x1xf32>
      %149 = arith.mulf %138, %138 : vector<128x128xf32>
      %cst_68 = arith.constant dense<0.000000e+00> : vector<128xf32>
      %150 = vector.multi_reduction <add>, %149, %cst_68 [1] : vector<128x128xf32> to vector<128xf32>
      %151 = vector.shape_cast %150 : vector<128xf32> to vector<128x1xf32>
      %cst_69 = arith.constant 1.280000e+02 : f32
      %152 = vector.broadcast %cst_69 : f32 to vector<128x1xf32>
      %153 = arith.divf %151, %152 : vector<128x1xf32>
      %154 = arith.mulf %148, %148 : vector<128x1xf32>
      %155 = arith.subf %153, %154 : vector<128x1xf32>
      %156 = vector.broadcast %148 : vector<128x1xf32> to vector<128x128xf32>
      %157 = arith.subf %138, %156 : vector<128x128xf32>
      %cst_70 = arith.constant 9.99999974E-6 : f32
      %158 = vector.broadcast %cst_70 : f32 to vector<128x1xf32>
      %159 = arith.addf %155, %158 : vector<128x1xf32>
      %160 = math.rsqrt %159 : vector<128x1xf32>
      %161 = vector.broadcast %160 : vector<128x1xf32> to vector<128x128xf32>
      %162 = arith.mulf %157, %161 : vector<128x128xf32>
      %163 = vector.broadcast %141 : vector<1x128xf32> to vector<128x128xf32>
      %164 = arith.mulf %162, %163 : vector<128x128xf32>
      %165 = vector.broadcast %144 : vector<1x128xf32> to vector<128x128xf32>
      %166 = arith.addf %164, %165 : vector<128x128xf32>
      scf.yield %166 : vector<128x128xf32>
    }
    %c2_i32_5 = arith.constant 2 : i32
    %c0_6 = arith.constant 0 : index
    %c0_7 = arith.constant 0 : index
    %16 = vector.load %arg14[%c0_6, %c0_7] : memref<1x128xf32, #tpu.memory_space<vmem>>, vector<1x128xf32>
    %c0_8 = arith.constant 0 : index
    %c0_9 = arith.constant 0 : index
    %17 = vector.load %arg15[%c0_8, %c0_9] : memref<1x128xf32, #tpu.memory_space<vmem>>, vector<1x128xf32>
    %cst_10 = arith.constant dense<0.000000e+00> : vector<128xf32>
    %18 = vector.multi_reduction <add>, %15, %cst_10 [1] : vector<128x128xf32> to vector<128xf32>
    %19 = vector.shape_cast %18 : vector<128xf32> to vector<128x1xf32>
    %cst_11 = arith.constant 1.280000e+02 : f32
    %20 = vector.broadcast %cst_11 : f32 to vector<128x1xf32>
    %21 = arith.divf %19, %20 : vector<128x1xf32>
    %22 = arith.mulf %15, %15 : vector<128x128xf32>
    %cst_12 = arith.constant dense<0.000000e+00> : vector<128xf32>
    %23 = vector.multi_reduction <add>, %22, %cst_12 [1] : vector<128x128xf32> to vector<128xf32>
    %24 = vector.shape_cast %23 : vector<128xf32> to vector<128x1xf32>
    %cst_13 = arith.constant 1.280000e+02 : f32
    %25 = vector.broadcast %cst_13 : f32 to vector<128x1xf32>
    %26 = arith.divf %24, %25 : vector<128x1xf32>
    %27 = arith.mulf %21, %21 : vector<128x1xf32>
    %28 = arith.subf %26, %27 : vector<128x1xf32>
    %29 = vector.broadcast %21 : vector<128x1xf32> to vector<128x128xf32>
    %30 = arith.subf %15, %29 : vector<128x128xf32>
    %cst_14 = arith.constant 9.99999974E-6 : f32
    %31 = vector.broadcast %cst_14 : f32 to vector<128x1xf32>
    %32 = arith.addf %28, %31 : vector<128x1xf32>
    %33 = math.rsqrt %32 : vector<128x1xf32>
    %34 = vector.broadcast %33 : vector<128x1xf32> to vector<128x128xf32>
    %35 = arith.mulf %30, %34 : vector<128x128xf32>
    %36 = vector.broadcast %16 : vector<1x128xf32> to vector<128x128xf32>
    %37 = arith.mulf %35, %36 : vector<128x128xf32>
    %38 = vector.broadcast %17 : vector<1x128xf32> to vector<128x128xf32>
    %39 = arith.addf %37, %38 : vector<128x128xf32>
    %c0_15 = arith.constant 0 : index
    %c0_16 = arith.constant 0 : index
    %40 = vector.load %arg3[%c0_15, %c0_16] : memref<128x1xf32, #tpu.memory_space<vmem>>, vector<128x1xf32>
    %cst_17 = arith.constant 0.000000e+00 : f32
    %41 = vector.broadcast %cst_17 : f32 to vector<128x1xf32>
    %42 = arith.cmpf ogt, %40, %41 : vector<128x1xf32>
    %cst_18 = arith.constant 0.000000e+00 : f32
    %43 = vector.shape_cast %42 : vector<128x1xi1> to vector<128x1xi1>
    %44 = vector.broadcast %43 : vector<128x1xi1> to vector<128x128xi1>
    %45 = vector.broadcast %cst_18 : f32 to vector<128x128xf32>
    %46 = arith.select %44, %39, %45 : vector<128x128xi1>, vector<128x128xf32>
    %c2_i32_19 = arith.constant 2 : i32
    %c2_i32_20 = arith.constant 2 : i32
    %47 = arith.addi %c2_i32_19, %c2_i32_20 : i32
    %c1_i32_21 = arith.constant 1 : i32
    %48 = scf.for %arg18 = %c2_i32_19 to %47 step %c1_i32_21 iter_args(%arg19 = %46) -> (vector<128x128xf32>)  : i32 {
      %77 = arith.truncf %arg19 : vector<128x128xf32> to vector<128x128xbf16>
      %78 = arith.index_cast %arg18 : i32 to index
      %c0_37 = arith.constant 0 : index
      %c0_38 = arith.constant 0 : index
      %79 = vector.load %arg4[%78, %c0_37, %c0_38] : memref<4x128x128xbf16, #tpu.memory_space<vmem>>, vector<1x128x128xbf16>
      %80 = vector.shape_cast %79 : vector<1x128x128xbf16> to vector<128x128xbf16>
      %cst_39 = arith.constant dense<0.000000e+00> : vector<128x128xf32>
      %81 = tpu.matmul %77, %80, %cst_39 {dimension_numbers = #tpu.dot_dimension_numbers<[1], [0], [0], [1], [0, 0, 1, 1], [], []>} : vector<128x128xbf16>, vector<128x128xbf16>, vector<128x128xf32> -> vector<128x128xf32>
      %82 = arith.index_cast %arg18 : i32 to index
      %c0_40 = arith.constant 0 : index
      %c0_41 = arith.constant 0 : index
      %83 = vector.load %arg5[%82, %c0_40, %c0_41] : memref<4x1x128xf32, #tpu.memory_space<vmem>>, vector<1x1x128xf32>
      %84 = vector.shape_cast %83 : vector<1x1x128xf32> to vector<1x128xf32>
      %85 = vector.broadcast %84 : vector<1x128xf32> to vector<128x128xf32>
      %86 = arith.addf %81, %85 : vector<128x128xf32>
      %87 = arith.addf %arg19, %86 : vector<128x128xf32>
      %88 = arith.index_cast %arg18 : i32 to index
      %c0_42 = arith.constant 0 : index
      %c0_43 = arith.constant 0 : index
      %89 = vector.load %arg6[%88, %c0_42, %c0_43] : memref<4x1x128xf32, #tpu.memory_space<vmem>>, vector<1x1x128xf32>
      %90 = vector.shape_cast %89 : vector<1x1x128xf32> to vector<1x128xf32>
      %91 = arith.index_cast %arg18 : i32 to index
      %c0_44 = arith.constant 0 : index
      %c0_45 = arith.constant 0 : index
      %92 = vector.load %arg7[%91, %c0_44, %c0_45] : memref<4x1x128xf32, #tpu.memory_space<vmem>>, vector<1x1x128xf32>
      %93 = vector.shape_cast %92 : vector<1x1x128xf32> to vector<1x128xf32>
      %cst_46 = arith.constant dense<0.000000e+00> : vector<128xf32>
      %94 = vector.multi_reduction <add>, %87, %cst_46 [1] : vector<128x128xf32> to vector<128xf32>
      %95 = vector.shape_cast %94 : vector<128xf32> to vector<128x1xf32>
      %cst_47 = arith.constant 1.280000e+02 : f32
      %96 = vector.broadcast %cst_47 : f32 to vector<128x1xf32>
      %97 = arith.divf %95, %96 : vector<128x1xf32>
      %98 = arith.mulf %87, %87 : vector<128x128xf32>
      %cst_48 = arith.constant dense<0.000000e+00> : vector<128xf32>
      %99 = vector.multi_reduction <add>, %98, %cst_48 [1] : vector<128x128xf32> to vector<128xf32>
      %100 = vector.shape_cast %99 : vector<128xf32> to vector<128x1xf32>
      %cst_49 = arith.constant 1.280000e+02 : f32
      %101 = vector.broadcast %cst_49 : f32 to vector<128x1xf32>
      %102 = arith.divf %100, %101 : vector<128x1xf32>
      %103 = arith.mulf %97, %97 : vector<128x1xf32>
      %104 = arith.subf %102, %103 : vector<128x1xf32>
      %105 = vector.broadcast %97 : vector<128x1xf32> to vector<128x128xf32>
      %106 = arith.subf %87, %105 : vector<128x128xf32>
      %cst_50 = arith.constant 9.99999974E-6 : f32
      %107 = vector.broadcast %cst_50 : f32 to vector<128x1xf32>
      %108 = arith.addf %104, %107 : vector<128x1xf32>
      %109 = math.rsqrt %108 : vector<128x1xf32>
      %110 = vector.broadcast %109 : vector<128x1xf32> to vector<128x128xf32>
      %111 = arith.mulf %106, %110 : vector<128x128xf32>
      %112 = vector.broadcast %90 : vector<1x128xf32> to vector<128x128xf32>
      %113 = arith.mulf %111, %112 : vector<128x128xf32>
      %114 = vector.broadcast %93 : vector<1x128xf32> to vector<128x128xf32>
      %115 = arith.addf %113, %114 : vector<128x128xf32>
      %116 = arith.truncf %115 : vector<128x128xf32> to vector<128x128xbf16>
      %117 = arith.index_cast %arg18 : i32 to index
      %c0_51 = arith.constant 0 : index
      %c0_52 = arith.constant 0 : index
      %118 = vector.load %arg8[%117, %c0_51, %c0_52] : memref<4x128x256xbf16, #tpu.memory_space<vmem>>, vector<1x128x256xbf16>
      %119 = vector.shape_cast %118 : vector<1x128x256xbf16> to vector<128x256xbf16>
      %cst_53 = arith.constant dense<0.000000e+00> : vector<128x256xf32>
      %120 = tpu.matmul %116, %119, %cst_53 {dimension_numbers = #tpu.dot_dimension_numbers<[1], [0], [0], [1], [0, 0, 1, 1], [], []>} : vector<128x128xbf16>, vector<128x256xbf16>, vector<128x256xf32> -> vector<128x256xf32>
      %121 = arith.index_cast %arg18 : i32 to index
      %c0_54 = arith.constant 0 : index
      %c0_55 = arith.constant 0 : index
      %122 = vector.load %arg9[%121, %c0_54, %c0_55] : memref<4x1x256xf32, #tpu.memory_space<vmem>>, vector<1x1x256xf32>
      %123 = vector.shape_cast %122 : vector<1x1x256xf32> to vector<1x256xf32>
      %124 = vector.broadcast %123 : vector<1x256xf32> to vector<128x256xf32>
      %125 = arith.addf %120, %124 : vector<128x256xf32>
      %cst_56 = arith.constant 0.000000e+00 : f32
      %126 = vector.broadcast %cst_56 : f32 to vector<128x256xf32>
      %127 = arith.maximumf %125, %126 : vector<128x256xf32>
      %128 = arith.truncf %127 : vector<128x256xf32> to vector<128x256xbf16>
      %129 = arith.index_cast %arg18 : i32 to index
      %c0_57 = arith.constant 0 : index
      %c0_58 = arith.constant 0 : index
      %130 = vector.load %arg10[%129, %c0_57, %c0_58] : memref<4x256x128xbf16, #tpu.memory_space<vmem>>, vector<1x256x128xbf16>
      %131 = vector.shape_cast %130 : vector<1x256x128xbf16> to vector<256x128xbf16>
      %cst_59 = arith.constant dense<0.000000e+00> : vector<128x128xf32>
      %132 = tpu.matmul %128, %131, %cst_59 {dimension_numbers = #tpu.dot_dimension_numbers<[1], [0], [0], [1], [0, 0, 1, 1], [], []>} : vector<128x256xbf16>, vector<256x128xbf16>, vector<128x128xf32> -> vector<128x128xf32>
      %133 = arith.index_cast %arg18 : i32 to index
      %c0_60 = arith.constant 0 : index
      %c0_61 = arith.constant 0 : index
      %134 = vector.load %arg11[%133, %c0_60, %c0_61] : memref<4x1x128xf32, #tpu.memory_space<vmem>>, vector<1x1x128xf32>
      %135 = vector.shape_cast %134 : vector<1x1x128xf32> to vector<1x128xf32>
      %136 = vector.broadcast %135 : vector<1x128xf32> to vector<128x128xf32>
      %137 = arith.addf %132, %136 : vector<128x128xf32>
      %138 = arith.addf %115, %137 : vector<128x128xf32>
      %139 = arith.index_cast %arg18 : i32 to index
      %c0_62 = arith.constant 0 : index
      %c0_63 = arith.constant 0 : index
      %140 = vector.load %arg12[%139, %c0_62, %c0_63] : memref<4x1x128xf32, #tpu.memory_space<vmem>>, vector<1x1x128xf32>
      %141 = vector.shape_cast %140 : vector<1x1x128xf32> to vector<1x128xf32>
      %142 = arith.index_cast %arg18 : i32 to index
      %c0_64 = arith.constant 0 : index
      %c0_65 = arith.constant 0 : index
      %143 = vector.load %arg13[%142, %c0_64, %c0_65] : memref<4x1x128xf32, #tpu.memory_space<vmem>>, vector<1x1x128xf32>
      %144 = vector.shape_cast %143 : vector<1x1x128xf32> to vector<1x128xf32>
      %cst_66 = arith.constant dense<0.000000e+00> : vector<128xf32>
      %145 = vector.multi_reduction <add>, %138, %cst_66 [1] : vector<128x128xf32> to vector<128xf32>
      %146 = vector.shape_cast %145 : vector<128xf32> to vector<128x1xf32>
      %cst_67 = arith.constant 1.280000e+02 : f32
      %147 = vector.broadcast %cst_67 : f32 to vector<128x1xf32>
      %148 = arith.divf %146, %147 : vector<128x1xf32>
      %149 = arith.mulf %138, %138 : vector<128x128xf32>
      %cst_68 = arith.constant dense<0.000000e+00> : vector<128xf32>
      %150 = vector.multi_reduction <add>, %149, %cst_68 [1] : vector<128x128xf32> to vector<128xf32>
      %151 = vector.shape_cast %150 : vector<128xf32> to vector<128x1xf32>
      %cst_69 = arith.constant 1.280000e+02 : f32
      %152 = vector.broadcast %cst_69 : f32 to vector<128x1xf32>
      %153 = arith.divf %151, %152 : vector<128x1xf32>
      %154 = arith.mulf %148, %148 : vector<128x1xf32>
      %155 = arith.subf %153, %154 : vector<128x1xf32>
      %156 = vector.broadcast %148 : vector<128x1xf32> to vector<128x128xf32>
      %157 = arith.subf %138, %156 : vector<128x128xf32>
      %cst_70 = arith.constant 9.99999974E-6 : f32
      %158 = vector.broadcast %cst_70 : f32 to vector<128x1xf32>
      %159 = arith.addf %155, %158 : vector<128x1xf32>
      %160 = math.rsqrt %159 : vector<128x1xf32>
      %161 = vector.broadcast %160 : vector<128x1xf32> to vector<128x128xf32>
      %162 = arith.mulf %157, %161 : vector<128x128xf32>
      %163 = vector.broadcast %141 : vector<1x128xf32> to vector<128x128xf32>
      %164 = arith.mulf %162, %163 : vector<128x128xf32>
      %165 = vector.broadcast %144 : vector<1x128xf32> to vector<128x128xf32>
      %166 = arith.addf %164, %165 : vector<128x128xf32>
      scf.yield %166 : vector<128x128xf32>
    }
    %c2_i32_22 = arith.constant 2 : i32
    %c0_23 = arith.constant 0 : index
    %c0_24 = arith.constant 0 : index
    %49 = vector.load %arg14[%c0_23, %c0_24] : memref<1x128xf32, #tpu.memory_space<vmem>>, vector<1x128xf32>
    %c0_25 = arith.constant 0 : index
    %c0_26 = arith.constant 0 : index
    %50 = vector.load %arg15[%c0_25, %c0_26] : memref<1x128xf32, #tpu.memory_space<vmem>>, vector<1x128xf32>
    %cst_27 = arith.constant dense<0.000000e+00> : vector<128xf32>
    %51 = vector.multi_reduction <add>, %48, %cst_27 [1] : vector<128x128xf32> to vector<128xf32>
    %52 = vector.shape_cast %51 : vector<128xf32> to vector<128x1xf32>
    %cst_28 = arith.constant 1.280000e+02 : f32
    %53 = vector.broadcast %cst_28 : f32 to vector<128x1xf32>
    %54 = arith.divf %52, %53 : vector<128x1xf32>
    %55 = arith.mulf %48, %48 : vector<128x128xf32>
    %cst_29 = arith.constant dense<0.000000e+00> : vector<128xf32>
    %56 = vector.multi_reduction <add>, %55, %cst_29 [1] : vector<128x128xf32> to vector<128xf32>
    %57 = vector.shape_cast %56 : vector<128xf32> to vector<128x1xf32>
    %cst_30 = arith.constant 1.280000e+02 : f32
    %58 = vector.broadcast %cst_30 : f32 to vector<128x1xf32>
    %59 = arith.divf %57, %58 : vector<128x1xf32>
    %60 = arith.mulf %54, %54 : vector<128x1xf32>
    %61 = arith.subf %59, %60 : vector<128x1xf32>
    %62 = vector.broadcast %54 : vector<128x1xf32> to vector<128x128xf32>
    %63 = arith.subf %48, %62 : vector<128x128xf32>
    %cst_31 = arith.constant 9.99999974E-6 : f32
    %64 = vector.broadcast %cst_31 : f32 to vector<128x1xf32>
    %65 = arith.addf %61, %64 : vector<128x1xf32>
    %66 = math.rsqrt %65 : vector<128x1xf32>
    %67 = vector.broadcast %66 : vector<128x1xf32> to vector<128x128xf32>
    %68 = arith.mulf %63, %67 : vector<128x128xf32>
    %69 = vector.broadcast %49 : vector<1x128xf32> to vector<128x128xf32>
    %70 = arith.mulf %68, %69 : vector<128x128xf32>
    %71 = vector.broadcast %50 : vector<1x128xf32> to vector<128x128xf32>
    %72 = arith.addf %70, %71 : vector<128x128xf32>
    %73 = arith.truncf %72 : vector<128x128xf32> to vector<128x128xbf16>
    %c0_32 = arith.constant 0 : index
    %c0_33 = arith.constant 0 : index
    %74 = vector.load %arg16[%c0_32, %c0_33] : memref<128x128xbf16, #tpu.memory_space<vmem>>, vector<128x128xbf16>
    %cst_34 = arith.constant dense<0.000000e+00> : vector<128x128xf32>
    %75 = tpu.matmul %73, %74, %cst_34 {dimension_numbers = #tpu.dot_dimension_numbers<[1], [0], [0], [1], [0, 0, 1, 1], [], []>} : vector<128x128xbf16>, vector<128x128xbf16>, vector<128x128xf32> -> vector<128x128xf32>
    %c0_35 = arith.constant 0 : index
    %c0_36 = arith.constant 0 : index
    %76 = vector.load %arg17[%c0_35, %c0_36] : memref<128x128xf32, #tpu.memory_space<vmem>>, vector<128x128xf32>
    tpu.vector_store %arg17[%c0_35, %c0_36], %75 {strides = array<i32>} : memref<128x128xf32, #tpu.memory_space<vmem>>, vector<128x128xf32>,
    return
  }
  func.func @transform_0(%arg0: i32) -> (i32, i32) {
    %c0_i32 = arith.constant 0 : i32
    %c0_i32_0 = arith.constant 0 : i32
    return %arg0, %c0_i32 : i32, i32
  }
  func.func @transform_1(%arg0: i32) -> (i32, i32) {
    %c0_i32 = arith.constant 0 : i32
    %c0_i32_0 = arith.constant 0 : i32
    return %arg0, %c0_i32 : i32, i32
  }
  func.func @transform_2(%arg0: i32) -> (i32, i32) {
    %c0_i32 = arith.constant 0 : i32
    %c0_i32_0 = arith.constant 0 : i32
    return %arg0, %c0_i32 : i32, i32
  }
  func.func @transform_3(%arg0: i32) -> (i32, i32, i32) {
    %c0_i32 = arith.constant 0 : i32
    %c0_i32_0 = arith.constant 0 : i32
    %c0_i32_1 = arith.constant 0 : i32
    %c0_i32_2 = arith.constant 0 : i32
    return %c0_i32, %c0_i32_0, %c0_i32_1 : i32, i32, i32
  }
  func.func @transform_4(%arg0: i32) -> (i32, i32, i32) {
    %c0_i32 = arith.constant 0 : i32
    %c0_i32_0 = arith.constant 0 : i32
    %c0_i32_1 = arith.constant 0 : i32
    %c0_i32_2 = arith.constant 0 : i32
    return %c0_i32, %c0_i32_0, %c0_i32_1 : i32, i32, i32
  }
  func.func @transform_5(%arg0: i32) -> (i32, i32, i32) {
    %c0_i32 = arith.constant 0 : i32
    %c0_i32_0 = arith.constant 0 : i32
    %c0_i32_1 = arith.constant 0 : i32
    %c0_i32_2 = arith.constant 0 : i32
    return %c0_i32, %c0_i32_0, %c0_i32_1 : i32, i32, i32
  }
  func.func @transform_6(%arg0: i32) -> (i32, i32, i32) {
    %c0_i32 = arith.constant 0 : i32
    %c0_i32_0 = arith.constant 0 : i32
    %c0_i32_1 = arith.constant 0 : i32
    %c0_i32_2 = arith.constant 0 : i32
    return %c0_i32, %c0_i32_0, %c0_i32_1 : i32, i32, i32
  }
  func.func @transform_7(%arg0: i32) -> (i32, i32, i32) {
    %c0_i32 = arith.constant 0 : i32
    %c0_i32_0 = arith.constant 0 : i32
    %c0_i32_1 = arith.constant 0 : i32
    %c0_i32_2 = arith.constant 0 : i32
    return %c0_i32, %c0_i32_0, %c0_i32_1 : i32, i32, i32
  }
  func.func @transform_8(%arg0: i32) -> (i32, i32, i32) {
    %c0_i32 = arith.constant 0 : i32
    %c0_i32_0 = arith.constant 0 : i32
    %c0_i32_1 = arith.constant 0 : i32
    %c0_i32_2 = arith.constant 0 : i32
    return %c0_i32, %c0_i32_0, %c0_i32_1 : i32, i32, i32
  }
  func.func @transform_9(%arg0: i32) -> (i32, i32, i32) {
    %c0_i32 = arith.constant 0 : i32
    %c0_i32_0 = arith.constant 0 : i32
    %c0_i32_1 = arith.constant 0 : i32
    %c0_i32_2 = arith.constant 0 : i32
    return %c0_i32, %c0_i32_0, %c0_i32_1 : i32, i32, i32
  }
  func.func @transform_10(%arg0: i32) -> (i32, i32, i32) {
    %c0_i32 = arith.constant 0 : i32
    %c0_i32_0 = arith.constant 0 : i32
    %c0_i32_1 = arith.constant 0 : i32
    %c0_i32_2 = arith.constant 0 : i32
    return %c0_i32, %c0_i32_0, %c0_i32_1 : i32, i32, i32
  }
  func.func @transform_11(%arg0: i32) -> (i32, i32, i32) {
    %c0_i32 = arith.constant 0 : i32
    %c0_i32_0 = arith.constant 0 : i32
    %c0_i32_1 = arith.constant 0 : i32
    %c0_i32_2 = arith.constant 0 : i32
    return %c0_i32, %c0_i32_0, %c0_i32_1 : i32, i32, i32
  }
  func.func @transform_12(%arg0: i32) -> (i32, i32, i32) {
    %c0_i32 = arith.constant 0 : i32
    %c0_i32_0 = arith.constant 0 : i32
    %c0_i32_1 = arith.constant 0 : i32
    %c0_i32_2 = arith.constant 0 : i32
    return %c0_i32, %c0_i32_0, %c0_i32_1 : i32, i32, i32
  }
  func.func @transform_13(%arg0: i32) -> (i32, i32) {
    %c0_i32 = arith.constant 0 : i32
    %c0_i32_0 = arith.constant 0 : i32
    %c0_i32_1 = arith.constant 0 : i32
    return %c0_i32, %c0_i32_0 : i32, i32
  }
  func.func @transform_14(%arg0: i32) -> (i32, i32) {
    %c0_i32 = arith.constant 0 : i32
    %c0_i32_0 = arith.constant 0 : i32
    %c0_i32_1 = arith.constant 0 : i32
    return %c0_i32, %c0_i32_0 : i32, i32
  }
  func.func @transform_15(%arg0: i32) -> (i32, i32) {
    %c0_i32 = arith.constant 0 : i32
    %c0_i32_0 = arith.constant 0 : i32
    %c0_i32_1 = arith.constant 0 : i32
    return %c0_i32, %c0_i32_0 : i32, i32
  }
  func.func @transform_16(%arg0: i32) -> (i32, i32) {
    %c0_i32 = arith.constant 0 : i32
    %c0_i32_0 = arith.constant 0 : i32
    return %arg0, %c0_i32 : i32, i32
  }
}

</mosaic_0001>

<llo_original>
// kernel: utransformer_forward.2
$region0: #{utransformer_forward.2}
  #allocation0 [shape = 'u32[]', space=smem, size = 0x4, offset = 0x4, fixed_abs, tag = 'smem constant byte address 0x4 - core index']
  #allocation1 [shape = 'u32[144,128]{1,0:T(1,128)}', space=vmem, size = 0x12000, scoped, tag = 'internal scratch']
  %s0 = inlined_call_operand.vmem [shape: f32[2,8,64], index: 0, kind: input, shape index: {}]
  %s1 = inlined_call_operand.vmem [shape: bf16[128,8], index: 1, kind: input, shape index: {}]
  %s2 = inlined_call_operand.vmem [shape: bf16[2,128,64], index: 2, kind: output, shape index: {}]
  %s3 = sld [smem:[#allocation0]]
  $region41: #{utransformer_forward.2} parent=0
    _
  %s5 = ssub.s32 1, %s3
  %s6 = scalar_select 0, %s5, %s3
  loop: start=0, step=1, limit=4
  $region2: #{utransformer_forward.2} parent=0 // loop_pre_header
    _
  $region3: #{utransformer_forward.2} parent=0 // loop_header
    %s8 = sphi 0, %s12
    %p9 = scmp.ge.s32.totalorder %s8, 4
    %s18 = sphi 0, %s20
    %s21 = sphi 0, %s18
    %s22 = sphi 0, %s21
    %s38 = sphi 0, %s22
    %s42 = sphi 0, %s42
    %s44 = sphi 0, %s42
    %s45 = sphi 0, %s44
    %s59 = sphi 0, %s45
    %s65 = sphi 0, %s67
    %s68 = sphi 0, %s65
    %s69 = sphi 0, %s68
    %s85 = sphi 0, %s69
  $region4: #{utransformer_forward.2} parent=0 // loop_header_branch
    %11 = sbr.rel (%p9) target = $region8
  $region5: #{utransformer_forward.2} parent=0 // loop_body
    %s13 = ssub.s32 %s8, 1
    %s14 = ssub.s32 %s8, 2
    %s15 = sadd.s32 %s8, 1
    %s16 = ssub.s32 %s8, %s15
    %p17 = scmp.eq.s32.totalorder %s16, 0
    %s19 = sadd.s32 %s18, 1
    %s20 = scalar_select %p17, %s18, %s19
    %p23 = pneg %p17
    %p24 = scmp.eq.s32.totalorder %s8, 1
    %p25 = por %p23, %p24
    %p26 = scmp.ne.s32.totalorder %s18, %s21
    %p27 = scmp.eq.s32.totalorder %s8, 0
    %p28 = por %p26, %p27
    %p29 = scmp.ne.s32.totalorder %s18, %s21
    %p30 = scmp.eq.s32.totalorder %s13, 1
    %p31 = por %p29, %p30
    %p32 = scmp.ne.s32.totalorder %s21, %s22
    %p33 = scmp.eq.s32.totalorder %s13, 0
    %p34 = por %p32, %p33
    %p35 = scmp.ne.s32.totalorder %s21, %s22
    %p36 = scmp.eq.s32.totalorder %s14, 1
    %p37 = por %p35, %p36
    %p39 = scmp.ne.s32.totalorder %s22, %s38
    %p40 = scmp.eq.s32.totalorder %s14, 0
    %p41 = por %p39, %p40
    %s43 = sadd.s32 %s42, 1
    %p46 = scmp.eq.s32.totalorder %s8, 1
    %p47 = scmp.ne.s32.totalorder %s42, %s44
    %p48 = scmp.eq.s32.totalorder %s8, 0
    %p49 = por %p47, %p48
    %p50 = scmp.ne.s32.totalorder %s42, %s44
    %p51 = scmp.eq.s32.totalorder %s13, 1
    %p52 = por %p50, %p51
    %p53 = scmp.ne.s32.totalorder %s44, %s45
    %p54 = scmp.eq.s32.totalorder %s13, 0
    %p55 = por %p53, %p54
    %p56 = scmp.ne.s32.totalorder %s44, %s45
    %p57 = scmp.eq.s32.totalorder %s14, 1
    %p58 = por %p56, %p57
    %p60 = scmp.ne.s32.totalorder %s45, %s59
    %p61 = scmp.eq.s32.totalorder %s14, 0
    %p62 = por %p60, %p61
    %s63 = ssub.s32 %s8, %s15
    %p64 = scmp.eq.s32.totalorder %s63, 0
    %s66 = sadd.s32 %s65, 1
    %s67 = scalar_select %p64, %s65, %s66
    %p70 = pneg %p64
    %p71 = scmp.eq.s32.totalorder %s8, 1
    %p72 = por %p70, %p71
    %p73 = scmp.ne.s32.totalorder %s65, %s68
    %p74 = scmp.eq.s32.totalorder %s8, 0
    %p75 = por %p73, %p74
    %p76 = scmp.ne.s32.totalorder %s65, %s68
    %p77 = scmp.eq.s32.totalorder %s13, 1
    %p78 = por %p76, %p77
    %p79 = scmp.ne.s32.totalorder %s68, %s69
    %p80 = scmp.eq.s32.totalorder %s13, 0
    %p81 = por %p79, %p80
    %p82 = scmp.ne.s32.totalorder %s68, %s69
    %p83 = scmp.eq.s32.totalorder %s14, 1
    %p84 = por %p82, %p83
    %p86 = scmp.ne.s32.totalorder %s69, %s85
    %p87 = scmp.eq.s32.totalorder %s14, 0
    %p88 = por %p86, %p87
    %p89 = scmp.le.s32.totalorder 1, %s8
    %p90 = scmp.lt.s32.totalorder %s8, 3
    %p91 = pnand %p89, %p90
    %p92 = pneg %p91
    // Predicated region
    $region9: #{utransformer_forward.2} parent=5 // pred_check
      _
    $region10: #{utransformer_forward.2} parent=5 // pred_check_branch
      %94 = sbr.rel (%p91) target = $region12
    $region11: #{utransformer_forward.2} parent=5 // pred_region
      %s95 = ssub.s32 %s8, 1
      // Predicated region
      $region13: #{utransformer_forward.2} parent=11 // pred_check
        %p96 = pneg %p55
      $region14: #{utransformer_forward.2} parent=11 // pred_check_branch
        %98 = sbr.rel (%p96) target = $region16
      $region15: #{utransformer_forward.2} parent=11 // pred_region
        _
      $region16: #{utransformer_forward.2} parent=11 // pred_fallthru
        _
    $region12: #{utransformer_forward.2} parent=5 // pred_fallthru
      _
    %p99 = scmp.lt.s32.totalorder %s8, 2
    // Predicated region
    $region17: #{utransformer_forward.2} parent=5 // pred_check
      %p100 = pneg %p99
    $region18: #{utransformer_forward.2} parent=5 // pred_check_branch
      %102 = sbr.rel (%p100) target = $region20
    $region19: #{utransformer_forward.2} parent=5 // pred_region
      // Predicated region
      $region21: #{utransformer_forward.2} parent=19 // pred_check
        %p103 = pneg %p28
      $region22: #{utransformer_forward.2} parent=19 // pred_check_branch
        %105 = sbr.rel (%p103) target = $region24
      $region23: #{utransformer_forward.2} parent=19 // pred_region
        %p106 = scmp.lt.s32.totalorder %s8, 1
        %s107 = scalar_select %p106, %s8, 1
        %s108 = smul.addr %s107, 8
        %s109 = scalar_lea.vmem %s0, %s108
      $region24: #{utransformer_forward.2} parent=19 // pred_fallthru
        _
    $region20: #{utransformer_forward.2} parent=5 // pred_fallthru
      _
    %p110 = scmp.le.s32.totalorder 1, %s8
    %p111 = scmp.lt.s32.totalorder %s8, 3
    %p112 = pnand %p110, %p111
    %p113 = pneg %p112
    // Predicated region
    $region25: #{utransformer_forward.2} parent=5 // pred_check
      _
    $region26: #{utransformer_forward.2} parent=5 // pred_check_branch
      %115 = sbr.rel (%p112) target = $region28
    $region27: #{utransformer_forward.2} parent=5 // pred_region
      %s116 = ssub.s32 %s8, 1
      %p117 = scmp.lt.s32.totalorder %s13, 1
      %s118 = scalar_select %p117, %s13, 1
      %s119 = smul.addr %s118, 8
      %s120 = scalar_lea.vmem %s0, %s119
      %p121 = pneg %p34
      %p122 = pneg %p31
      %p123 = pneg %p55
      %p124 = pneg %p52
      %p125 = pneg %p81
      %p126 = pneg %p78
      %p127 = scmp.lt.s32.totalorder %s13, 1
      %s128 = scalar_select %p127, %s13, 1
      %s129 = smul.addr %s128, 16
      %s130 = smul.addr %s129, 4
      %s131 = scalar_lea.vmem %s2, %s130
      %p132 = scmp.lt.s32.totalorder %s13, 1
      %s133 = scalar_select %p132, %s13, 1
      %s134 = smul.addr %s133, 8
      %s135 = scalar_lea.vmem %s0, %s134
      %p136 = scmp.lt.s32.totalorder %s13, 1
      %s137 = scalar_select %p136, %s13, 1
      %s138 = smul.addr %s137, 16
      %s139 = smul.addr %s138, 4
      %s140 = scalar_lea.vmem %s2, %s139
      %v142 = vld [vmem:[%s1] sm:$0xf]
      %v143 = vld [vmem:[%s1 + $0x4] sm:$0xf]
      %v144 = vld [vmem:[%s1 + $0x8] sm:$0xf]
      %v145 = vld [vmem:[%s1 + $0xc] sm:$0xf]
      %v146 = vld [vmem:[%s1 + $0x10] sm:$0xf]
      %v147 = vld [vmem:[%s1 + $0x14] sm:$0xf]
      %v148 = vld [vmem:[%s1 + $0x18] sm:$0xf]
      %v149 = vld [vmem:[%s1 + $0x1c] sm:$0xf]
      %v150 = vld [vmem:[%s1 + $0x20] sm:$0xf]
      %v151 = vld [vmem:[%s1 + $0x24] sm:$0xf]
      %v152 = vld [vmem:[%s1 + $0x28] sm:$0xf]
      %v153 = vld [vmem:[%s1 + $0x2c] sm:$0xf]
      %v154 = vld [vmem:[%s1 + $0x30] sm:$0xf]
      %v155 = vld [vmem:[%s1 + $0x34] sm:$0xf]
      %v156 = vld [vmem:[%s1 + $0x38] sm:$0xf]
      %v157 = vld [vmem:[%s1 + $0x3c] sm:$0xf]
      %v158 = vld [vmem:[%s135] sm:$0xff]
      %v159 = vpack.c.bf16 %v158, %v158
      %v176 = vunpack.c.l.b16 %v142
      %v177 = vunpack.c.l.b16 %v143
      %v178 = vunpack.c.l.b16 %v144
      %v179 = vunpack.c.l.b16 %v145
      %v180 = vunpack.c.l.b16 %v146
      %v181 = vunpack.c.l.b16 %v147
      %v182 = vunpack.c.l.b16 %v148
      %v183 = vunpack.c.l.b16 %v149
      %v184 = vunpack.c.l.b16 %v150
      %v185 = vunpack.c.l.b16 %v151
      %v186 = vunpack.c.l.b16 %v152
      %v187 = vunpack.c.l.b16 %v153
      %v188 = vunpack.c.l.b16 %v154
      %v189 = vunpack.c.l.b16 %v155
      %v190 = vunpack.c.l.b16 %v156
      %v191 = vunpack.c.l.b16 %v157
      %v192 = vpack.c.b16 %v177, %v176
      %v193 = vpack.c.b16 %v179, %v178
      %v194 = vpack.c.b16 %v181, %v180
      %v195 = vpack.c.b16 %v183, %v182
      %v196 = vpack.c.b16 %v185, %v184
      %v197 = vpack.c.b16 %v187, %v186
      %v198 = vpack.c.b16 %v189, %v188
      %v199 = vpack.c.b16 %v191, %v190
      %vm200 = vcmask 64512
      %v202 = vsel %vm200, %v192, 0
      %v205 = vsel %vm200, %v193, 0
      %v208 = vsel %vm200, %v194, 0
      %v211 = vsel %vm200, %v195, 0
      %v214 = vsel %vm200, %v196, 0
      %v217 = vsel %vm200, %v197, 0
      %v220 = vsel %vm200, %v198, 0
      %v223 = vsel %vm200, %v199, 0
      %vm225 = vcmask 1043456
      %v227 = vsel %vm225, %v159, 0
      %229 = vmatprep.subr.bf16.mxu0 0
      %230 = vmatpush1.bf16.msra.mxu0 %v227
      %231 = vmatprep.subr.bf16.mxu0 0
      %232 = vmatpush1.bf16.msra.mxu0 0
      %233 = vmatprep.subr.bf16.mxu0 0
      %234 = vmatpush1.bf16.msra.mxu0 0
      %235 = vmatprep.subr.bf16.mxu0 0
      %236 = vmatpush1.bf16.msra.mxu0 0
      %237 = vmatprep.subr.bf16.mxu0 0
      %238 = vmatpush1.bf16.msra.mxu0 0
      %239 = vmatprep.subr.bf16.mxu0 0
      %240 = vmatpush1.bf16.msra.mxu0 0
      %241 = vmatprep.subr.bf16.mxu0 0
      %242 = vmatpush1.bf16.msra.mxu0 0
      %243 = vmatprep.subr.bf16.mxu0 0
      %244 = vmatpush1.bf16.msra.mxu0 0
      %245 = vmatprep.subr.bf16.mxu0 0
      %246 = vmatpush1.bf16.msra.mxu0 0
      %247 = vmatprep.subr.bf16.mxu0 0
      %248 = vmatpush1.bf16.msra.mxu0 0
      %249 = vmatprep.subr.bf16.mxu0 0
      %250 = vmatpush1.bf16.msra.mxu0 0
      %251 = vmatprep.subr.bf16.mxu0 0
      %252 = vmatpush1.bf16.msra.mxu0 0
      %253 = vmatprep.subr.bf16.mxu0 0
      %254 = vmatpush1.bf16.msra.mxu0 0
      %255 = vmatprep.subr.bf16.mxu0 0
      %256 = vmatpush1.bf16.msra.mxu0 0
      %257 = vmatprep.subr.bf16.mxu0 0
      %258 = vmatpush1.bf16.msra.mxu0 0
      %259 = vmatprep.subr.bf16.mxu0 0
      %260 = vmatpush1.bf16.msra.mxu0 0
      %261 = vmatprep.mubr.bf16.mxu0 0
      %262 = vmatmul.mubr.bf16.gmra.mrb[0].mxu0 %v202
      %v263 = vpop.f32.mrb[0].mxu0
      %v264 = vadd.f32 0.0, %v263
      %v265 = vpop.f32.mrb[0].mxu0
      %v266 = vpop.f32.mrb[0].mxu0
      %v267 = vadd.f32 0.0, %v266
      %v268 = vpop.f32.mrb[0].mxu0
      %269 = vmatprep.mubr.bf16.mxu0 0
      %270 = vmatmul.mubr.bf16.gmra.mrb[0].mxu0 %v205
      %v271 = vpop.f32.mrb[0].mxu0
      %v272 = vadd.f32 0.0, %v271
      %v273 = vpop.f32.mrb[0].mxu0
      %v274 = vpop.f32.mrb[0].mxu0
      %v275 = vadd.f32 0.0, %v274
      %v276 = vpop.f32.mrb[0].mxu0
      %277 = vmatprep.mubr.bf16.mxu0 0
      %278 = vmatmul.mubr.bf16.gmra.mrb[0].mxu0 %v208
      %v279 = vpop.f32.mrb[0].mxu0
      %v280 = vadd.f32 0.0, %v279
      %v281 = vpop.f32.mrb[0].mxu0
      %v282 = vpop.f32.mrb[0].mxu0
      %v283 = vadd.f32 0.0, %v282
      %v284 = vpop.f32.mrb[0].mxu0
      %285 = vmatprep.mubr.bf16.mxu0 0
      %286 = vmatmul.mubr.bf16.gmra.mrb[0].mxu0 %v211
      %v287 = vpop.f32.mrb[0].mxu0
      %v288 = vadd.f32 0.0, %v287
      %v289 = vpop.f32.mrb[0].mxu0
      %v290 = vpop.f32.mrb[0].mxu0
      %v291 = vadd.f32 0.0, %v290
      %v292 = vpop.f32.mrb[0].mxu0
      %293 = vmatprep.mubr.bf16.mxu0 0
      %294 = vmatmul.mubr.bf16.gmra.mrb[0].mxu0 %v214
      %v295 = vpop.f32.mrb[0].mxu0
      %v296 = vadd.f32 0.0, %v295
      %v297 = vpop.f32.mrb[0].mxu0
      %v298 = vpop.f32.mrb[0].mxu0
      %v299 = vadd.f32 0.0, %v298
      %v300 = vpop.f32.mrb[0].mxu0
      %301 = vmatprep.mubr.bf16.mxu0 0
      %302 = vmatmul.mubr.bf16.gmra.mrb[0].mxu0 %v217
      %v303 = vpop.f32.mrb[0].mxu0
      %v304 = vadd.f32 0.0, %v303
      %v305 = vpop.f32.mrb[0].mxu0
      %v306 = vpop.f32.mrb[0].mxu0
      %v307 = vadd.f32 0.0, %v306
      %v308 = vpop.f32.mrb[0].mxu0
      %309 = vmatprep.mubr.bf16.mxu0 0
      %310 = vmatmul.mubr.bf16.gmra.mrb[0].mxu0 %v220
      %v311 = vpop.f32.mrb[0].mxu0
      %v312 = vadd.f32 0.0, %v311
      %v313 = vpop.f32.mrb[0].mxu0
      %v314 = vpop.f32.mrb[0].mxu0
      %v315 = vadd.f32 0.0, %v314
      %v316 = vpop.f32.mrb[0].mxu0
      %317 = vmatprep.mubr.bf16.mxu0 0
      %318 = vmatmul.mubr.bf16.gmra.mrb[0].mxu0 %v223
      %v319 = vpop.f32.mrb[0].mxu0
      %v320 = vadd.f32 0.0, %v319
      %v321 = vpop.f32.mrb[0].mxu0
      %v322 = vpop.f32.mrb[0].mxu0
      %v323 = vadd.f32 0.0, %v322
      %v324 = vpop.f32.mrb[0].mxu0
      %325 = vdwg.mxu0
      %v326 = vpack.c.bf16 %v267, %v264
      %v327 = vpack.c.bf16 %v275, %v272
      %v328 = vpack.c.bf16 %v283, %v280
      %v329 = vpack.c.bf16 %v291, %v288
      %v330 = vpack.c.bf16 %v299, %v296
      %v331 = vpack.c.bf16 %v307, %v304
      %v332 = vpack.c.bf16 %v315, %v312
      %v333 = vpack.c.bf16 %v323, %v320
      %v342 = vunpack.c.l.b16 %v326
      %v343 = vunpack.c.h.b16 %v326
      %v344 = vunpack.c.l.b16 %v327
      %v345 = vunpack.c.h.b16 %v327
      %v346 = vunpack.c.l.b16 %v328
      %v347 = vunpack.c.h.b16 %v328
      %v348 = vunpack.c.l.b16 %v329
      %v349 = vunpack.c.h.b16 %v329
      %v350 = vunpack.c.l.b16 %v330
      %v351 = vunpack.c.h.b16 %v330
      %v352 = vunpack.c.l.b16 %v331
      %v353 = vunpack.c.h.b16 %v331
      %v354 = vunpack.c.l.b16 %v332
      %v355 = vunpack.c.h.b16 %v332
      %v356 = vunpack.c.l.b16 %v333
      %v357 = vunpack.c.h.b16 %v333
      %v358 = vpack.c.b16 %v342, %v342
      %v359 = vpack.c.b16 %v343, %v343
      %v360 = vpack.c.b16 %v344, %v344
      %v361 = vpack.c.b16 %v345, %v345
      %v362 = vpack.c.b16 %v346, %v346
      %v363 = vpack.c.b16 %v347, %v347
      %v364 = vpack.c.b16 %v348, %v348
      %v365 = vpack.c.b16 %v349, %v349
      %v366 = vpack.c.b16 %v350, %v350
      %v367 = vpack.c.b16 %v351, %v351
      %v368 = vpack.c.b16 %v352, %v352
      %v369 = vpack.c.b16 %v353, %v353
      %v370 = vpack.c.b16 %v354, %v354
      %v371 = vpack.c.b16 %v355, %v355
      %v372 = vpack.c.b16 %v356, %v356
      %v373 = vpack.c.b16 %v357, %v357
      %vm390 = vcmask 519168
      %391 = vst.msk [vmem:[%s140] sm:$0xf] %vm390, %v358
      %392 = vst.msk [vmem:[%s140 + $0x4] sm:$0xf] %vm390, %v359
      %393 = vst.msk [vmem:[%s140 + $0x8] sm:$0xf] %vm390, %v360
      %394 = vst.msk [vmem:[%s140 + $0xc] sm:$0xf] %vm390, %v361
      %395 = vst.msk [vmem:[%s140 + $0x10] sm:$0xf] %vm390, %v362
      %396 = vst.msk [vmem:[%s140 + $0x14] sm:$0xf] %vm390, %v363
      %397 = vst.msk [vmem:[%s140 + $0x18] sm:$0xf] %vm390, %v364
      %398 = vst.msk [vmem:[%s140 + $0x1c] sm:$0xf] %vm390, %v365
      %399 = vst.msk [vmem:[%s140 + $0x20] sm:$0xf] %vm390, %v366
      %400 = vst.msk [vmem:[%s140 + $0x24] sm:$0xf] %vm390, %v367
      %401 = vst.msk [vmem:[%s140 + $0x28] sm:$0xf] %vm390, %v368
      %402 = vst.msk [vmem:[%s140 + $0x2c] sm:$0xf] %vm390, %v369
      %403 = vst.msk [vmem:[%s140 + $0x30] sm:$0xf] %vm390, %v370
      %404 = vst.msk [vmem:[%s140 + $0x34] sm:$0xf] %vm390, %v371
      %405 = vst.msk [vmem:[%s140 + $0x38] sm:$0xf] %vm390, %v372
      %406 = vst.msk [vmem:[%s140 + $0x3c] sm:$0xf] %vm390, %v373
      %p407 = scmp.lt.s32.totalorder %s13, 1
      %s408 = scalar_select %p407, %s13, 1
      %s409 = smul.addr %s408, 16
      %s410 = smul.addr %s409, 4
      %s411 = scalar_lea.vmem %s2, %s410
      // Predicated region
      $region29: #{utransformer_forward.2} parent=27 // pred_check
        %p412 = pneg %p78
      $region30: #{utransformer_forward.2} parent=27 // pred_check_branch
        %414 = sbr.rel (%p412) target = $region32
      $region31: #{utransformer_forward.2} parent=27 // pred_region
        _
      $region32: #{utransformer_forward.2} parent=27 // pred_fallthru
        _
    $region28: #{utransformer_forward.2} parent=5 // pred_fallthru
      _
    %p415 = scmp.le.s32.totalorder 2, %s8
    // Predicated region
    $region33: #{utransformer_forward.2} parent=5 // pred_check
      %p416 = pneg %p415
    $region34: #{utransformer_forward.2} parent=5 // pred_check_branch
      %418 = sbr.rel (%p416) target = $region36
    $region35: #{utransformer_forward.2} parent=5 // pred_region
      %s419 = ssub.s32 %s8, 2
      // Predicated region
      $region37: #{utransformer_forward.2} parent=35 // pred_check
        %p420 = pneg %p84
      $region38: #{utransformer_forward.2} parent=35 // pred_check_branch
        %422 = sbr.rel (%p420) target = $region40
      $region39: #{utransformer_forward.2} parent=35 // pred_region
        %p423 = scmp.lt.s32.totalorder %s14, 1
        %s424 = scalar_select %p423, %s14, 1
        %s425 = smul.addr %s424, 16
        %s426 = smul.addr %s425, 4
        %s427 = scalar_lea.vmem %s2, %s426
      $region40: #{utransformer_forward.2} parent=35 // pred_fallthru
        _
    $region36: #{utransformer_forward.2} parent=5 // pred_fallthru
      _
  $region6: #{utransformer_forward.2} parent=0 // loop_footer
    %s12 = sadd.s32 1, %s8
  $region7: #{utransformer_forward.2} parent=0 // loop_footer_branch
    %7 = sbr.rel target = $region3
  $region8: #{utransformer_forward.2} parent=0 // loop_exit
    _

// kernel: utransformer_forward.3
$region0: #{utransformer_forward.3}
  #allocation0 [shape = 'u32[]', space=smem, size = 0x4, offset = 0x4, fixed_abs, tag = 'smem constant byte address 0x4 - core index']
  #allocation1 [shape = 'u32[144,128]{1,0:T(1,128)}', space=vmem, size = 0x12000, scoped, tag = 'internal scratch']
  %s0 = inlined_call_operand.vmem [shape: bf16[128,128], index: 0, kind: input, shape index: {}]
  %s1 = inlined_call_operand.vmem [shape: f32[128,1], index: 1, kind: input, shape index: {}]
  %s2 = inlined_call_operand.vmem [shape: f32[128,1], index: 2, kind: input, shape index: {}]
  %s3 = inlined_call_operand.vmem [shape: bf16[4,128,128], index: 3, kind: input, shape index: {}]
  %s4 = inlined_call_operand.vmem [shape: f32[4,1,128], index: 4, kind: input, shape index: {}]
  %s5 = inlined_call_operand.vmem [shape: f32[4,1,128], index: 5, kind: input, shape index: {}]
  %s6 = inlined_call_operand.vmem [shape: f32[4,1,128], index: 6, kind: input, shape index: {}]
  %s7 = inlined_call_operand.vmem [shape: bf16[4,128,256], index: 7, kind: input, shape index: {}]
  %s8 = inlined_call_operand.vmem [shape: f32[4,1,256], index: 8, kind: input, shape index: {}]
  %s9 = inlined_call_operand.hbm [shape: bf16[4,256,128], index: 9, kind: input, shape index: {}]
  %s10 = inlined_call_operand.vmem [shape: f32[4,1,128], index: 10, kind: input, shape index: {}]
  %s11 = inlined_call_operand.vmem [shape: f32[4,1,128], index: 11, kind: input, shape index: {}]
  %s12 = inlined_call_operand.vmem [shape: f32[4,1,128], index: 12, kind: input, shape index: {}]
  %s13 = inlined_call_operand.vmem [shape: f32[1,128], index: 13, kind: input, shape index: {}]
  %s14 = inlined_call_operand.vmem [shape: f32[1,128], index: 14, kind: input, shape index: {}]
  %s15 = inlined_call_operand.vmem [shape: bf16[128,128], index: 15, kind: input, shape index: {}]
  %s16 = inlined_call_operand.vmem [shape: f32[128,128], index: 16, kind: output, shape index: {}]
  %s17 = sld [smem:[#allocation0]]
  $region92: #{utransformer_forward.3} parent=0
    _
  %s19 = ssub.s32 1, %s17
  %s20 = scalar_select 0, %s19, %s17
  $region1: #{utransformer_forward.3} parent=0
    #allocation2 [shape = 'u8[262144]{0}', space=vmem, size = 0x40000, scoped, tag = 'input window, operand 9, single buffered']
    #allocation3 [shape = 's32[1]{0}', space=sflag, size = 0x4, scoped, tag = 'scoped memory for utransformer_forward.3']
    %21 = vsyncpa [#allocation3], 0
    // Predicated region
    $region2: #{utransformer_forward.3} parent=1 // pred_check
      _
    $region3: #{utransformer_forward.3} parent=1 // pred_check_branch
      %23 = sbr.rel (0) target = $region5
    $region4: #{utransformer_forward.3} parent=1 // pred_region
      _
    $region5: #{utransformer_forward.3} parent=1 // pred_fallthru
      _
    // Predicated region
    $region6: #{utransformer_forward.3} parent=1 // pred_check
      _
    $region7: #{utransformer_forward.3} parent=1 // pred_check_branch
      %25 = sbr.rel (0) target = $region9
    $region8: #{utransformer_forward.3} parent=1 // pred_region
      _
    $region9: #{utransformer_forward.3} parent=1 // pred_fallthru
      _
    // Predicated region
    $region10: #{utransformer_forward.3} parent=1 // pred_check
      _
    $region11: #{utransformer_forward.3} parent=1 // pred_check_branch
      %27 = sbr.rel (0) target = $region13
    $region12: #{utransformer_forward.3} parent=1 // pred_region
      _
    $region13: #{utransformer_forward.3} parent=1 // pred_fallthru
      _
    // Predicated region
    $region14: #{utransformer_forward.3} parent=1 // pred_check
      _
    $region15: #{utransformer_forward.3} parent=1 // pred_check_branch
      %29 = sbr.rel (0) target = $region17
    $region16: #{utransformer_forward.3} parent=1 // pred_region
      _
    $region17: #{utransformer_forward.3} parent=1 // pred_fallthru
      _
    // Predicated region
    $region18: #{utransformer_forward.3} parent=1 // pred_check
      _
    $region19: #{utransformer_forward.3} parent=1 // pred_check_branch
      %31 = sbr.rel (0) target = $region21
    $region20: #{utransformer_forward.3} parent=1 // pred_region
      _
    $region21: #{utransformer_forward.3} parent=1 // pred_fallthru
      _
    // Predicated region
    $region22: #{utransformer_forward.3} parent=1 // pred_check
      _
    $region23: #{utransformer_forward.3} parent=1 // pred_check_branch
      %33 = sbr.rel (0) target = $region25
    $region24: #{utransformer_forward.3} parent=1 // pred_region
      _
    $region25: #{utransformer_forward.3} parent=1 // pred_fallthru
      _
    // Predicated region
    $region26: #{utransformer_forward.3} parent=1 // pred_check
      _
    $region27: #{utransformer_forward.3} parent=1 // pred_check_branch
      %35 = sbr.rel (0) target = $region29
    $region28: #{utransformer_forward.3} parent=1 // pred_region
      _
    $region29: #{utransformer_forward.3} parent=1 // pred_fallthru
      _
    // Predicated region
    $region30: #{utransformer_forward.3} parent=1 // pred_check
      _
    $region31: #{utransformer_forward.3} parent=1 // pred_check_branch
      %37 = sbr.rel (0) target = $region33
    $region32: #{utransformer_forward.3} parent=1 // pred_region
      _
    $region33: #{utransformer_forward.3} parent=1 // pred_fallthru
      _
    // Predicated region
    $region34: #{utransformer_forward.3} parent=1 // pred_check
      _
    $region35: #{utransformer_forward.3} parent=1 // pred_check_branch
      %39 = sbr.rel (0) target = $region37
    $region36: #{utransformer_forward.3} parent=1 // pred_region
      _
    $region37: #{utransformer_forward.3} parent=1 // pred_fallthru
      _
    // Predicated region
    $region38: #{utransformer_forward.3} parent=1 // pred_check
      _
    $region39: #{utransformer_forward.3} parent=1 // pred_check_branch
      %41 = sbr.rel (0) target = $region41
    $region40: #{utransformer_forward.3} parent=1 // pred_region
      %s43 = ssub.s32 8192, 8192
      %44 = vsyncadd [#allocation3], %s43
      %s45 = sshll.u32 [#allocation2], 4
      %s46 = int_to_ptr.vmem [resolvable:$true] %s45
      %51 = dma.hbm_to_vmem [thread:$0]  %s9, 8192, %s46, [#allocation3], 64, 64, 4
    $region41: #{utransformer_forward.3} parent=1 // pred_fallthru
      _
    // Predicated region
    $region42: #{utransformer_forward.3} parent=1 // pred_check
      _
    $region43: #{utransformer_forward.3} parent=1 // pred_check_branch
      %53 = sbr.rel (0) target = $region45
    $region44: #{utransformer_forward.3} parent=1 // pred_region
      _
    $region45: #{utransformer_forward.3} parent=1 // pred_fallthru
      _
    // Predicated region
    $region46: #{utransformer_forward.3} parent=1 // pred_check
      _
    $region47: #{utransformer_forward.3} parent=1 // pred_check_branch
      %55 = sbr.rel (0) target = $region49
    $region48: #{utransformer_forward.3} parent=1 // pred_region
      _
    $region49: #{utransformer_forward.3} parent=1 // pred_fallthru
      _
    // Predicated region
    $region50: #{utransformer_forward.3} parent=1 // pred_check
      _
    $region51: #{utransformer_forward.3} parent=1 // pred_check_branch
      %57 = sbr.rel (0) target = $region53
    $region52: #{utransformer_forward.3} parent=1 // pred_region
      _
    $region53: #{utransformer_forward.3} parent=1 // pred_fallthru
      _
    // Predicated region
    $region54: #{utransformer_forward.3} parent=1 // pred_check
      _
    $region55: #{utransformer_forward.3} parent=1 // pred_check_branch
      %59 = sbr.rel (0) target = $region57
    $region56: #{utransformer_forward.3} parent=1 // pred_region
      _
    $region57: #{utransformer_forward.3} parent=1 // pred_fallthru
      _
    // Predicated region
    $region58: #{utransformer_forward.3} parent=1 // pred_check
      _
    $region59: #{utransformer_forward.3} parent=1 // pred_check_branch
      %61 = sbr.rel (0) target = $region61
    $region60: #{utransformer_forward.3} parent=1 // pred_region
      _
    $region61: #{utransformer_forward.3} parent=1 // pred_fallthru
      _
    // Predicated region
    $region62: #{utransformer_forward.3} parent=1 // pred_check
      _
    $region63: #{utransformer_forward.3} parent=1 // pred_check_branch
      %63 = sbr.rel (0) target = $region65
    $region64: #{utransformer_forward.3} parent=1 // pred_region
      _
    $region65: #{utransformer_forward.3} parent=1 // pred_fallthru
      _
    // Predicated region
    $region66: #{utransformer_forward.3} parent=1 // pred_check
      _
    $region67: #{utransformer_forward.3} parent=1 // pred_check_branch
      %65 = sbr.rel (0) target = $region69
    $region68: #{utransformer_forward.3} parent=1 // pred_region
      %66 = dma.done [#allocation3], 8192
    $region69: #{utransformer_forward.3} parent=1 // pred_fallthru
      _
    %v68 = vld [vmem:[%s0] sm:$0xf]
    %v69 = vld [vmem:[%s0 + $0x4] sm:$0xf]
    %v70 = vld [vmem:[%s0 + $0x8] sm:$0xf]
    %v71 = vld [vmem:[%s0 + $0xc] sm:$0xf]
    %v72 = vld [vmem:[%s0 + $0x10] sm:$0xf]
    %v73 = vld [vmem:[%s0 + $0x14] sm:$0xf]
    %v74 = vld [vmem:[%s0 + $0x18] sm:$0xf]
    %v75 = vld [vmem:[%s0 + $0x1c] sm:$0xf]
    %v76 = vld [vmem:[%s0 + $0x20] sm:$0xf]
    %v77 = vld [vmem:[%s0 + $0x24] sm:$0xf]
    %v78 = vld [vmem:[%s0 + $0x28] sm:$0xf]
    %v79 = vld [vmem:[%s0 + $0x2c] sm:$0xf]
    %v80 = vld [vmem:[%s0 + $0x30] sm:$0xf]
    %v81 = vld [vmem:[%s0 + $0x34] sm:$0xf]
    %v82 = vld [vmem:[%s0 + $0x38] sm:$0xf]
    %v83 = vld [vmem:[%s0 + $0x3c] sm:$0xf]
    %v84 = vunpack.c.l.bf16 %v68
    %v85 = vunpack.c.l.bf16 %v69
    %v86 = vunpack.c.l.bf16 %v70
    %v87 = vunpack.c.l.bf16 %v71
    %v88 = vunpack.c.l.bf16 %v72
    %v89 = vunpack.c.l.bf16 %v73
    %v90 = vunpack.c.l.bf16 %v74
    %v91 = vunpack.c.l.bf16 %v75
    %v92 = vunpack.c.l.bf16 %v76
    %v93 = vunpack.c.l.bf16 %v77
    %v94 = vunpack.c.l.bf16 %v78
    %v95 = vunpack.c.l.bf16 %v79
    %v96 = vunpack.c.l.bf16 %v80
    %v97 = vunpack.c.l.bf16 %v81
    %v98 = vunpack.c.l.bf16 %v82
    %v99 = vunpack.c.l.bf16 %v83
    %v100 = vlaneseq
    %v101 = vand.u32 %v100, 127
    %vm102 = vcmp.lt.s32.totalorder %v101, 5
    %v103 = vsel %vm102, 0.0, %v84
    %v104 = vsel %vm102, 0.0, %v85
    %v105 = vsel %vm102, 0.0, %v86
    %v106 = vsel %vm102, 0.0, %v87
    %v107 = vsel %vm102, 0.0, %v88
    %v108 = vsel %vm102, 0.0, %v89
    %v109 = vsel %vm102, 0.0, %v90
    %v110 = vsel %vm102, 0.0, %v91
    %v111 = vsel %vm102, 0.0, %v92
    %v112 = vsel %vm102, 0.0, %v93
    %v113 = vsel %vm102, 0.0, %v94
    %v114 = vsel %vm102, 0.0, %v95
    %v115 = vsel %vm102, 0.0, %v96
    %v116 = vsel %vm102, 0.0, %v97
    %v117 = vsel %vm102, 0.0, %v98
    %v118 = vsel %vm102, 0.0, %v99
    %v119 = vld [vmem:[%s1] sm:$0xff]
    %v120 = vld [vmem:[%s1 + $0x8] sm:$0xff]
    %v121 = vld [vmem:[%s1 + $0x10] sm:$0xff]
    %v122 = vld [vmem:[%s1 + $0x18] sm:$0xff]
    %v123 = vld [vmem:[%s1 + $0x20] sm:$0xff]
    %v124 = vld [vmem:[%s1 + $0x28] sm:$0xff]
    %v125 = vld [vmem:[%s1 + $0x30] sm:$0xff]
    %v126 = vld [vmem:[%s1 + $0x38] sm:$0xff]
    %v127 = vld [vmem:[%s1 + $0x40] sm:$0xff]
    %v128 = vld [vmem:[%s1 + $0x48] sm:$0xff]
    %v129 = vld [vmem:[%s1 + $0x50] sm:$0xff]
    %v130 = vld [vmem:[%s1 + $0x58] sm:$0xff]
    %v131 = vld [vmem:[%s1 + $0x60] sm:$0xff]
    %v132 = vld [vmem:[%s1 + $0x68] sm:$0xff]
    %v133 = vld [vmem:[%s1 + $0x70] sm:$0xff]
    %v134 = vld [vmem:[%s1 + $0x78] sm:$0xff]
    %vm135 = vcmp.gt.f32.partialorder %v119, 0.0
    %vm136 = vcmp.gt.f32.partialorder %v120, 0.0
    %vm137 = vcmp.gt.f32.partialorder %v121, 0.0
    %vm138 = vcmp.gt.f32.partialorder %v122, 0.0
    %vm139 = vcmp.gt.f32.partialorder %v123, 0.0
    %vm140 = vcmp.gt.f32.partialorder %v124, 0.0
    %vm141 = vcmp.gt.f32.partialorder %v125, 0.0
    %vm142 = vcmp.gt.f32.partialorder %v126, 0.0
    %vm143 = vcmp.gt.f32.partialorder %v127, 0.0
    %vm144 = vcmp.gt.f32.partialorder %v128, 0.0
    %vm145 = vcmp.gt.f32.partialorder %v129, 0.0
    %vm146 = vcmp.gt.f32.partialorder %v130, 0.0
    %vm147 = vcmp.gt.f32.partialorder %v131, 0.0
    %vm148 = vcmp.gt.f32.partialorder %v132, 0.0
    %vm149 = vcmp.gt.f32.partialorder %v133, 0.0
    %vm150 = vcmp.gt.f32.partialorder %v134, 0.0
    %v151 = vsel %vm135, 1, 0
    %v152 = vsel %vm136, 1, 0
    %v153 = vsel %vm137, 1, 0
    %v154 = vsel %vm138, 1, 0
    %v155 = vsel %vm139, 1, 0
    %v156 = vsel %vm140, 1, 0
    %v157 = vsel %vm141, 1, 0
    %v158 = vsel %vm142, 1, 0
    %v159 = vsel %vm143, 1, 0
    %v160 = vsel %vm144, 1, 0
    %v161 = vsel %vm145, 1, 0
    %v162 = vsel %vm146, 1, 0
    %v163 = vsel %vm147, 1, 0
    %v164 = vsel %vm148, 1, 0
    %v165 = vsel %vm149, 1, 0
    %v166 = vsel %vm150, 1, 0
    %167 = vset.pattern.permute.xlu0 0
    %168 = vperm.xlu0 %167, %v151
    %v169 = vpop.permute.xlu0 %168
    %170 = vset.pattern.permute.xlu0 0
    %171 = vperm.xlu0 %170, %v152
    %v172 = vpop.permute.xlu0 %171
    %173 = vset.pattern.permute.xlu0 0
    %174 = vperm.xlu0 %173, %v153
    %v175 = vpop.permute.xlu0 %174
    %176 = vset.pattern.permute.xlu0 0
    %177 = vperm.xlu0 %176, %v154
    %v178 = vpop.permute.xlu0 %177
    %179 = vset.pattern.permute.xlu0 0
    %180 = vperm.xlu0 %179, %v155
    %v181 = vpop.permute.xlu0 %180
    %182 = vset.pattern.permute.xlu0 0
    %183 = vperm.xlu0 %182, %v156
    %v184 = vpop.permute.xlu0 %183
    %185 = vset.pattern.permute.xlu0 0
    %186 = vperm.xlu0 %185, %v157
    %v187 = vpop.permute.xlu0 %186
    %188 = vset.pattern.permute.xlu0 0
    %189 = vperm.xlu0 %188, %v158
    %v190 = vpop.permute.xlu0 %189
    %191 = vset.pattern.permute.xlu0 0
    %192 = vperm.xlu0 %191, %v159
    %v193 = vpop.permute.xlu0 %192
    %194 = vset.pattern.permute.xlu0 0
    %195 = vperm.xlu0 %194, %v160
    %v196 = vpop.permute.xlu0 %195
    %197 = vset.pattern.permute.xlu0 0
    %198 = vperm.xlu0 %197, %v161
    %v199 = vpop.permute.xlu0 %198
    %200 = vset.pattern.permute.xlu0 0
    %201 = vperm.xlu0 %200, %v162
    %v202 = vpop.permute.xlu0 %201
    %203 = vset.pattern.permute.xlu0 0
    %204 = vperm.xlu0 %203, %v163
    %v205 = vpop.permute.xlu0 %204
    %206 = vset.pattern.permute.xlu0 0
    %207 = vperm.xlu0 %206, %v164
    %v208 = vpop.permute.xlu0 %207
    %209 = vset.pattern.permute.xlu0 0
    %210 = vperm.xlu0 %209, %v165
    %v211 = vpop.permute.xlu0 %210
    %212 = vset.pattern.permute.xlu0 0
    %213 = vperm.xlu0 %212, %v166
    %v214 = vpop.permute.xlu0 %213
    %vm215 = vcmp.eq.s32.totalorder %v169, 1
    %vm216 = vcmp.eq.s32.totalorder %v172, 1
    %vm217 = vcmp.eq.s32.totalorder %v175, 1
    %vm218 = vcmp.eq.s32.totalorder %v178, 1
    %vm219 = vcmp.eq.s32.totalorder %v181, 1
    %vm220 = vcmp.eq.s32.totalorder %v184, 1
    %vm221 = vcmp.eq.s32.totalorder %v187, 1
    %vm222 = vcmp.eq.s32.totalorder %v190, 1
    %vm223 = vcmp.eq.s32.totalorder %v193, 1
    %vm224 = vcmp.eq.s32.totalorder %v196, 1
    %vm225 = vcmp.eq.s32.totalorder %v199, 1
    %vm226 = vcmp.eq.s32.totalorder %v202, 1
    %vm227 = vcmp.eq.s32.totalorder %v205, 1
    %vm228 = vcmp.eq.s32.totalorder %v208, 1
    %vm229 = vcmp.eq.s32.totalorder %v211, 1
    %vm230 = vcmp.eq.s32.totalorder %v214, 1
    %v231 = vsel %vm215, %v103, 0.0
    %v232 = vsel %vm216, %v104, 0.0
    %v233 = vsel %vm217, %v105, 0.0
    %v234 = vsel %vm218, %v106, 0.0
    %v235 = vsel %vm219, %v107, 0.0
    %v236 = vsel %vm220, %v108, 0.0
    %v237 = vsel %vm221, %v109, 0.0
    %v238 = vsel %vm222, %v110, 0.0
    %v239 = vsel %vm223, %v111, 0.0
    %v240 = vsel %vm224, %v112, 0.0
    %v241 = vsel %vm225, %v113, 0.0
    %v242 = vsel %vm226, %v114, 0.0
    %v243 = vsel %vm227, %v115, 0.0
    %v244 = vsel %vm228, %v116, 0.0
    %v245 = vsel %vm229, %v117, 0.0
    %v246 = vsel %vm230, %v118, 0.0
    loop: start=0, step=1, limit=2
    $region70: #{utransformer_forward.3} parent=1 // loop_pre_header
      _
    $region71: #{utransformer_forward.3} parent=1 // loop_header
      %s248 = sphi 0, %s252
      %p249 = scmp.ge.s32.totalorder %s248, 2
      %v253 = vphi %v231, %v1495
      %v254 = vphi %v232, %v1496
      %v255 = vphi %v233, %v1497
      %v256 = vphi %v234, %v1498
      %v257 = vphi %v235, %v1499
      %v258 = vphi %v236, %v1500
      %v259 = vphi %v237, %v1501
      %v260 = vphi %v238, %v1502
      %v261 = vphi %v239, %v1503
      %v262 = vphi %v240, %v1504
      %v263 = vphi %v241, %v1505
      %v264 = vphi %v242, %v1506
      %v265 = vphi %v243, %v1507
      %v266 = vphi %v244, %v1508
      %v267 = vphi %v245, %v1509
      %v268 = vphi %v246, %v1510
    $region72: #{utransformer_forward.3} parent=1 // loop_header_branch
      %251 = sbr.rel (%p249) target = $region76
    $region73: #{utransformer_forward.3} parent=1 // loop_body
      %v269 = vpack.c.bf16 %v254, %v253
      %v270 = vpack.c.bf16 %v256, %v255
      %v271 = vpack.c.bf16 %v258, %v257
      %v272 = vpack.c.bf16 %v260, %v259
      %v273 = vpack.c.bf16 %v262, %v261
      %v274 = vpack.c.bf16 %v264, %v263
      %v275 = vpack.c.bf16 %v266, %v265
      %v276 = vpack.c.bf16 %v268, %v267
      %s277 = smul.u32 %s248, 16
      %s278 = smul.addr %s277, 4
      %s279 = scalar_lea.vmem %s3, %s278
      %v280 = vld [vmem:[%s279] sm:$0xf]
      %v281 = vld [vmem:[%s279 + $0x4] sm:$0xf]
      %v282 = vld [vmem:[%s279 + $0x8] sm:$0xf]
      %v283 = vld [vmem:[%s279 + $0xc] sm:$0xf]
      %v284 = vld [vmem:[%s279 + $0x10] sm:$0xf]
      %v285 = vld [vmem:[%s279 + $0x14] sm:$0xf]
      %v286 = vld [vmem:[%s279 + $0x18] sm:$0xf]
      %v287 = vld [vmem:[%s279 + $0x1c] sm:$0xf]
      %v288 = vld [vmem:[%s279 + $0x20] sm:$0xf]
      %v289 = vld [vmem:[%s279 + $0x24] sm:$0xf]
      %v290 = vld [vmem:[%s279 + $0x28] sm:$0xf]
      %v291 = vld [vmem:[%s279 + $0x2c] sm:$0xf]
      %v292 = vld [vmem:[%s279 + $0x30] sm:$0xf]
      %v293 = vld [vmem:[%s279 + $0x34] sm:$0xf]
      %v294 = vld [vmem:[%s279 + $0x38] sm:$0xf]
      %v295 = vld [vmem:[%s279 + $0x3c] sm:$0xf]
      %s296 = scalar_lea.vmem %s4, %s248
      %v297 = vld [vmem:[%s296] sm:$0x1]
      %v299 = vlaneseq
      %v300 = vshrl.u32 %v299, 7
      %v301 = vsub.s32 0, %v300
      %v302 = vrot.slane %v297, %v301
      %v320 = vunpack.c.l.b16 %v280
      %v321 = vunpack.c.l.b16 %v281
      %v322 = vunpack.c.l.b16 %v282
      %v323 = vunpack.c.l.b16 %v283
      %v324 = vunpack.c.l.b16 %v284
      %v325 = vunpack.c.l.b16 %v285
      %v326 = vunpack.c.l.b16 %v286
      %v327 = vunpack.c.l.b16 %v287
      %v328 = vunpack.c.l.b16 %v288
      %v329 = vunpack.c.l.b16 %v289
      %v330 = vunpack.c.l.b16 %v290
      %v331 = vunpack.c.l.b16 %v291
      %v332 = vunpack.c.l.b16 %v292
      %v333 = vunpack.c.l.b16 %v293
      %v334 = vunpack.c.l.b16 %v294
      %v335 = vunpack.c.l.b16 %v295
      %v336 = vpack.c.b16 %v321, %v320
      %v337 = vpack.c.b16 %v323, %v322
      %v338 = vpack.c.b16 %v325, %v324
      %v339 = vpack.c.b16 %v327, %v326
      %v340 = vpack.c.b16 %v329, %v328
      %v341 = vpack.c.b16 %v331, %v330
      %v342 = vpack.c.b16 %v333, %v332
      %v343 = vpack.c.b16 %v335, %v334
      %352 = vmatprep.subr.bf16.mxu0 0
      %353 = vmatpush1.bf16.msra.mxu0 %v336
      %354 = vmatprep.subr.bf16.mxu0 0
      %355 = vmatpush1.bf16.msra.mxu0 %v337
      %356 = vmatprep.subr.bf16.mxu0 0
      %357 = vmatpush1.bf16.msra.mxu0 %v338
      %358 = vmatprep.subr.bf16.mxu0 0
      %359 = vmatpush1.bf16.msra.mxu0 %v339
      %360 = vmatprep.subr.bf16.mxu0 0
      %361 = vmatpush1.bf16.msra.mxu0 %v340
      %362 = vmatprep.subr.bf16.mxu0 0
      %363 = vmatpush1.bf16.msra.mxu0 %v341
      %364 = vmatprep.subr.bf16.mxu0 0
      %365 = vmatpush1.bf16.msra.mxu0 %v342
      %366 = vmatprep.subr.bf16.mxu0 0
      %367 = vmatpush1.bf16.msra.mxu0 %v343
      %368 = vmatprep.subr.bf16.mxu0 0
      %369 = vmatpush1.bf16.msra.mxu0 0
      %370 = vmatprep.subr.bf16.mxu0 0
      %371 = vmatpush1.bf16.msra.mxu0 0
      %372 = vmatprep.subr.bf16.mxu0 0
      %373 = vmatpush1.bf16.msra.mxu0 0
      %374 = vmatprep.subr.bf16.mxu0 0
      %375 = vmatpush1.bf16.msra.mxu0 0
      %376 = vmatprep.subr.bf16.mxu0 0
      %377 = vmatpush1.bf16.msra.mxu0 0
      %378 = vmatprep.subr.bf16.mxu0 0
      %379 = vmatpush1.bf16.msra.mxu0 0
      %380 = vmatprep.subr.bf16.mxu0 0
      %381 = vmatpush1.bf16.msra.mxu0 0
      %382 = vmatprep.subr.bf16.mxu0 0
      %383 = vmatpush1.bf16.msra.mxu0 0
      %384 = vmatprep.mubr.bf16.mxu0 0
      %385 = vmatmul.mubr.bf16.gmra.mrb[0].mxu0 %v269
      %v386 = vpop.f32.mrb[0].mxu0
      %v387 = vadd.f32 %v302, %v386
      %v388 = vpop.f32.mrb[0].mxu0
      %v389 = vpop.f32.mrb[0].mxu0
      %v390 = vadd.f32 %v302, %v389
      %v391 = vpop.f32.mrb[0].mxu0
      %392 = vmatprep.mubr.bf16.mxu0 0
      %393 = vmatmul.mubr.bf16.gmra.mrb[0].mxu0 %v270
      %v394 = vpop.f32.mrb[0].mxu0
      %v395 = vadd.f32 %v302, %v394
      %v396 = vpop.f32.mrb[0].mxu0
      %v397 = vpop.f32.mrb[0].mxu0
      %v398 = vadd.f32 %v302, %v397
      %v399 = vpop.f32.mrb[0].mxu0
      %400 = vmatprep.mubr.bf16.mxu0 0
      %401 = vmatmul.mubr.bf16.gmra.mrb[0].mxu0 %v271
      %v402 = vpop.f32.mrb[0].mxu0
      %v403 = vadd.f32 %v302, %v402
      %v404 = vpop.f32.mrb[0].mxu0
      %v405 = vpop.f32.mrb[0].mxu0
      %v406 = vadd.f32 %v302, %v405
      %v407 = vpop.f32.mrb[0].mxu0
      %408 = vmatprep.mubr.bf16.mxu0 0
      %409 = vmatmul.mubr.bf16.gmra.mrb[0].mxu0 %v272
      %v410 = vpop.f32.mrb[0].mxu0
      %v411 = vadd.f32 %v302, %v410
      %v412 = vpop.f32.mrb[0].mxu0
      %v413 = vpop.f32.mrb[0].mxu0
      %v414 = vadd.f32 %v302, %v413
      %v415 = vpop.f32.mrb[0].mxu0
      %416 = vmatprep.mubr.bf16.mxu0 0
      %417 = vmatmul.mubr.bf16.gmra.mrb[0].mxu0 %v273
      %v418 = vpop.f32.mrb[0].mxu0
      %v419 = vadd.f32 %v302, %v418
      %v420 = vpop.f32.mrb[0].mxu0
      %v421 = vpop.f32.mrb[0].mxu0
      %v422 = vadd.f32 %v302, %v421
      %v423 = vpop.f32.mrb[0].mxu0
      %424 = vmatprep.mubr.bf16.mxu0 0
      %425 = vmatmul.mubr.bf16.gmra.mrb[0].mxu0 %v274
      %v426 = vpop.f32.mrb[0].mxu0
      %v427 = vadd.f32 %v302, %v426
      %v428 = vpop.f32.mrb[0].mxu0
      %v429 = vpop.f32.mrb[0].mxu0
      %v430 = vadd.f32 %v302, %v429
      %v431 = vpop.f32.mrb[0].mxu0
      %432 = vmatprep.mubr.bf16.mxu0 0
      %433 = vmatmul.mubr.bf16.gmra.mrb[0].mxu0 %v275
      %v434 = vpop.f32.mrb[0].mxu0
      %v435 = vadd.f32 %v302, %v434
      %v436 = vpop.f32.mrb[0].mxu0
      %v437 = vpop.f32.mrb[0].mxu0
      %v438 = vadd.f32 %v302, %v437
      %v439 = vpop.f32.mrb[0].mxu0
      %440 = vmatprep.mubr.bf16.mxu0 0
      %441 = vmatmul.mubr.bf16.gmra.mrb[0].mxu0 %v276
      %v442 = vpop.f32.mrb[0].mxu0
      %v443 = vadd.f32 %v302, %v442
      %v444 = vpop.f32.mrb[0].mxu0
      %v445 = vpop.f32.mrb[0].mxu0
      %v446 = vadd.f32 %v302, %v445
      %v447 = vpop.f32.mrb[0].mxu0
      %448 = vdwg.mxu0
      %v449 = vadd.f32 %v253, %v387
      %v450 = vadd.f32 %v254, %v390
      %v451 = vadd.f32 %v255, %v395
      %v452 = vadd.f32 %v256, %v398
      %v453 = vadd.f32 %v257, %v403
      %v454 = vadd.f32 %v258, %v406
      %v455 = vadd.f32 %v259, %v411
      %v456 = vadd.f32 %v260, %v414
      %v457 = vadd.f32 %v261, %v419
      %v458 = vadd.f32 %v262, %v422
      %v459 = vadd.f32 %v263, %v427
      %v460 = vadd.f32 %v264, %v430
      %v461 = vadd.f32 %v265, %v435
      %v462 = vadd.f32 %v266, %v438
      %v463 = vadd.f32 %v267, %v443
      %v464 = vadd.f32 %v268, %v446
      %s465 = scalar_lea.vmem %s5, %s248
      %v466 = vld [vmem:[%s465] sm:$0x1]
      %s467 = scalar_lea.vmem %s6, %s248
      %v468 = vld [vmem:[%s467] sm:$0x1]
      %469 = vadd.xlane.f32.xlu0 %v449
      %v470 = vpop.xlane.xlu0 %469
      %471 = vadd.xlane.f32.xlu0 %v450
      %v472 = vpop.xlane.xlu0 %471
      %473 = vadd.xlane.f32.xlu0 %v451
      %v474 = vpop.xlane.xlu0 %473
      %475 = vadd.xlane.f32.xlu0 %v452
      %v476 = vpop.xlane.xlu0 %475
      %477 = vadd.xlane.f32.xlu0 %v453
      %v478 = vpop.xlane.xlu0 %477
      %479 = vadd.xlane.f32.xlu0 %v454
      %v480 = vpop.xlane.xlu0 %479
      %481 = vadd.xlane.f32.xlu0 %v455
      %v482 = vpop.xlane.xlu0 %481
      %483 = vadd.xlane.f32.xlu0 %v456
      %v484 = vpop.xlane.xlu0 %483
      %485 = vadd.xlane.f32.xlu0 %v457
      %v486 = vpop.xlane.xlu0 %485
      %487 = vadd.xlane.f32.xlu0 %v458
      %v488 = vpop.xlane.xlu0 %487
      %489 = vadd.xlane.f32.xlu0 %v459
      %v490 = vpop.xlane.xlu0 %489
      %491 = vadd.xlane.f32.xlu0 %v460
      %v492 = vpop.xlane.xlu0 %491
      %493 = vadd.xlane.f32.xlu0 %v461
      %v494 = vpop.xlane.xlu0 %493
      %495 = vadd.xlane.f32.xlu0 %v462
      %v496 = vpop.xlane.xlu0 %495
      %497 = vadd.xlane.f32.xlu0 %v463
      %v498 = vpop.xlane.xlu0 %497
      %499 = vadd.xlane.f32.xlu0 %v464
      %v500 = vpop.xlane.xlu0 %499
      %v501 = vrcp.pop 128.0
      %v502 = vmul.f32 %v470, %v501
      %v503 = vmul.f32 %v472, %v501
      %v504 = vmul.f32 %v474, %v501
      %v505 = vmul.f32 %v476, %v501
      %v506 = vmul.f32 %v478, %v501
      %v507 = vmul.f32 %v480, %v501
      %v508 = vmul.f32 %v482, %v501
      %v509 = vmul.f32 %v484, %v501
      %v510 = vmul.f32 %v486, %v501
      %v511 = vmul.f32 %v488, %v501
      %v512 = vmul.f32 %v490, %v501
      %v513 = vmul.f32 %v492, %v501
      %v514 = vmul.f32 %v494, %v501
      %v515 = vmul.f32 %v496, %v501
      %v516 = vmul.f32 %v498, %v501
      %v517 = vmul.f32 %v500, %v501
      %v518 = vmul.f32 %v449, %v449
      %v519 = vmul.f32 %v450, %v450
      %v520 = vmul.f32 %v451, %v451
      %v521 = vmul.f32 %v452, %v452
      %v522 = vmul.f32 %v453, %v453
      %v523 = vmul.f32 %v454, %v454
      %v524 = vmul.f32 %v455, %v455
      %v525 = vmul.f32 %v456, %v456
      %v526 = vmul.f32 %v457, %v457
      %v527 = vmul.f32 %v458, %v458
      %v528 = vmul.f32 %v459, %v459
      %v529 = vmul.f32 %v460, %v460
      %v530 = vmul.f32 %v461, %v461
      %v531 = vmul.f32 %v462, %v462
      %v532 = vmul.f32 %v463, %v463
      %v533 = vmul.f32 %v464, %v464
      %534 = vadd.xlane.f32.xlu0 %v518
      %v535 = vpop.xlane.xlu0 %534
      %536 = vadd.xlane.f32.xlu0 %v519
      %v537 = vpop.xlane.xlu0 %536
      %538 = vadd.xlane.f32.xlu0 %v520
      %v539 = vpop.xlane.xlu0 %538
      %540 = vadd.xlane.f32.xlu0 %v521
      %v541 = vpop.xlane.xlu0 %540
      %542 = vadd.xlane.f32.xlu0 %v522
      %v543 = vpop.xlane.xlu0 %542
      %544 = vadd.xlane.f32.xlu0 %v523
      %v545 = vpop.xlane.xlu0 %544
      %546 = vadd.xlane.f32.xlu0 %v524
      %v547 = vpop.xlane.xlu0 %546
      %548 = vadd.xlane.f32.xlu0 %v525
      %v549 = vpop.xlane.xlu0 %548
      %550 = vadd.xlane.f32.xlu0 %v526
      %v551 = vpop.xlane.xlu0 %550
      %552 = vadd.xlane.f32.xlu0 %v527
      %v553 = vpop.xlane.xlu0 %552
      %554 = vadd.xlane.f32.xlu0 %v528
      %v555 = vpop.xlane.xlu0 %554
      %556 = vadd.xlane.f32.xlu0 %v529
      %v557 = vpop.xlane.xlu0 %556
      %558 = vadd.xlane.f32.xlu0 %v530
      %v559 = vpop.xlane.xlu0 %558
      %560 = vadd.xlane.f32.xlu0 %v531
      %v561 = vpop.xlane.xlu0 %560
      %562 = vadd.xlane.f32.xlu0 %v532
      %v563 = vpop.xlane.xlu0 %562
      %564 = vadd.xlane.f32.xlu0 %v533
      %v565 = vpop.xlane.xlu0 %564
      %v566 = vmul.f32 %v535, %v501
      %v567 = vmul.f32 %v537, %v501
      %v568 = vmul.f32 %v539, %v501
      %v569 = vmul.f32 %v541, %v501
      %v570 = vmul.f32 %v543, %v501
      %v571 = vmul.f32 %v545, %v501
      %v572 = vmul.f32 %v547, %v501
      %v573 = vmul.f32 %v549, %v501
      %v574 = vmul.f32 %v551, %v501
      %v575 = vmul.f32 %v553, %v501
      %v576 = vmul.f32 %v555, %v501
      %v577 = vmul.f32 %v557, %v501
      %v578 = vmul.f32 %v559, %v501
      %v579 = vmul.f32 %v561, %v501
      %v580 = vmul.f32 %v563, %v501
      %v581 = vmul.f32 %v565, %v501
      %v582 = vmul.f32 %v502, %v502
      %v583 = vmul.f32 %v503, %v503
      %v584 = vmul.f32 %v504, %v504
      %v585 = vmul.f32 %v505, %v505
      %v586 = vmul.f32 %v506, %v506
      %v587 = vmul.f32 %v507, %v507
      %v588 = vmul.f32 %v508, %v508
      %v589 = vmul.f32 %v509, %v509
      %v590 = vmul.f32 %v510, %v510
      %v591 = vmul.f32 %v511, %v511
      %v592 = vmul.f32 %v512, %v512
      %v593 = vmul.f32 %v513, %v513
      %v594 = vmul.f32 %v514, %v514
      %v595 = vmul.f32 %v515, %v515
      %v596 = vmul.f32 %v516, %v516
      %v597 = vmul.f32 %v517, %v517
      %v598 = vsub.f32 %v566, %v582
      %v599 = vsub.f32 %v567, %v583
      %v600 = vsub.f32 %v568, %v584
      %v601 = vsub.f32 %v569, %v585
      %v602 = vsub.f32 %v570, %v586
      %v603 = vsub.f32 %v571, %v587
      %v604 = vsub.f32 %v572, %v588
      %v605 = vsub.f32 %v573, %v589
      %v606 = vsub.f32 %v574, %v590
      %v607 = vsub.f32 %v575, %v591
      %v608 = vsub.f32 %v576, %v592
      %v609 = vsub.f32 %v577, %v593
      %v610 = vsub.f32 %v578, %v594
      %v611 = vsub.f32 %v579, %v595
      %v612 = vsub.f32 %v580, %v596
      %v613 = vsub.f32 %v581, %v597
      %v614 = vsub.f32 %v449, %v502
      %v615 = vsub.f32 %v450, %v503
      %v616 = vsub.f32 %v451, %v504
      %v617 = vsub.f32 %v452, %v505
      %v618 = vsub.f32 %v453, %v506
      %v619 = vsub.f32 %v454, %v507
      %v620 = vsub.f32 %v455, %v508
      %v621 = vsub.f32 %v456, %v509
      %v622 = vsub.f32 %v457, %v510
      %v623 = vsub.f32 %v458, %v511
      %v624 = vsub.f32 %v459, %v512
      %v625 = vsub.f32 %v460, %v513
      %v626 = vsub.f32 %v461, %v514
      %v627 = vsub.f32 %v462, %v515
      %v628 = vsub.f32 %v463, %v516
      %v629 = vsub.f32 %v464, %v517
      %v630 = vadd.f32 %v598, 1e-05
      %v631 = vadd.f32 %v599, 1e-05
      %v632 = vadd.f32 %v600, 1e-05
      %v633 = vadd.f32 %v601, 1e-05
      %v634 = vadd.f32 %v602, 1e-05
      %v635 = vadd.f32 %v603, 1e-05
      %v636 = vadd.f32 %v604, 1e-05
      %v637 = vadd.f32 %v605, 1e-05
      %v638 = vadd.f32 %v606, 1e-05
      %v639 = vadd.f32 %v607, 1e-05
      %v640 = vadd.f32 %v608, 1e-05
      %v641 = vadd.f32 %v609, 1e-05
      %v642 = vadd.f32 %v610, 1e-05
      %v643 = vadd.f32 %v611, 1e-05
      %v644 = vadd.f32 %v612, 1e-05
      %v645 = vadd.f32 %v613, 1e-05
      %v646 = vrsqrt.pop %v630
      %v647 = vrsqrt.pop %v631
      %v648 = vrsqrt.pop %v632
      %v649 = vrsqrt.pop %v633
      %v650 = vrsqrt.pop %v634
      %v651 = vrsqrt.pop %v635
      %v652 = vrsqrt.pop %v636
      %v653 = vrsqrt.pop %v637
      %v654 = vrsqrt.pop %v638
      %v655 = vrsqrt.pop %v639
      %v656 = vrsqrt.pop %v640
      %v657 = vrsqrt.pop %v641
      %v658 = vrsqrt.pop %v642
      %v659 = vrsqrt.pop %v643
      %v660 = vrsqrt.pop %v644
      %v661 = vrsqrt.pop %v645
      %v662 = vmul.f32 %v614, %v646
      %v663 = vmul.f32 %v615, %v647
      %v664 = vmul.f32 %v616, %v648
      %v665 = vmul.f32 %v617, %v649
      %v666 = vmul.f32 %v618, %v650
      %v667 = vmul.f32 %v619, %v651
      %v668 = vmul.f32 %v620, %v652
      %v669 = vmul.f32 %v621, %v653
      %v670 = vmul.f32 %v622, %v654
      %v671 = vmul.f32 %v623, %v655
      %v672 = vmul.f32 %v624, %v656
      %v673 = vmul.f32 %v625, %v657
      %v674 = vmul.f32 %v626, %v658
      %v675 = vmul.f32 %v627, %v659
      %v676 = vmul.f32 %v628, %v660
      %v677 = vmul.f32 %v629, %v661
      %v679 = vlaneseq
      %v680 = vshrl.u32 %v679, 7
      %v681 = vsub.s32 0, %v680
      %v682 = vrot.slane %v466, %v681
      %v684 = vmul.f32 %v662, %v682
      %v685 = vmul.f32 %v663, %v682
      %v686 = vmul.f32 %v664, %v682
      %v687 = vmul.f32 %v665, %v682
      %v688 = vmul.f32 %v666, %v682
      %v689 = vmul.f32 %v667, %v682
      %v690 = vmul.f32 %v668, %v682
      %v691 = vmul.f32 %v669, %v682
      %v692 = vmul.f32 %v670, %v682
      %v693 = vmul.f32 %v671, %v682
      %v694 = vmul.f32 %v672, %v682
      %v695 = vmul.f32 %v673, %v682
      %v696 = vmul.f32 %v674, %v682
      %v697 = vmul.f32 %v675, %v682
      %v698 = vmul.f32 %v676, %v682
      %v699 = vmul.f32 %v677, %v682
      %v701 = vlaneseq
      %v702 = vshrl.u32 %v701, 7
      %v703 = vsub.s32 0, %v702
      %v704 = vrot.slane %v468, %v703
      %v706 = vadd.f32 %v684, %v704
      %v707 = vadd.f32 %v685, %v704
      %v708 = vadd.f32 %v686, %v704
      %v709 = vadd.f32 %v687, %v704
      %v710 = vadd.f32 %v688, %v704
      %v711 = vadd.f32 %v689, %v704
      %v712 = vadd.f32 %v690, %v704
      %v713 = vadd.f32 %v691, %v704
      %v714 = vadd.f32 %v692, %v704
      %v715 = vadd.f32 %v693, %v704
      %v716 = vadd.f32 %v694, %v704
      %v717 = vadd.f32 %v695, %v704
      %v718 = vadd.f32 %v696, %v704
      %v719 = vadd.f32 %v697, %v704
      %v720 = vadd.f32 %v698, %v704
      %v721 = vadd.f32 %v699, %v704
      %v722 = vpack.c.bf16 %v707, %v706
      %v723 = vpack.c.bf16 %v709, %v708
      %v724 = vpack.c.bf16 %v711, %v710
      %v725 = vpack.c.bf16 %v713, %v712
      %v726 = vpack.c.bf16 %v715, %v714
      %v727 = vpack.c.bf16 %v717, %v716
      %v728 = vpack.c.bf16 %v719, %v718
      %v729 = vpack.c.bf16 %v721, %v720
      %s730 = smul.u32 %s248, 32
      %s731 = smul.addr %s730, 4
      %s732 = scalar_lea.vmem %s7, %s731
      %v733 = vld [vmem:[%s732] sm:$0xff]
      %v734 = vld [vmem:[%s732 + $0x8] sm:$0xff]
      %v735 = vld [vmem:[%s732 + $0x10] sm:$0xff]
      %v736 = vld [vmem:[%s732 + $0x18] sm:$0xff]
      %v737 = vld [vmem:[%s732 + $0x20] sm:$0xff]
      %v738 = vld [vmem:[%s732 + $0x28] sm:$0xff]
      %v739 = vld [vmem:[%s732 + $0x30] sm:$0xff]
      %v740 = vld [vmem:[%s732 + $0x38] sm:$0xff]
      %v741 = vld [vmem:[%s732 + $0x40] sm:$0xff]
      %v742 = vld [vmem:[%s732 + $0x48] sm:$0xff]
      %v743 = vld [vmem:[%s732 + $0x50] sm:$0xff]
      %v744 = vld [vmem:[%s732 + $0x58] sm:$0xff]
      %v745 = vld [vmem:[%s732 + $0x60] sm:$0xff]
      %v746 = vld [vmem:[%s732 + $0x68] sm:$0xff]
      %v747 = vld [vmem:[%s732 + $0x70] sm:$0xff]
      %v748 = vld [vmem:[%s732 + $0x78] sm:$0xff]
      %s749 = smul.u32 %s248, 2
      %s750 = scalar_lea.vmem %s8, %s749
      %v751 = vld [vmem:[%s750] sm:$0x3]
      %v753 = vlaneseq
      %v754 = vshrl.u32 %v753, 7
      %v755 = vsub.s32 0, %v754
      %v756 = vrot.slane %v751, %v755
      %v757 = vlaneseq
      %v758 = vshrl.u32 %v757, 7
      %v759 = vsub.s32 1, %v758
      %v760 = vrot.slane %v751, %v759
      %v779 = vunpack.c.l.b16 %v733
      %v780 = vunpack.c.h.b16 %v733
      %v781 = vunpack.c.l.b16 %v734
      %v782 = vunpack.c.h.b16 %v734
      %v783 = vunpack.c.l.b16 %v735
      %v784 = vunpack.c.h.b16 %v735
      %v785 = vunpack.c.l.b16 %v736
      %v786 = vunpack.c.h.b16 %v736
      %v787 = vunpack.c.l.b16 %v737
      %v788 = vunpack.c.h.b16 %v737
      %v789 = vunpack.c.l.b16 %v738
      %v790 = vunpack.c.h.b16 %v738
      %v791 = vunpack.c.l.b16 %v739
      %v792 = vunpack.c.h.b16 %v739
      %v793 = vunpack.c.l.b16 %v740
      %v794 = vunpack.c.h.b16 %v740
      %v795 = vunpack.c.l.b16 %v741
      %v796 = vunpack.c.h.b16 %v741
      %v797 = vunpack.c.l.b16 %v742
      %v798 = vunpack.c.h.b16 %v742
      %v799 = vunpack.c.l.b16 %v743
      %v800 = vunpack.c.h.b16 %v743
      %v801 = vunpack.c.l.b16 %v744
      %v802 = vunpack.c.h.b16 %v744
      %v803 = vunpack.c.l.b16 %v745
      %v804 = vunpack.c.h.b16 %v745
      %v805 = vunpack.c.l.b16 %v746
      %v806 = vunpack.c.h.b16 %v746
      %v807 = vunpack.c.l.b16 %v747
      %v808 = vunpack.c.h.b16 %v747
      %v809 = vunpack.c.l.b16 %v748
      %v810 = vunpack.c.h.b16 %v748
      %v811 = vpack.c.b16 %v781, %v779
      %v812 = vpack.c.b16 %v782, %v780
      %v813 = vpack.c.b16 %v785, %v783
      %v814 = vpack.c.b16 %v786, %v784
      %v815 = vpack.c.b16 %v789, %v787
      %v816 = vpack.c.b16 %v790, %v788
      %v817 = vpack.c.b16 %v793, %v791
      %v818 = vpack.c.b16 %v794, %v792
      %v819 = vpack.c.b16 %v797, %v795
      %v820 = vpack.c.b16 %v798, %v796
      %v821 = vpack.c.b16 %v801, %v799
      %v822 = vpack.c.b16 %v802, %v800
      %v823 = vpack.c.b16 %v805, %v803
      %v824 = vpack.c.b16 %v806, %v804
      %v825 = vpack.c.b16 %v809, %v807
      %v826 = vpack.c.b16 %v810, %v808
      %843 = vmatprep.subr.bf16.mxu0 %v812
      %844 = vmatpush1.bf16.msra.mxu0 %v811
      %845 = vmatprep.subr.bf16.mxu0 %v814
      %846 = vmatpush1.bf16.msra.mxu0 %v813
      %847 = vmatprep.subr.bf16.mxu0 %v816
      %848 = vmatpush1.bf16.msra.mxu0 %v815
      %849 = vmatprep.subr.bf16.mxu0 %v818
      %850 = vmatpush1.bf16.msra.mxu0 %v817
      %851 = vmatprep.subr.bf16.mxu0 %v820
      %852 = vmatpush1.bf16.msra.mxu0 %v819
      %853 = vmatprep.subr.bf16.mxu0 %v822
      %854 = vmatpush1.bf16.msra.mxu0 %v821
      %855 = vmatprep.subr.bf16.mxu0 %v824
      %856 = vmatpush1.bf16.msra.mxu0 %v823
      %857 = vmatprep.subr.bf16.mxu0 %v826
      %858 = vmatpush1.bf16.msra.mxu0 %v825
      %859 = vmatprep.subr.bf16.mxu0 0
      %860 = vmatpush1.bf16.msra.mxu0 0
      %861 = vmatprep.subr.bf16.mxu0 0
      %862 = vmatpush1.bf16.msra.mxu0 0
      %863 = vmatprep.subr.bf16.mxu0 0
      %864 = vmatpush1.bf16.msra.mxu0 0
      %865 = vmatprep.subr.bf16.mxu0 0
      %866 = vmatpush1.bf16.msra.mxu0 0
      %867 = vmatprep.subr.bf16.mxu0 0
      %868 = vmatpush1.bf16.msra.mxu0 0
      %869 = vmatprep.subr.bf16.mxu0 0
      %870 = vmatpush1.bf16.msra.mxu0 0
      %871 = vmatprep.subr.bf16.mxu0 0
      %872 = vmatpush1.bf16.msra.mxu0 0
      %873 = vmatprep.subr.bf16.mxu0 0
      %874 = vmatpush1.bf16.msra.mxu0 0
      %875 = vmatprep.mubr.bf16.mxu0 0
      %876 = vmatmul.mubr.bf16.gmra.mrb[0].mxu0 %v722
      %v877 = vpop.f32.mrb[0].mxu0
      %v878 = vadd.f32 %v756, %v877
      %v879 = vpop.f32.mrb[0].mxu0
      %v880 = vadd.f32 %v760, %v879
      %v881 = vpop.f32.mrb[0].mxu0
      %v882 = vadd.f32 %v756, %v881
      %v883 = vpop.f32.mrb[0].mxu0
      %v884 = vadd.f32 %v760, %v883
      %885 = vmatprep.mubr.bf16.mxu0 0
      %886 = vmatmul.mubr.bf16.gmra.mrb[0].mxu0 %v723
      %v887 = vpop.f32.mrb[0].mxu0
      %v888 = vadd.f32 %v756, %v887
      %v889 = vpop.f32.mrb[0].mxu0
      %v890 = vadd.f32 %v760, %v889
      %v891 = vpop.f32.mrb[0].mxu0
      %v892 = vadd.f32 %v756, %v891
      %v893 = vpop.f32.mrb[0].mxu0
      %v894 = vadd.f32 %v760, %v893
      %895 = vmatprep.mubr.bf16.mxu0 0
      %896 = vmatmul.mubr.bf16.gmra.mrb[0].mxu0 %v724
      %v897 = vpop.f32.mrb[0].mxu0
      %v898 = vadd.f32 %v756, %v897
      %v899 = vpop.f32.mrb[0].mxu0
      %v900 = vadd.f32 %v760, %v899
      %v901 = vpop.f32.mrb[0].mxu0
      %v902 = vadd.f32 %v756, %v901
      %v903 = vpop.f32.mrb[0].mxu0
      %v904 = vadd.f32 %v760, %v903
      %905 = vmatprep.mubr.bf16.mxu0 0
      %906 = vmatmul.mubr.bf16.gmra.mrb[0].mxu0 %v725
      %v907 = vpop.f32.mrb[0].mxu0
      %v908 = vadd.f32 %v756, %v907
      %v909 = vpop.f32.mrb[0].mxu0
      %v910 = vadd.f32 %v760, %v909
      %v911 = vpop.f32.mrb[0].mxu0
      %v912 = vadd.f32 %v756, %v911
      %v913 = vpop.f32.mrb[0].mxu0
      %v914 = vadd.f32 %v760, %v913
      %915 = vmatprep.mubr.bf16.mxu0 0
      %916 = vmatmul.mubr.bf16.gmra.mrb[0].mxu0 %v726
      %v917 = vpop.f32.mrb[0].mxu0
      %v918 = vadd.f32 %v756, %v917
      %v919 = vpop.f32.mrb[0].mxu0
      %v920 = vadd.f32 %v760, %v919
      %v921 = vpop.f32.mrb[0].mxu0
      %v922 = vadd.f32 %v756, %v921
      %v923 = vpop.f32.mrb[0].mxu0
      %v924 = vadd.f32 %v760, %v923
      %925 = vmatprep.mubr.bf16.mxu0 0
      %926 = vmatmul.mubr.bf16.gmra.mrb[0].mxu0 %v727
      %v927 = vpop.f32.mrb[0].mxu0
      %v928 = vadd.f32 %v756, %v927
      %v929 = vpop.f32.mrb[0].mxu0
      %v930 = vadd.f32 %v760, %v929
      %v931 = vpop.f32.mrb[0].mxu0
      %v932 = vadd.f32 %v756, %v931
      %v933 = vpop.f32.mrb[0].mxu0
      %v934 = vadd.f32 %v760, %v933
      %935 = vmatprep.mubr.bf16.mxu0 0
      %936 = vmatmul.mubr.bf16.gmra.mrb[0].mxu0 %v728
      %v937 = vpop.f32.mrb[0].mxu0
      %v938 = vadd.f32 %v756, %v937
      %v939 = vpop.f32.mrb[0].mxu0
      %v940 = vadd.f32 %v760, %v939
      %v941 = vpop.f32.mrb[0].mxu0
      %v942 = vadd.f32 %v756, %v941
      %v943 = vpop.f32.mrb[0].mxu0
      %v944 = vadd.f32 %v760, %v943
      %945 = vmatprep.mubr.bf16.mxu0 0
      %946 = vmatmul.mubr.bf16.gmra.mrb[0].mxu0 %v729
      %v947 = vpop.f32.mrb[0].mxu0
      %v948 = vadd.f32 %v756, %v947
      %v949 = vpop.f32.mrb[0].mxu0
      %v950 = vadd.f32 %v760, %v949
      %v951 = vpop.f32.mrb[0].mxu0
      %v952 = vadd.f32 %v756, %v951
      %v953 = vpop.f32.mrb[0].mxu0
      %v954 = vadd.f32 %v760, %v953
      %955 = vdwg.mxu0
      %v956 = vmax.f32 %v878, 0.0
      %v957 = vmax.f32 %v880, 0.0
      %v958 = vmax.f32 %v882, 0.0
      %v959 = vmax.f32 %v884, 0.0
      %v960 = vmax.f32 %v888, 0.0
      %v961 = vmax.f32 %v890, 0.0
      %v962 = vmax.f32 %v892, 0.0
      %v963 = vmax.f32 %v894, 0.0
      %v964 = vmax.f32 %v898, 0.0
      %v965 = vmax.f32 %v900, 0.0
      %v966 = vmax.f32 %v902, 0.0
      %v967 = vmax.f32 %v904, 0.0
      %v968 = vmax.f32 %v908, 0.0
      %v969 = vmax.f32 %v910, 0.0
      %v970 = vmax.f32 %v912, 0.0
      %v971 = vmax.f32 %v914, 0.0
      %v972 = vmax.f32 %v918, 0.0
      %v973 = vmax.f32 %v920, 0.0
      %v974 = vmax.f32 %v922, 0.0
      %v975 = vmax.f32 %v924, 0.0
      %v976 = vmax.f32 %v928, 0.0
      %v977 = vmax.f32 %v930, 0.0
      %v978 = vmax.f32 %v932, 0.0
      %v979 = vmax.f32 %v934, 0.0
      %v980 = vmax.f32 %v938, 0.0
      %v981 = vmax.f32 %v940, 0.0
      %v982 = vmax.f32 %v942, 0.0
      %v983 = vmax.f32 %v944, 0.0
      %v984 = vmax.f32 %v948, 0.0
      %v985 = vmax.f32 %v950, 0.0
      %v986 = vmax.f32 %v952, 0.0
      %v987 = vmax.f32 %v954, 0.0
      %v988 = vpack.c.bf16 %v958, %v956
      %v989 = vpack.c.bf16 %v959, %v957
      %v990 = vpack.c.bf16 %v962, %v960
      %v991 = vpack.c.bf16 %v963, %v961
      %v992 = vpack.c.bf16 %v966, %v964
      %v993 = vpack.c.bf16 %v967, %v965
      %v994 = vpack.c.bf16 %v970, %v968
      %v995 = vpack.c.bf16 %v971, %v969
      %v996 = vpack.c.bf16 %v974, %v972
      %v997 = vpack.c.bf16 %v975, %v973
      %v998 = vpack.c.bf16 %v978, %v976
      %v999 = vpack.c.bf16 %v979, %v977
      %v1000 = vpack.c.bf16 %v982, %v980
      %v1001 = vpack.c.bf16 %v983, %v981
      %v1002 = vpack.c.bf16 %v986, %v984
      %v1003 = vpack.c.bf16 %v987, %v985
      %s1004 = smul.addr %s730, 4
      %s1005 = scalar_lea.vmem [#allocation2], %s1004
      %v1006 = vld [vmem:[%s1005] sm:$0xf]
      %v1007 = vld [vmem:[%s1005 + $0x4] sm:$0xf]
      %v1008 = vld [vmem:[%s1005 + $0x8] sm:$0xf]
      %v1009 = vld [vmem:[%s1005 + $0xc] sm:$0xf]
      %v1010 = vld [vmem:[%s1005 + $0x10] sm:$0xf]
      %v1011 = vld [vmem:[%s1005 + $0x14] sm:$0xf]
      %v1012 = vld [vmem:[%s1005 + $0x18] sm:$0xf]
      %v1013 = vld [vmem:[%s1005 + $0x1c] sm:$0xf]
      %v1014 = vld [vmem:[%s1005 + $0x20] sm:$0xf]
      %v1015 = vld [vmem:[%s1005 + $0x24] sm:$0xf]
      %v1016 = vld [vmem:[%s1005 + $0x28] sm:$0xf]
      %v1017 = vld [vmem:[%s1005 + $0x2c] sm:$0xf]
      %v1018 = vld [vmem:[%s1005 + $0x30] sm:$0xf]
      %v1019 = vld [vmem:[%s1005 + $0x34] sm:$0xf]
      %v1020 = vld [vmem:[%s1005 + $0x38] sm:$0xf]
      %v1021 = vld [vmem:[%s1005 + $0x3c] sm:$0xf]
      %v1022 = vld [vmem:[%s1005 + $0x40] sm:$0xf]
      %v1023 = vld [vmem:[%s1005 + $0x44] sm:$0xf]
      %v1024 = vld [vmem:[%s1005 + $0x48] sm:$0xf]
      %v1025 = vld [vmem:[%s1005 + $0x4c] sm:$0xf]
      %v1026 = vld [vmem:[%s1005 + $0x50] sm:$0xf]
      %v1027 = vld [vmem:[%s1005 + $0x54] sm:$0xf]
      %v1028 = vld [vmem:[%s1005 + $0x58] sm:$0xf]
      %v1029 = vld [vmem:[%s1005 + $0x5c] sm:$0xf]
      %v1030 = vld [vmem:[%s1005 + $0x60] sm:$0xf]
      %v1031 = vld [vmem:[%s1005 + $0x64] sm:$0xf]
      %v1032 = vld [vmem:[%s1005 + $0x68] sm:$0xf]
      %v1033 = vld [vmem:[%s1005 + $0x6c] sm:$0xf]
      %v1034 = vld [vmem:[%s1005 + $0x70] sm:$0xf]
      %v1035 = vld [vmem:[%s1005 + $0x74] sm:$0xf]
      %v1036 = vld [vmem:[%s1005 + $0x78] sm:$0xf]
      %v1037 = vld [vmem:[%s1005 + $0x7c] sm:$0xf]
      %s1038 = scalar_lea.vmem %s10, %s248
      %v1039 = vld [vmem:[%s1038] sm:$0x1]
      %v1041 = vlaneseq
      %v1042 = vshrl.u32 %v1041, 7
      %v1043 = vsub.s32 0, %v1042
      %v1044 = vrot.slane %v1039, %v1043
      %v1078 = vunpack.c.l.b16 %v1006
      %v1079 = vunpack.c.l.b16 %v1007
      %v1080 = vunpack.c.l.b16 %v1008
      %v1081 = vunpack.c.l.b16 %v1009
      %v1082 = vunpack.c.l.b16 %v1010
      %v1083 = vunpack.c.l.b16 %v1011
      %v1084 = vunpack.c.l.b16 %v1012
      %v1085 = vunpack.c.l.b16 %v1013
      %v1086 = vunpack.c.l.b16 %v1014
      %v1087 = vunpack.c.l.b16 %v1015
      %v1088 = vunpack.c.l.b16 %v1016
      %v1089 = vunpack.c.l.b16 %v1017
      %v1090 = vunpack.c.l.b16 %v1018
      %v1091 = vunpack.c.l.b16 %v1019
      %v1092 = vunpack.c.l.b16 %v1020
      %v1093 = vunpack.c.l.b16 %v1021
      %v1094 = vunpack.c.l.b16 %v1022
      %v1095 = vunpack.c.l.b16 %v1023
      %v1096 = vunpack.c.l.b16 %v1024
      %v1097 = vunpack.c.l.b16 %v1025
      %v1098 = vunpack.c.l.b16 %v1026
      %v1099 = vunpack.c.l.b16 %v1027
      %v1100 = vunpack.c.l.b16 %v1028
      %v1101 = vunpack.c.l.b16 %v1029
      %v1102 = vunpack.c.l.b16 %v1030
      %v1103 = vunpack.c.l.b16 %v1031
      %v1104 = vunpack.c.l.b16 %v1032
      %v1105 = vunpack.c.l.b16 %v1033
      %v1106 = vunpack.c.l.b16 %v1034
      %v1107 = vunpack.c.l.b16 %v1035
      %v1108 = vunpack.c.l.b16 %v1036
      %v1109 = vunpack.c.l.b16 %v1037
      %v1110 = vpack.c.b16 %v1079, %v1078
      %v1111 = vpack.c.b16 %v1081, %v1080
      %v1112 = vpack.c.b16 %v1083, %v1082
      %v1113 = vpack.c.b16 %v1085, %v1084
      %v1114 = vpack.c.b16 %v1087, %v1086
      %v1115 = vpack.c.b16 %v1089, %v1088
      %v1116 = vpack.c.b16 %v1091, %v1090
      %v1117 = vpack.c.b16 %v1093, %v1092
      %v1118 = vpack.c.b16 %v1095, %v1094
      %v1119 = vpack.c.b16 %v1097, %v1096
      %v1120 = vpack.c.b16 %v1099, %v1098
      %v1121 = vpack.c.b16 %v1101, %v1100
      %v1122 = vpack.c.b16 %v1103, %v1102
      %v1123 = vpack.c.b16 %v1105, %v1104
      %v1124 = vpack.c.b16 %v1107, %v1106
      %v1125 = vpack.c.b16 %v1109, %v1108
      %1142 = vmatprep.subr.bf16.mxu0 0
      %1143 = vmatpush1.bf16.msra.mxu0 %v1110
      %1144 = vmatprep.subr.bf16.mxu0 0
      %1145 = vmatpush1.bf16.msra.mxu0 %v1111
      %1146 = vmatprep.subr.bf16.mxu0 0
      %1147 = vmatpush1.bf16.msra.mxu0 %v1112
      %1148 = vmatprep.subr.bf16.mxu0 0
      %1149 = vmatpush1.bf16.msra.mxu0 %v1113
      %1150 = vmatprep.subr.bf16.mxu0 0
      %1151 = vmatpush1.bf16.msra.mxu0 %v1114
      %1152 = vmatprep.subr.bf16.mxu0 0
      %1153 = vmatpush1.bf16.msra.mxu0 %v1115
      %1154 = vmatprep.subr.bf16.mxu0 0
      %1155 = vmatpush1.bf16.msra.mxu0 %v1116
      %1156 = vmatprep.subr.bf16.mxu0 0
      %1157 = vmatpush1.bf16.msra.mxu0 %v1117
      %1158 = vmatprep.subr.bf16.mxu0 0
      %1159 = vmatpush1.bf16.msra.mxu0 %v1118
      %1160 = vmatprep.subr.bf16.mxu0 0
      %1161 = vmatpush1.bf16.msra.mxu0 %v1119
      %1162 = vmatprep.subr.bf16.mxu0 0
      %1163 = vmatpush1.bf16.msra.mxu0 %v1120
      %1164 = vmatprep.subr.bf16.mxu0 0
      %1165 = vmatpush1.bf16.msra.mxu0 %v1121
      %1166 = vmatprep.subr.bf16.mxu0 0
      %1167 = vmatpush1.bf16.msra.mxu0 %v1122
      %1168 = vmatprep.subr.bf16.mxu0 0
      %1169 = vmatpush1.bf16.msra.mxu0 %v1123
      %1170 = vmatprep.subr.bf16.mxu0 0
      %1171 = vmatpush1.bf16.msra.mxu0 %v1124
      %1172 = vmatprep.subr.bf16.mxu0 0
      %1173 = vmatpush1.bf16.msra.mxu0 %v1125
      %1174 = vmatprep.mubr.bf16.mxu0 %v989
      %1175 = vmatmul.mubr.bf16.gmra.mrb[0].mxu0 %v988
      %v1176 = vpop.f32.mrb[0].mxu0
      %v1177 = vadd.f32 %v1044, %v1176
      %v1178 = vpop.f32.mrb[0].mxu0
      %v1179 = vpop.f32.mrb[0].mxu0
      %v1180 = vadd.f32 %v1044, %v1179
      %v1181 = vpop.f32.mrb[0].mxu0
      %1182 = vmatprep.mubr.bf16.mxu0 %v991
      %1183 = vmatmul.mubr.bf16.gmra.mrb[0].mxu0 %v990
      %v1184 = vpop.f32.mrb[0].mxu0
      %v1185 = vadd.f32 %v1044, %v1184
      %v1186 = vpop.f32.mrb[0].mxu0
      %v1187 = vpop.f32.mrb[0].mxu0
      %v1188 = vadd.f32 %v1044, %v1187
      %v1189 = vpop.f32.mrb[0].mxu0
      %1190 = vmatprep.mubr.bf16.mxu0 %v993
      %1191 = vmatmul.mubr.bf16.gmra.mrb[0].mxu0 %v992
      %v1192 = vpop.f32.mrb[0].mxu0
      %v1193 = vadd.f32 %v1044, %v1192
      %v1194 = vpop.f32.mrb[0].mxu0
      %v1195 = vpop.f32.mrb[0].mxu0
      %v1196 = vadd.f32 %v1044, %v1195
      %v1197 = vpop.f32.mrb[0].mxu0
      %1198 = vmatprep.mubr.bf16.mxu0 %v995
      %1199 = vmatmul.mubr.bf16.gmra.mrb[0].mxu0 %v994
      %v1200 = vpop.f32.mrb[0].mxu0
      %v1201 = vadd.f32 %v1044, %v1200
      %v1202 = vpop.f32.mrb[0].mxu0
      %v1203 = vpop.f32.mrb[0].mxu0
      %v1204 = vadd.f32 %v1044, %v1203
      %v1205 = vpop.f32.mrb[0].mxu0
      %1206 = vmatprep.mubr.bf16.mxu0 %v997
      %1207 = vmatmul.mubr.bf16.gmra.mrb[0].mxu0 %v996
      %v1208 = vpop.f32.mrb[0].mxu0
      %v1209 = vadd.f32 %v1044, %v1208
      %v1210 = vpop.f32.mrb[0].mxu0
      %v1211 = vpop.f32.mrb[0].mxu0
      %v1212 = vadd.f32 %v1044, %v1211
      %v1213 = vpop.f32.mrb[0].mxu0
      %1214 = vmatprep.mubr.bf16.mxu0 %v999
      %1215 = vmatmul.mubr.bf16.gmra.mrb[0].mxu0 %v998
      %v1216 = vpop.f32.mrb[0].mxu0
      %v1217 = vadd.f32 %v1044, %v1216
      %v1218 = vpop.f32.mrb[0].mxu0
      %v1219 = vpop.f32.mrb[0].mxu0
      %v1220 = vadd.f32 %v1044, %v1219
      %v1221 = vpop.f32.mrb[0].mxu0
      %1222 = vmatprep.mubr.bf16.mxu0 %v1001
      %1223 = vmatmul.mubr.bf16.gmra.mrb[0].mxu0 %v1000
      %v1224 = vpop.f32.mrb[0].mxu0
      %v1225 = vadd.f32 %v1044, %v1224
      %v1226 = vpop.f32.mrb[0].mxu0
      %v1227 = vpop.f32.mrb[0].mxu0
      %v1228 = vadd.f32 %v1044, %v1227
      %v1229 = vpop.f32.mrb[0].mxu0
      %1230 = vmatprep.mubr.bf16.mxu0 %v1003
      %1231 = vmatmul.mubr.bf16.gmra.mrb[0].mxu0 %v1002
      %v1232 = vpop.f32.mrb[0].mxu0
      %v1233 = vadd.f32 %v1044, %v1232
      %v1234 = vpop.f32.mrb[0].mxu0
      %v1235 = vpop.f32.mrb[0].mxu0
      %v1236 = vadd.f32 %v1044, %v1235
      %v1237 = vpop.f32.mrb[0].mxu0
      %1238 = vdwg.mxu0
      %v1239 = vadd.f32 %v706, %v1177
      %v1240 = vadd.f32 %v707, %v1180
      %v1241 = vadd.f32 %v708, %v1185
      %v1242 = vadd.f32 %v709, %v1188
      %v1243 = vadd.f32 %v710, %v1193
      %v1244 = vadd.f32 %v711, %v1196
      %v1245 = vadd.f32 %v712, %v1201
      %v1246 = vadd.f32 %v713, %v1204
      %v1247 = vadd.f32 %v714, %v1209
      %v1248 = vadd.f32 %v715, %v1212
      %v1249 = vadd.f32 %v716, %v1217
      %v1250 = vadd.f32 %v717, %v1220
      %v1251 = vadd.f32 %v718, %v1225
      %v1252 = vadd.f32 %v719, %v1228
      %v1253 = vadd.f32 %v720, %v1233
      %v1254 = vadd.f32 %v721, %v1236
      %s1255 = scalar_lea.vmem %s11, %s248
      %v1256 = vld [vmem:[%s1255] sm:$0x1]
      %s1257 = scalar_lea.vmem %s12, %s248
      %v1258 = vld [vmem:[%s1257] sm:$0x1]
      %1259 = vadd.xlane.f32.xlu0 %v1239
      %v1260 = vpop.xlane.xlu0 %1259
      %1261 = vadd.xlane.f32.xlu0 %v1240
      %v1262 = vpop.xlane.xlu0 %1261
      %1263 = vadd.xlane.f32.xlu0 %v1241
      %v1264 = vpop.xlane.xlu0 %1263
      %1265 = vadd.xlane.f32.xlu0 %v1242
      %v1266 = vpop.xlane.xlu0 %1265
      %1267 = vadd.xlane.f32.xlu0 %v1243
      %v1268 = vpop.xlane.xlu0 %1267
      %1269 = vadd.xlane.f32.xlu0 %v1244
      %v1270 = vpop.xlane.xlu0 %1269
      %1271 = vadd.xlane.f32.xlu0 %v1245
      %v1272 = vpop.xlane.xlu0 %1271
      %1273 = vadd.xlane.f32.xlu0 %v1246
      %v1274 = vpop.xlane.xlu0 %1273
      %1275 = vadd.xlane.f32.xlu0 %v1247
      %v1276 = vpop.xlane.xlu0 %1275
      %1277 = vadd.xlane.f32.xlu0 %v1248
      %v1278 = vpop.xlane.xlu0 %1277
      %1279 = vadd.xlane.f32.xlu0 %v1249
      %v1280 = vpop.xlane.xlu0 %1279
      %1281 = vadd.xlane.f32.xlu0 %v1250
      %v1282 = vpop.xlane.xlu0 %1281
      %1283 = vadd.xlane.f32.xlu0 %v1251
      %v1284 = vpop.xlane.xlu0 %1283
      %1285 = vadd.xlane.f32.xlu0 %v1252
      %v1286 = vpop.xlane.xlu0 %1285
      %1287 = vadd.xlane.f32.xlu0 %v1253
      %v1288 = vpop.xlane.xlu0 %1287
      %1289 = vadd.xlane.f32.xlu0 %v1254
      %v1290 = vpop.xlane.xlu0 %1289
      %v1291 = vmul.f32 %v1260, %v501
      %v1292 = vmul.f32 %v1262, %v501
      %v1293 = vmul.f32 %v1264, %v501
      %v1294 = vmul.f32 %v1266, %v501
      %v1295 = vmul.f32 %v1268, %v501
      %v1296 = vmul.f32 %v1270, %v501
      %v1297 = vmul.f32 %v1272, %v501
      %v1298 = vmul.f32 %v1274, %v501
      %v1299 = vmul.f32 %v1276, %v501
      %v1300 = vmul.f32 %v1278, %v501
      %v1301 = vmul.f32 %v1280, %v501
      %v1302 = vmul.f32 %v1282, %v501
      %v1303 = vmul.f32 %v1284, %v501
      %v1304 = vmul.f32 %v1286, %v501
      %v1305 = vmul.f32 %v1288, %v501
      %v1306 = vmul.f32 %v1290, %v501
      %v1307 = vmul.f32 %v1239, %v1239
      %v1308 = vmul.f32 %v1240, %v1240
      %v1309 = vmul.f32 %v1241, %v1241
      %v1310 = vmul.f32 %v1242, %v1242
      %v1311 = vmul.f32 %v1243, %v1243
      %v1312 = vmul.f32 %v1244, %v1244
      %v1313 = vmul.f32 %v1245, %v1245
      %v1314 = vmul.f32 %v1246, %v1246
      %v1315 = vmul.f32 %v1247, %v1247
      %v1316 = vmul.f32 %v1248, %v1248
      %v1317 = vmul.f32 %v1249, %v1249
      %v1318 = vmul.f32 %v1250, %v1250
      %v1319 = vmul.f32 %v1251, %v1251
      %v1320 = vmul.f32 %v1252, %v1252
      %v1321 = vmul.f32 %v1253, %v1253
      %v1322 = vmul.f32 %v1254, %v1254
      %1323 = vadd.xlane.f32.xlu0 %v1307
      %v1324 = vpop.xlane.xlu0 %1323
      %1325 = vadd.xlane.f32.xlu0 %v1308
      %v1326 = vpop.xlane.xlu0 %1325
      %1327 = vadd.xlane.f32.xlu0 %v1309
      %v1328 = vpop.xlane.xlu0 %1327
      %1329 = vadd.xlane.f32.xlu0 %v1310
      %v1330 = vpop.xlane.xlu0 %1329
      %1331 = vadd.xlane.f32.xlu0 %v1311
      %v1332 = vpop.xlane.xlu0 %1331
      %1333 = vadd.xlane.f32.xlu0 %v1312
      %v1334 = vpop.xlane.xlu0 %1333
      %1335 = vadd.xlane.f32.xlu0 %v1313
      %v1336 = vpop.xlane.xlu0 %1335
      %1337 = vadd.xlane.f32.xlu0 %v1314
      %v1338 = vpop.xlane.xlu0 %1337
      %1339 = vadd.xlane.f32.xlu0 %v1315
      %v1340 = vpop.xlane.xlu0 %1339
      %1341 = vadd.xlane.f32.xlu0 %v1316
      %v1342 = vpop.xlane.xlu0 %1341
      %1343 = vadd.xlane.f32.xlu0 %v1317
      %v1344 = vpop.xlane.xlu0 %1343
      %1345 = vadd.xlane.f32.xlu0 %v1318
      %v1346 = vpop.xlane.xlu0 %1345
      %1347 = vadd.xlane.f32.xlu0 %v1319
      %v1348 = vpop.xlane.xlu0 %1347
      %1349 = vadd.xlane.f32.xlu0 %v1320
      %v1350 = vpop.xlane.xlu0 %1349
      %1351 = vadd.xlane.f32.xlu0 %v1321
      %v1352 = vpop.xlane.xlu0 %1351
      %1353 = vadd.xlane.f32.xlu0 %v1322
      %v1354 = vpop.xlane.xlu0 %1353
      %v1355 = vmul.f32 %v1324, %v501
      %v1356 = vmul.f32 %v1326, %v501
      %v1357 = vmul.f32 %v1328, %v501
      %v1358 = vmul.f32 %v1330, %v501
      %v1359 = vmul.f32 %v1332, %v501
      %v1360 = vmul.f32 %v1334, %v501
      %v1361 = vmul.f32 %v1336, %v501
      %v1362 = vmul.f32 %v1338, %v501
      %v1363 = vmul.f32 %v1340, %v501
      %v1364 = vmul.f32 %v1342, %v501
      %v1365 = vmul.f32 %v1344, %v501
      %v1366 = vmul.f32 %v1346, %v501
      %v1367 = vmul.f32 %v1348, %v501
      %v1368 = vmul.f32 %v1350, %v501
      %v1369 = vmul.f32 %v1352, %v501
      %v1370 = vmul.f32 %v1354, %v501
      %v1371 = vmul.f32 %v1291, %v1291
      %v1372 = vmul.f32 %v1292, %v1292
      %v1373 = vmul.f32 %v1293, %v1293
      %v1374 = vmul.f32 %v1294, %v1294
      %v1375 = vmul.f32 %v1295, %v1295
      %v1376 = vmul.f32 %v1296, %v1296
      %v1377 = vmul.f32 %v1297, %v1297
      %v1378 = vmul.f32 %v1298, %v1298
      %v1379 = vmul.f32 %v1299, %v1299
      %v1380 = vmul.f32 %v1300, %v1300
      %v1381 = vmul.f32 %v1301, %v1301
      %v1382 = vmul.f32 %v1302, %v1302
      %v1383 = vmul.f32 %v1303, %v1303
      %v1384 = vmul.f32 %v1304, %v1304
      %v1385 = vmul.f32 %v1305, %v1305
      %v1386 = vmul.f32 %v1306, %v1306
      %v1387 = vsub.f32 %v1355, %v1371
      %v1388 = vsub.f32 %v1356, %v1372
      %v1389 = vsub.f32 %v1357, %v1373
      %v1390 = vsub.f32 %v1358, %v1374
      %v1391 = vsub.f32 %v1359, %v1375
      %v1392 = vsub.f32 %v1360, %v1376
      %v1393 = vsub.f32 %v1361, %v1377
      %v1394 = vsub.f32 %v1362, %v1378
      %v1395 = vsub.f32 %v1363, %v1379
      %v1396 = vsub.f32 %v1364, %v1380
      %v1397 = vsub.f32 %v1365, %v1381
      %v1398 = vsub.f32 %v1366, %v1382
      %v1399 = vsub.f32 %v1367, %v1383
      %v1400 = vsub.f32 %v1368, %v1384
      %v1401 = vsub.f32 %v1369, %v1385
      %v1402 = vsub.f32 %v1370, %v1386
      %v1403 = vsub.f32 %v1239, %v1291
      %v1404 = vsub.f32 %v1240, %v1292
      %v1405 = vsub.f32 %v1241, %v1293
      %v1406 = vsub.f32 %v1242, %v1294
      %v1407 = vsub.f32 %v1243, %v1295
      %v1408 = vsub.f32 %v1244, %v1296
      %v1409 = vsub.f32 %v1245, %v1297
      %v1410 = vsub.f32 %v1246, %v1298
      %v1411 = vsub.f32 %v1247, %v1299
      %v1412 = vsub.f32 %v1248, %v1300
      %v1413 = vsub.f32 %v1249, %v1301
      %v1414 = vsub.f32 %v1250, %v1302
      %v1415 = vsub.f32 %v1251, %v1303
      %v1416 = vsub.f32 %v1252, %v1304
      %v1417 = vsub.f32 %v1253, %v1305
      %v1418 = vsub.f32 %v1254, %v1306
      %v1419 = vadd.f32 %v1387, 1e-05
      %v1420 = vadd.f32 %v1388, 1e-05
      %v1421 = vadd.f32 %v1389, 1e-05
      %v1422 = vadd.f32 %v1390, 1e-05
      %v1423 = vadd.f32 %v1391, 1e-05
      %v1424 = vadd.f32 %v1392, 1e-05
      %v1425 = vadd.f32 %v1393, 1e-05
      %v1426 = vadd.f32 %v1394, 1e-05
      %v1427 = vadd.f32 %v1395, 1e-05
      %v1428 = vadd.f32 %v1396, 1e-05
      %v1429 = vadd.f32 %v1397, 1e-05
      %v1430 = vadd.f32 %v1398, 1e-05
      %v1431 = vadd.f32 %v1399, 1e-05
      %v1432 = vadd.f32 %v1400, 1e-05
      %v1433 = vadd.f32 %v1401, 1e-05
      %v1434 = vadd.f32 %v1402, 1e-05
      %v1435 = vrsqrt.pop %v1419
      %v1436 = vrsqrt.pop %v1420
      %v1437 = vrsqrt.pop %v1421
      %v1438 = vrsqrt.pop %v1422
      %v1439 = vrsqrt.pop %v1423
      %v1440 = vrsqrt.pop %v1424
      %v1441 = vrsqrt.pop %v1425
      %v1442 = vrsqrt.pop %v1426
      %v1443 = vrsqrt.pop %v1427
      %v1444 = vrsqrt.pop %v1428
      %v1445 = vrsqrt.pop %v1429
      %v1446 = vrsqrt.pop %v1430
      %v1447 = vrsqrt.pop %v1431
      %v1448 = vrsqrt.pop %v1432
      %v1449 = vrsqrt.pop %v1433
      %v1450 = vrsqrt.pop %v1434
      %v1451 = vmul.f32 %v1403, %v1435
      %v1452 = vmul.f32 %v1404, %v1436
      %v1453 = vmul.f32 %v1405, %v1437
      %v1454 = vmul.f32 %v1406, %v1438
      %v1455 = vmul.f32 %v1407, %v1439
      %v1456 = vmul.f32 %v1408, %v1440
      %v1457 = vmul.f32 %v1409, %v1441
      %v1458 = vmul.f32 %v1410, %v1442
      %v1459 = vmul.f32 %v1411, %v1443
      %v1460 = vmul.f32 %v1412, %v1444
      %v1461 = vmul.f32 %v1413, %v1445
      %v1462 = vmul.f32 %v1414, %v1446
      %v1463 = vmul.f32 %v1415, %v1447
      %v1464 = vmul.f32 %v1416, %v1448
      %v1465 = vmul.f32 %v1417, %v1449
      %v1466 = vmul.f32 %v1418, %v1450
      %v1468 = vlaneseq
      %v1469 = vshrl.u32 %v1468, 7
      %v1470 = vsub.s32 0, %v1469
      %v1471 = vrot.slane %v1256, %v1470
      %v1473 = vmul.f32 %v1451, %v1471
      %v1474 = vmul.f32 %v1452, %v1471
      %v1475 = vmul.f32 %v1453, %v1471
      %v1476 = vmul.f32 %v1454, %v1471
      %v1477 = vmul.f32 %v1455, %v1471
      %v1478 = vmul.f32 %v1456, %v1471
      %v1479 = vmul.f32 %v1457, %v1471
      %v1480 = vmul.f32 %v1458, %v1471
      %v1481 = vmul.f32 %v1459, %v1471
      %v1482 = vmul.f32 %v1460, %v1471
      %v1483 = vmul.f32 %v1461, %v1471
      %v1484 = vmul.f32 %v1462, %v1471
      %v1485 = vmul.f32 %v1463, %v1471
      %v1486 = vmul.f32 %v1464, %v1471
      %v1487 = vmul.f32 %v1465, %v1471
      %v1488 = vmul.f32 %v1466, %v1471
      %v1490 = vlaneseq
      %v1491 = vshrl.u32 %v1490, 7
      %v1492 = vsub.s32 0, %v1491
      %v1493 = vrot.slane %v1258, %v1492
      %v1495 = vadd.f32 %v1473, %v1493
      %v1496 = vadd.f32 %v1474, %v1493
      %v1497 = vadd.f32 %v1475, %v1493
      %v1498 = vadd.f32 %v1476, %v1493
      %v1499 = vadd.f32 %v1477, %v1493
      %v1500 = vadd.f32 %v1478, %v1493
      %v1501 = vadd.f32 %v1479, %v1493
      %v1502 = vadd.f32 %v1480, %v1493
      %v1503 = vadd.f32 %v1481, %v1493
      %v1504 = vadd.f32 %v1482, %v1493
      %v1505 = vadd.f32 %v1483, %v1493
      %v1506 = vadd.f32 %v1484, %v1493
      %v1507 = vadd.f32 %v1485, %v1493
      %v1508 = vadd.f32 %v1486, %v1493
      %v1509 = vadd.f32 %v1487, %v1493
      %v1510 = vadd.f32 %v1488, %v1493
    $region74: #{utransformer_forward.3} parent=1 // loop_footer
      %s252 = sadd.s32 1, %s248
    $region75: #{utransformer_forward.3} parent=1 // loop_footer_branch
      %247 = sbr.rel target = $region71
    $region76: #{utransformer_forward.3} parent=1 // loop_exit
      _
    %v1511 = vld [vmem:[%s13] sm:$0x1]
    %v1512 = vld [vmem:[%s14] sm:$0x1]
    %1513 = vadd.xlane.f32.xlu0 %v253
    %v1514 = vpop.xlane.xlu0 %1513
    %1515 = vadd.xlane.f32.xlu0 %v254
    %v1516 = vpop.xlane.xlu0 %1515
    %1517 = vadd.xlane.f32.xlu0 %v255
    %v1518 = vpop.xlane.xlu0 %1517
    %1519 = vadd.xlane.f32.xlu0 %v256
    %v1520 = vpop.xlane.xlu0 %1519
    %1521 = vadd.xlane.f32.xlu0 %v257
    %v1522 = vpop.xlane.xlu0 %1521
    %1523 = vadd.xlane.f32.xlu0 %v258
    %v1524 = vpop.xlane.xlu0 %1523
    %1525 = vadd.xlane.f32.xlu0 %v259
    %v1526 = vpop.xlane.xlu0 %1525
    %1527 = vadd.xlane.f32.xlu0 %v260
    %v1528 = vpop.xlane.xlu0 %1527
    %1529 = vadd.xlane.f32.xlu0 %v261
    %v1530 = vpop.xlane.xlu0 %1529
    %1531 = vadd.xlane.f32.xlu0 %v262
    %v1532 = vpop.xlane.xlu0 %1531
    %1533 = vadd.xlane.f32.xlu0 %v263
    %v1534 = vpop.xlane.xlu0 %1533
    %1535 = vadd.xlane.f32.xlu0 %v264
    %v1536 = vpop.xlane.xlu0 %1535
    %1537 = vadd.xlane.f32.xlu0 %v265
    %v1538 = vpop.xlane.xlu0 %1537
    %1539 = vadd.xlane.f32.xlu0 %v266
    %v1540 = vpop.xlane.xlu0 %1539
    %1541 = vadd.xlane.f32.xlu0 %v267
    %v1542 = vpop.xlane.xlu0 %1541
    %1543 = vadd.xlane.f32.xlu0 %v268
    %v1544 = vpop.xlane.xlu0 %1543
    %v1545 = vrcp.pop 128.0
    %v1546 = vmul.f32 %v1514, %v1545
    %v1547 = vmul.f32 %v1516, %v1545
    %v1548 = vmul.f32 %v1518, %v1545
    %v1549 = vmul.f32 %v1520, %v1545
    %v1550 = vmul.f32 %v1522, %v1545
    %v1551 = vmul.f32 %v1524, %v1545
    %v1552 = vmul.f32 %v1526, %v1545
    %v1553 = vmul.f32 %v1528, %v1545
    %v1554 = vmul.f32 %v1530, %v1545
    %v1555 = vmul.f32 %v1532, %v1545
    %v1556 = vmul.f32 %v1534, %v1545
    %v1557 = vmul.f32 %v1536, %v1545
    %v1558 = vmul.f32 %v1538, %v1545
    %v1559 = vmul.f32 %v1540, %v1545
    %v1560 = vmul.f32 %v1542, %v1545
    %v1561 = vmul.f32 %v1544, %v1545
    %v1562 = vmul.f32 %v253, %v253
    %v1563 = vmul.f32 %v254, %v254
    %v1564 = vmul.f32 %v255, %v255
    %v1565 = vmul.f32 %v256, %v256
    %v1566 = vmul.f32 %v257, %v257
    %v1567 = vmul.f32 %v258, %v258
    %v1568 = vmul.f32 %v259, %v259
    %v1569 = vmul.f32 %v260, %v260
    %v1570 = vmul.f32 %v261, %v261
    %v1571 = vmul.f32 %v262, %v262
    %v1572 = vmul.f32 %v263, %v263
    %v1573 = vmul.f32 %v264, %v264
    %v1574 = vmul.f32 %v265, %v265
    %v1575 = vmul.f32 %v266, %v266
    %v1576 = vmul.f32 %v267, %v267
    %v1577 = vmul.f32 %v268, %v268
    %1578 = vadd.xlane.f32.xlu0 %v1562
    %v1579 = vpop.xlane.xlu0 %1578
    %1580 = vadd.xlane.f32.xlu0 %v1563
    %v1581 = vpop.xlane.xlu0 %1580
    %1582 = vadd.xlane.f32.xlu0 %v1564
    %v1583 = vpop.xlane.xlu0 %1582
    %1584 = vadd.xlane.f32.xlu0 %v1565
    %v1585 = vpop.xlane.xlu0 %1584
    %1586 = vadd.xlane.f32.xlu0 %v1566
    %v1587 = vpop.xlane.xlu0 %1586
    %1588 = vadd.xlane.f32.xlu0 %v1567
    %v1589 = vpop.xlane.xlu0 %1588
    %1590 = vadd.xlane.f32.xlu0 %v1568
    %v1591 = vpop.xlane.xlu0 %1590
    %1592 = vadd.xlane.f32.xlu0 %v1569
    %v1593 = vpop.xlane.xlu0 %1592
    %1594 = vadd.xlane.f32.xlu0 %v1570
    %v1595 = vpop.xlane.xlu0 %1594
    %1596 = vadd.xlane.f32.xlu0 %v1571
    %v1597 = vpop.xlane.xlu0 %1596
    %1598 = vadd.xlane.f32.xlu0 %v1572
    %v1599 = vpop.xlane.xlu0 %1598
    %1600 = vadd.xlane.f32.xlu0 %v1573
    %v1601 = vpop.xlane.xlu0 %1600
    %1602 = vadd.xlane.f32.xlu0 %v1574
    %v1603 = vpop.xlane.xlu0 %1602
    %1604 = vadd.xlane.f32.xlu0 %v1575
    %v1605 = vpop.xlane.xlu0 %1604
    %1606 = vadd.xlane.f32.xlu0 %v1576
    %v1607 = vpop.xlane.xlu0 %1606
    %1608 = vadd.xlane.f32.xlu0 %v1577
    %v1609 = vpop.xlane.xlu0 %1608
    %v1610 = vmul.f32 %v1579, %v1545
    %v1611 = vmul.f32 %v1581, %v1545
    %v1612 = vmul.f32 %v1583, %v1545
    %v1613 = vmul.f32 %v1585, %v1545
    %v1614 = vmul.f32 %v1587, %v1545
    %v1615 = vmul.f32 %v1589, %v1545
    %v1616 = vmul.f32 %v1591, %v1545
    %v1617 = vmul.f32 %v1593, %v1545
    %v1618 = vmul.f32 %v1595, %v1545
    %v1619 = vmul.f32 %v1597, %v1545
    %v1620 = vmul.f32 %v1599, %v1545
    %v1621 = vmul.f32 %v1601, %v1545
    %v1622 = vmul.f32 %v1603, %v1545
    %v1623 = vmul.f32 %v1605, %v1545
    %v1624 = vmul.f32 %v1607, %v1545
    %v1625 = vmul.f32 %v1609, %v1545
    %v1626 = vmul.f32 %v1546, %v1546
    %v1627 = vmul.f32 %v1547, %v1547
    %v1628 = vmul.f32 %v1548, %v1548
    %v1629 = vmul.f32 %v1549, %v1549
    %v1630 = vmul.f32 %v1550, %v1550
    %v1631 = vmul.f32 %v1551, %v1551
    %v1632 = vmul.f32 %v1552, %v1552
    %v1633 = vmul.f32 %v1553, %v1553
    %v1634 = vmul.f32 %v1554, %v1554
    %v1635 = vmul.f32 %v1555, %v1555
    %v1636 = vmul.f32 %v1556, %v1556
    %v1637 = vmul.f32 %v1557, %v1557
    %v1638 = vmul.f32 %v1558, %v1558
    %v1639 = vmul.f32 %v1559, %v1559
    %v1640 = vmul.f32 %v1560, %v1560
    %v1641 = vmul.f32 %v1561, %v1561
    %v1642 = vsub.f32 %v1610, %v1626
    %v1643 = vsub.f32 %v1611, %v1627
    %v1644 = vsub.f32 %v1612, %v1628
    %v1645 = vsub.f32 %v1613, %v1629
    %v1646 = vsub.f32 %v1614, %v1630
    %v1647 = vsub.f32 %v1615, %v1631
    %v1648 = vsub.f32 %v1616, %v1632
    %v1649 = vsub.f32 %v1617, %v1633
    %v1650 = vsub.f32 %v1618, %v1634
    %v1651 = vsub.f32 %v1619, %v1635
    %v1652 = vsub.f32 %v1620, %v1636
    %v1653 = vsub.f32 %v1621, %v1637
    %v1654 = vsub.f32 %v1622, %v1638
    %v1655 = vsub.f32 %v1623, %v1639
    %v1656 = vsub.f32 %v1624, %v1640
    %v1657 = vsub.f32 %v1625, %v1641
    %v1658 = vsub.f32 %v253, %v1546
    %v1659 = vsub.f32 %v254, %v1547
    %v1660 = vsub.f32 %v255, %v1548
    %v1661 = vsub.f32 %v256, %v1549
    %v1662 = vsub.f32 %v257, %v1550
    %v1663 = vsub.f32 %v258, %v1551
    %v1664 = vsub.f32 %v259, %v1552
    %v1665 = vsub.f32 %v260, %v1553
    %v1666 = vsub.f32 %v261, %v1554
    %v1667 = vsub.f32 %v262, %v1555
    %v1668 = vsub.f32 %v263, %v1556
    %v1669 = vsub.f32 %v264, %v1557
    %v1670 = vsub.f32 %v265, %v1558
    %v1671 = vsub.f32 %v266, %v1559
    %v1672 = vsub.f32 %v267, %v1560
    %v1673 = vsub.f32 %v268, %v1561
    %v1674 = vadd.f32 %v1642, 1e-05
    %v1675 = vadd.f32 %v1643, 1e-05
    %v1676 = vadd.f32 %v1644, 1e-05
    %v1677 = vadd.f32 %v1645, 1e-05
    %v1678 = vadd.f32 %v1646, 1e-05
    %v1679 = vadd.f32 %v1647, 1e-05
    %v1680 = vadd.f32 %v1648, 1e-05
    %v1681 = vadd.f32 %v1649, 1e-05
    %v1682 = vadd.f32 %v1650, 1e-05
    %v1683 = vadd.f32 %v1651, 1e-05
    %v1684 = vadd.f32 %v1652, 1e-05
    %v1685 = vadd.f32 %v1653, 1e-05
    %v1686 = vadd.f32 %v1654, 1e-05
    %v1687 = vadd.f32 %v1655, 1e-05
    %v1688 = vadd.f32 %v1656, 1e-05
    %v1689 = vadd.f32 %v1657, 1e-05
    %v1690 = vrsqrt.pop %v1674
    %v1691 = vrsqrt.pop %v1675
    %v1692 = vrsqrt.pop %v1676
    %v1693 = vrsqrt.pop %v1677
    %v1694 = vrsqrt.pop %v1678
    %v1695 = vrsqrt.pop %v1679
    %v1696 = vrsqrt.pop %v1680
    %v1697 = vrsqrt.pop %v1681
    %v1698 = vrsqrt.pop %v1682
    %v1699 = vrsqrt.pop %v1683
    %v1700 = vrsqrt.pop %v1684
    %v1701 = vrsqrt.pop %v1685
    %v1702 = vrsqrt.pop %v1686
    %v1703 = vrsqrt.pop %v1687
    %v1704 = vrsqrt.pop %v1688
    %v1705 = vrsqrt.pop %v1689
    %v1706 = vmul.f32 %v1658, %v1690
    %v1707 = vmul.f32 %v1659, %v1691
    %v1708 = vmul.f32 %v1660, %v1692
    %v1709 = vmul.f32 %v1661, %v1693
    %v1710 = vmul.f32 %v1662, %v1694
    %v1711 = vmul.f32 %v1663, %v1695
    %v1712 = vmul.f32 %v1664, %v1696
    %v1713 = vmul.f32 %v1665, %v1697
    %v1714 = vmul.f32 %v1666, %v1698
    %v1715 = vmul.f32 %v1667, %v1699
    %v1716 = vmul.f32 %v1668, %v1700
    %v1717 = vmul.f32 %v1669, %v1701
    %v1718 = vmul.f32 %v1670, %v1702
    %v1719 = vmul.f32 %v1671, %v1703
    %v1720 = vmul.f32 %v1672, %v1704
    %v1721 = vmul.f32 %v1673, %v1705
    %v1723 = vlaneseq
    %v1724 = vshrl.u32 %v1723, 7
    %v1725 = vsub.s32 0, %v1724
    %v1726 = vrot.slane %v1511, %v1725
    %v1728 = vmul.f32 %v1706, %v1726
    %v1729 = vmul.f32 %v1707, %v1726
    %v1730 = vmul.f32 %v1708, %v1726
    %v1731 = vmul.f32 %v1709, %v1726
    %v1732 = vmul.f32 %v1710, %v1726
    %v1733 = vmul.f32 %v1711, %v1726
    %v1734 = vmul.f32 %v1712, %v1726
    %v1735 = vmul.f32 %v1713, %v1726
    %v1736 = vmul.f32 %v1714, %v1726
    %v1737 = vmul.f32 %v1715, %v1726
    %v1738 = vmul.f32 %v1716, %v1726
    %v1739 = vmul.f32 %v1717, %v1726
    %v1740 = vmul.f32 %v1718, %v1726
    %v1741 = vmul.f32 %v1719, %v1726
    %v1742 = vmul.f32 %v1720, %v1726
    %v1743 = vmul.f32 %v1721, %v1726
    %v1745 = vlaneseq
    %v1746 = vshrl.u32 %v1745, 7
    %v1747 = vsub.s32 0, %v1746
    %v1748 = vrot.slane %v1512, %v1747
    %v1750 = vadd.f32 %v1728, %v1748
    %v1751 = vadd.f32 %v1729, %v1748
    %v1752 = vadd.f32 %v1730, %v1748
    %v1753 = vadd.f32 %v1731, %v1748
    %v1754 = vadd.f32 %v1732, %v1748
    %v1755 = vadd.f32 %v1733, %v1748
    %v1756 = vadd.f32 %v1734, %v1748
    %v1757 = vadd.f32 %v1735, %v1748
    %v1758 = vadd.f32 %v1736, %v1748
    %v1759 = vadd.f32 %v1737, %v1748
    %v1760 = vadd.f32 %v1738, %v1748
    %v1761 = vadd.f32 %v1739, %v1748
    %v1762 = vadd.f32 %v1740, %v1748
    %v1763 = vadd.f32 %v1741, %v1748
    %v1764 = vadd.f32 %v1742, %v1748
    %v1765 = vadd.f32 %v1743, %v1748
    %v1766 = vld [vmem:[%s2] sm:$0xff]
    %v1767 = vld [vmem:[%s2 + $0x8] sm:$0xff]
    %v1768 = vld [vmem:[%s2 + $0x10] sm:$0xff]
    %v1769 = vld [vmem:[%s2 + $0x18] sm:$0xff]
    %v1770 = vld [vmem:[%s2 + $0x20] sm:$0xff]
    %v1771 = vld [vmem:[%s2 + $0x28] sm:$0xff]
    %v1772 = vld [vmem:[%s2 + $0x30] sm:$0xff]
    %v1773 = vld [vmem:[%s2 + $0x38] sm:$0xff]
    %v1774 = vld [vmem:[%s2 + $0x40] sm:$0xff]
    %v1775 = vld [vmem:[%s2 + $0x48] sm:$0xff]
    %v1776 = vld [vmem:[%s2 + $0x50] sm:$0xff]
    %v1777 = vld [vmem:[%s2 + $0x58] sm:$0xff]
    %v1778 = vld [vmem:[%s2 + $0x60] sm:$0xff]
    %v1779 = vld [vmem:[%s2 + $0x68] sm:$0xff]
    %v1780 = vld [vmem:[%s2 + $0x70] sm:$0xff]
    %v1781 = vld [vmem:[%s2 + $0x78] sm:$0xff]
    %vm1782 = vcmp.gt.f32.partialorder %v1766, 0.0
    %vm1783 = vcmp.gt.f32.partialorder %v1767, 0.0
    %vm1784 = vcmp.gt.f32.partialorder %v1768, 0.0
    %vm1785 = vcmp.gt.f32.partialorder %v1769, 0.0
    %vm1786 = vcmp.gt.f32.partialorder %v1770, 0.0
    %vm1787 = vcmp.gt.f32.partialorder %v1771, 0.0
    %vm1788 = vcmp.gt.f32.partialorder %v1772, 0.0
    %vm1789 = vcmp.gt.f32.partialorder %v1773, 0.0
    %vm1790 = vcmp.gt.f32.partialorder %v1774, 0.0
    %vm1791 = vcmp.gt.f32.partialorder %v1775, 0.0
    %vm1792 = vcmp.gt.f32.partialorder %v1776, 0.0
    %vm1793 = vcmp.gt.f32.partialorder %v1777, 0.0
    %vm1794 = vcmp.gt.f32.partialorder %v1778, 0.0
    %vm1795 = vcmp.gt.f32.partialorder %v1779, 0.0
    %vm1796 = vcmp.gt.f32.partialorder %v1780, 0.0
    %vm1797 = vcmp.gt.f32.partialorder %v1781, 0.0
    %v1798 = vsel %vm1782, 1, 0
    %v1799 = vsel %vm1783, 1, 0
    %v1800 = vsel %vm1784, 1, 0
    %v1801 = vsel %vm1785, 1, 0
    %v1802 = vsel %vm1786, 1, 0
    %v1803 = vsel %vm1787, 1, 0
    %v1804 = vsel %vm1788, 1, 0
    %v1805 = vsel %vm1789, 1, 0
    %v1806 = vsel %vm1790, 1, 0
    %v1807 = vsel %vm1791, 1, 0
    %v1808 = vsel %vm1792, 1, 0
    %v1809 = vsel %vm1793, 1, 0
    %v1810 = vsel %vm1794, 1, 0
    %v1811 = vsel %vm1795, 1, 0
    %v1812 = vsel %vm1796, 1, 0
    %v1813 = vsel %vm1797, 1, 0
    %1814 = vset.pattern.permute.xlu0 0
    %1815 = vperm.xlu0 %1814, %v1798
    %v1816 = vpop.permute.xlu0 %1815
    %1817 = vset.pattern.permute.xlu0 0
    %1818 = vperm.xlu0 %1817, %v1799
    %v1819 = vpop.permute.xlu0 %1818
    %1820 = vset.pattern.permute.xlu0 0
    %1821 = vperm.xlu0 %1820, %v1800
    %v1822 = vpop.permute.xlu0 %1821
    %1823 = vset.pattern.permute.xlu0 0
    %1824 = vperm.xlu0 %1823, %v1801
    %v1825 = vpop.permute.xlu0 %1824
    %1826 = vset.pattern.permute.xlu0 0
    %1827 = vperm.xlu0 %1826, %v1802
    %v1828 = vpop.permute.xlu0 %1827
    %1829 = vset.pattern.permute.xlu0 0
    %1830 = vperm.xlu0 %1829, %v1803
    %v1831 = vpop.permute.xlu0 %1830
    %1832 = vset.pattern.permute.xlu0 0
    %1833 = vperm.xlu0 %1832, %v1804
    %v1834 = vpop.permute.xlu0 %1833
    %1835 = vset.pattern.permute.xlu0 0
    %1836 = vperm.xlu0 %1835, %v1805
    %v1837 = vpop.permute.xlu0 %1836
    %1838 = vset.pattern.permute.xlu0 0
    %1839 = vperm.xlu0 %1838, %v1806
    %v1840 = vpop.permute.xlu0 %1839
    %1841 = vset.pattern.permute.xlu0 0
    %1842 = vperm.xlu0 %1841, %v1807
    %v1843 = vpop.permute.xlu0 %1842
    %1844 = vset.pattern.permute.xlu0 0
    %1845 = vperm.xlu0 %1844, %v1808
    %v1846 = vpop.permute.xlu0 %1845
    %1847 = vset.pattern.permute.xlu0 0
    %1848 = vperm.xlu0 %1847, %v1809
    %v1849 = vpop.permute.xlu0 %1848
    %1850 = vset.pattern.permute.xlu0 0
    %1851 = vperm.xlu0 %1850, %v1810
    %v1852 = vpop.permute.xlu0 %1851
    %1853 = vset.pattern.permute.xlu0 0
    %1854 = vperm.xlu0 %1853, %v1811
    %v1855 = vpop.permute.xlu0 %1854
    %1856 = vset.pattern.permute.xlu0 0
    %1857 = vperm.xlu0 %1856, %v1812
    %v1858 = vpop.permute.xlu0 %1857
    %1859 = vset.pattern.permute.xlu0 0
    %1860 = vperm.xlu0 %1859, %v1813
    %v1861 = vpop.permute.xlu0 %1860
    %vm1862 = vcmp.eq.s32.totalorder %v1816, 1
    %vm1863 = vcmp.eq.s32.totalorder %v1819, 1
    %vm1864 = vcmp.eq.s32.totalorder %v1822, 1
    %vm1865 = vcmp.eq.s32.totalorder %v1825, 1
    %vm1866 = vcmp.eq.s32.totalorder %v1828, 1
    %vm1867 = vcmp.eq.s32.totalorder %v1831, 1
    %vm1868 = vcmp.eq.s32.totalorder %v1834, 1
    %vm1869 = vcmp.eq.s32.totalorder %v1837, 1
    %vm1870 = vcmp.eq.s32.totalorder %v1840, 1
    %vm1871 = vcmp.eq.s32.totalorder %v1843, 1
    %vm1872 = vcmp.eq.s32.totalorder %v1846, 1
    %vm1873 = vcmp.eq.s32.totalorder %v1849, 1
    %vm1874 = vcmp.eq.s32.totalorder %v1852, 1
    %vm1875 = vcmp.eq.s32.totalorder %v1855, 1
    %vm1876 = vcmp.eq.s32.totalorder %v1858, 1
    %vm1877 = vcmp.eq.s32.totalorder %v1861, 1
    %v1878 = vsel %vm1862, %v1750, 0.0
    %v1879 = vsel %vm1863, %v1751, 0.0
    %v1880 = vsel %vm1864, %v1752, 0.0
    %v1881 = vsel %vm1865, %v1753, 0.0
    %v1882 = vsel %vm1866, %v1754, 0.0
    %v1883 = vsel %vm1867, %v1755, 0.0
    %v1884 = vsel %vm1868, %v1756, 0.0
    %v1885 = vsel %vm1869, %v1757, 0.0
    %v1886 = vsel %vm1870, %v1758, 0.0
    %v1887 = vsel %vm1871, %v1759, 0.0
    %v1888 = vsel %vm1872, %v1760, 0.0
    %v1889 = vsel %vm1873, %v1761, 0.0
    %v1890 = vsel %vm1874, %v1762, 0.0
    %v1891 = vsel %vm1875, %v1763, 0.0
    %v1892 = vsel %vm1876, %v1764, 0.0
    %v1893 = vsel %vm1877, %v1765, 0.0
    loop: start=2, step=1, limit=4
    $region77: #{utransformer_forward.3} parent=1 // loop_pre_header
      _
    $region78: #{utransformer_forward.3} parent=1 // loop_header
      %s1895 = sphi 2, %s1899
      %p1896 = scmp.ge.s32.totalorder %s1895, 4
      %v1900 = vphi %v1878, %v3141
      %v1901 = vphi %v1879, %v3142
      %v1902 = vphi %v1880, %v3143
      %v1903 = vphi %v1881, %v3144
      %v1904 = vphi %v1882, %v3145
      %v1905 = vphi %v1883, %v3146
      %v1906 = vphi %v1884, %v3147
      %v1907 = vphi %v1885, %v3148
      %v1908 = vphi %v1886, %v3149
      %v1909 = vphi %v1887, %v3150
      %v1910 = vphi %v1888, %v3151
      %v1911 = vphi %v1889, %v3152
      %v1912 = vphi %v1890, %v3153
      %v1913 = vphi %v1891, %v3154
      %v1914 = vphi %v1892, %v3155
      %v1915 = vphi %v1893, %v3156
    $region79: #{utransformer_forward.3} parent=1 // loop_header_branch
      %1898 = sbr.rel (%p1896) target = $region83
    $region80: #{utransformer_forward.3} parent=1 // loop_body
      %v1916 = vpack.c.bf16 %v1901, %v1900
      %v1917 = vpack.c.bf16 %v1903, %v1902
      %v1918 = vpack.c.bf16 %v1905, %v1904
      %v1919 = vpack.c.bf16 %v1907, %v1906
      %v1920 = vpack.c.bf16 %v1909, %v1908
      %v1921 = vpack.c.bf16 %v1911, %v1910
      %v1922 = vpack.c.bf16 %v1913, %v1912
      %v1923 = vpack.c.bf16 %v1915, %v1914
      %s1924 = smul.u32 %s1895, 16
      %s1925 = smul.addr %s1924, 4
      %s1926 = scalar_lea.vmem %s3, %s1925
      %v1927 = vld [vmem:[%s1926] sm:$0xf]
      %v1928 = vld [vmem:[%s1926 + $0x4] sm:$0xf]
      %v1929 = vld [vmem:[%s1926 + $0x8] sm:$0xf]
      %v1930 = vld [vmem:[%s1926 + $0xc] sm:$0xf]
      %v1931 = vld [vmem:[%s1926 + $0x10] sm:$0xf]
      %v1932 = vld [vmem:[%s1926 + $0x14] sm:$0xf]
      %v1933 = vld [vmem:[%s1926 + $0x18] sm:$0xf]
      %v1934 = vld [vmem:[%s1926 + $0x1c] sm:$0xf]
      %v1935 = vld [vmem:[%s1926 + $0x20] sm:$0xf]
      %v1936 = vld [vmem:[%s1926 + $0x24] sm:$0xf]
      %v1937 = vld [vmem:[%s1926 + $0x28] sm:$0xf]
      %v1938 = vld [vmem:[%s1926 + $0x2c] sm:$0xf]
      %v1939 = vld [vmem:[%s1926 + $0x30] sm:$0xf]
      %v1940 = vld [vmem:[%s1926 + $0x34] sm:$0xf]
      %v1941 = vld [vmem:[%s1926 + $0x38] sm:$0xf]
      %v1942 = vld [vmem:[%s1926 + $0x3c] sm:$0xf]
      %s1943 = scalar_lea.vmem %s4, %s1895
      %v1944 = vld [vmem:[%s1943] sm:$0x1]
      %v1946 = vlaneseq
      %v1947 = vshrl.u32 %v1946, 7
      %v1948 = vsub.s32 0, %v1947
      %v1949 = vrot.slane %v1944, %v1948
      %v1967 = vunpack.c.l.b16 %v1927
      %v1968 = vunpack.c.l.b16 %v1928
      %v1969 = vunpack.c.l.b16 %v1929
      %v1970 = vunpack.c.l.b16 %v1930
      %v1971 = vunpack.c.l.b16 %v1931
      %v1972 = vunpack.c.l.b16 %v1932
      %v1973 = vunpack.c.l.b16 %v1933
      %v1974 = vunpack.c.l.b16 %v1934
      %v1975 = vunpack.c.l.b16 %v1935
      %v1976 = vunpack.c.l.b16 %v1936
      %v1977 = vunpack.c.l.b16 %v1937
      %v1978 = vunpack.c.l.b16 %v1938
      %v1979 = vunpack.c.l.b16 %v1939
      %v1980 = vunpack.c.l.b16 %v1940
      %v1981 = vunpack.c.l.b16 %v1941
      %v1982 = vunpack.c.l.b16 %v1942
      %v1983 = vpack.c.b16 %v1968, %v1967
      %v1984 = vpack.c.b16 %v1970, %v1969
      %v1985 = vpack.c.b16 %v1972, %v1971
      %v1986 = vpack.c.b16 %v1974, %v1973
      %v1987 = vpack.c.b16 %v1976, %v1975
      %v1988 = vpack.c.b16 %v1978, %v1977
      %v1989 = vpack.c.b16 %v1980, %v1979
      %v1990 = vpack.c.b16 %v1982, %v1981
      %1999 = vmatprep.subr.bf16.mxu0 0
      %2000 = vmatpush1.bf16.msra.mxu0 %v1983
      %2001 = vmatprep.subr.bf16.mxu0 0
      %2002 = vmatpush1.bf16.msra.mxu0 %v1984
      %2003 = vmatprep.subr.bf16.mxu0 0
      %2004 = vmatpush1.bf16.msra.mxu0 %v1985
      %2005 = vmatprep.subr.bf16.mxu0 0
      %2006 = vmatpush1.bf16.msra.mxu0 %v1986
      %2007 = vmatprep.subr.bf16.mxu0 0
      %2008 = vmatpush1.bf16.msra.mxu0 %v1987
      %2009 = vmatprep.subr.bf16.mxu0 0
      %2010 = vmatpush1.bf16.msra.mxu0 %v1988
      %2011 = vmatprep.subr.bf16.mxu0 0
      %2012 = vmatpush1.bf16.msra.mxu0 %v1989
      %2013 = vmatprep.subr.bf16.mxu0 0
      %2014 = vmatpush1.bf16.msra.mxu0 %v1990
      %2015 = vmatprep.subr.bf16.mxu0 0
      %2016 = vmatpush1.bf16.msra.mxu0 0
      %2017 = vmatprep.subr.bf16.mxu0 0
      %2018 = vmatpush1.bf16.msra.mxu0 0
      %2019 = vmatprep.subr.bf16.mxu0 0
      %2020 = vmatpush1.bf16.msra.mxu0 0
      %2021 = vmatprep.subr.bf16.mxu0 0
      %2022 = vmatpush1.bf16.msra.mxu0 0
      %2023 = vmatprep.subr.bf16.mxu0 0
      %2024 = vmatpush1.bf16.msra.mxu0 0
      %2025 = vmatprep.subr.bf16.mxu0 0
      %2026 = vmatpush1.bf16.msra.mxu0 0
      %2027 = vmatprep.subr.bf16.mxu0 0
      %2028 = vmatpush1.bf16.msra.mxu0 0
      %2029 = vmatprep.subr.bf16.mxu0 0
      %2030 = vmatpush1.bf16.msra.mxu0 0
      %2031 = vmatprep.mubr.bf16.mxu0 0
      %2032 = vmatmul.mubr.bf16.gmra.mrb[0].mxu0 %v1916
      %v2033 = vpop.f32.mrb[0].mxu0
      %v2034 = vadd.f32 %v1949, %v2033
      %v2035 = vpop.f32.mrb[0].mxu0
      %v2036 = vpop.f32.mrb[0].mxu0
      %v2037 = vadd.f32 %v1949, %v2036
      %v2038 = vpop.f32.mrb[0].mxu0
      %2039 = vmatprep.mubr.bf16.mxu0 0
      %2040 = vmatmul.mubr.bf16.gmra.mrb[0].mxu0 %v1917
      %v2041 = vpop.f32.mrb[0].mxu0
      %v2042 = vadd.f32 %v1949, %v2041
      %v2043 = vpop.f32.mrb[0].mxu0
      %v2044 = vpop.f32.mrb[0].mxu0
      %v2045 = vadd.f32 %v1949, %v2044
      %v2046 = vpop.f32.mrb[0].mxu0
      %2047 = vmatprep.mubr.bf16.mxu0 0
      %2048 = vmatmul.mubr.bf16.gmra.mrb[0].mxu0 %v1918
      %v2049 = vpop.f32.mrb[0].mxu0
      %v2050 = vadd.f32 %v1949, %v2049
      %v2051 = vpop.f32.mrb[0].mxu0
      %v2052 = vpop.f32.mrb[0].mxu0
      %v2053 = vadd.f32 %v1949, %v2052
      %v2054 = vpop.f32.mrb[0].mxu0
      %2055 = vmatprep.mubr.bf16.mxu0 0
      %2056 = vmatmul.mubr.bf16.gmra.mrb[0].mxu0 %v1919
      %v2057 = vpop.f32.mrb[0].mxu0
      %v2058 = vadd.f32 %v1949, %v2057
      %v2059 = vpop.f32.mrb[0].mxu0
      %v2060 = vpop.f32.mrb[0].mxu0
      %v2061 = vadd.f32 %v1949, %v2060
      %v2062 = vpop.f32.mrb[0].mxu0
      %2063 = vmatprep.mubr.bf16.mxu0 0
      %2064 = vmatmul.mubr.bf16.gmra.mrb[0].mxu0 %v1920
      %v2065 = vpop.f32.mrb[0].mxu0
      %v2066 = vadd.f32 %v1949, %v2065
      %v2067 = vpop.f32.mrb[0].mxu0
      %v2068 = vpop.f32.mrb[0].mxu0
      %v2069 = vadd.f32 %v1949, %v2068
      %v2070 = vpop.f32.mrb[0].mxu0
      %2071 = vmatprep.mubr.bf16.mxu0 0
      %2072 = vmatmul.mubr.bf16.gmra.mrb[0].mxu0 %v1921
      %v2073 = vpop.f32.mrb[0].mxu0
      %v2074 = vadd.f32 %v1949, %v2073
      %v2075 = vpop.f32.mrb[0].mxu0
      %v2076 = vpop.f32.mrb[0].mxu0
      %v2077 = vadd.f32 %v1949, %v2076
      %v2078 = vpop.f32.mrb[0].mxu0
      %2079 = vmatprep.mubr.bf16.mxu0 0
      %2080 = vmatmul.mubr.bf16.gmra.mrb[0].mxu0 %v1922
      %v2081 = vpop.f32.mrb[0].mxu0
      %v2082 = vadd.f32 %v1949, %v2081
      %v2083 = vpop.f32.mrb[0].mxu0
      %v2084 = vpop.f32.mrb[0].mxu0
      %v2085 = vadd.f32 %v1949, %v2084
      %v2086 = vpop.f32.mrb[0].mxu0
      %2087 = vmatprep.mubr.bf16.mxu0 0
      %2088 = vmatmul.mubr.bf16.gmra.mrb[0].mxu0 %v1923
      %v2089 = vpop.f32.mrb[0].mxu0
      %v2090 = vadd.f32 %v1949, %v2089
      %v2091 = vpop.f32.mrb[0].mxu0
      %v2092 = vpop.f32.mrb[0].mxu0
      %v2093 = vadd.f32 %v1949, %v2092
      %v2094 = vpop.f32.mrb[0].mxu0
      %2095 = vdwg.mxu0
      %v2096 = vadd.f32 %v1900, %v2034
      %v2097 = vadd.f32 %v1901, %v2037
      %v2098 = vadd.f32 %v1902, %v2042
      %v2099 = vadd.f32 %v1903, %v2045
      %v2100 = vadd.f32 %v1904, %v2050
      %v2101 = vadd.f32 %v1905, %v2053
      %v2102 = vadd.f32 %v1906, %v2058
      %v2103 = vadd.f32 %v1907, %v2061
      %v2104 = vadd.f32 %v1908, %v2066
      %v2105 = vadd.f32 %v1909, %v2069
      %v2106 = vadd.f32 %v1910, %v2074
      %v2107 = vadd.f32 %v1911, %v2077
      %v2108 = vadd.f32 %v1912, %v2082
      %v2109 = vadd.f32 %v1913, %v2085
      %v2110 = vadd.f32 %v1914, %v2090
      %v2111 = vadd.f32 %v1915, %v2093
      %s2112 = scalar_lea.vmem %s5, %s1895
      %v2113 = vld [vmem:[%s2112] sm:$0x1]
      %s2114 = scalar_lea.vmem %s6, %s1895
      %v2115 = vld [vmem:[%s2114] sm:$0x1]
      %2116 = vadd.xlane.f32.xlu0 %v2096
      %v2117 = vpop.xlane.xlu0 %2116
      %2118 = vadd.xlane.f32.xlu0 %v2097
      %v2119 = vpop.xlane.xlu0 %2118
      %2120 = vadd.xlane.f32.xlu0 %v2098
      %v2121 = vpop.xlane.xlu0 %2120
      %2122 = vadd.xlane.f32.xlu0 %v2099
      %v2123 = vpop.xlane.xlu0 %2122
      %2124 = vadd.xlane.f32.xlu0 %v2100
      %v2125 = vpop.xlane.xlu0 %2124
      %2126 = vadd.xlane.f32.xlu0 %v2101
      %v2127 = vpop.xlane.xlu0 %2126
      %2128 = vadd.xlane.f32.xlu0 %v2102
      %v2129 = vpop.xlane.xlu0 %2128
      %2130 = vadd.xlane.f32.xlu0 %v2103
      %v2131 = vpop.xlane.xlu0 %2130
      %2132 = vadd.xlane.f32.xlu0 %v2104
      %v2133 = vpop.xlane.xlu0 %2132
      %2134 = vadd.xlane.f32.xlu0 %v2105
      %v2135 = vpop.xlane.xlu0 %2134
      %2136 = vadd.xlane.f32.xlu0 %v2106
      %v2137 = vpop.xlane.xlu0 %2136
      %2138 = vadd.xlane.f32.xlu0 %v2107
      %v2139 = vpop.xlane.xlu0 %2138
      %2140 = vadd.xlane.f32.xlu0 %v2108
      %v2141 = vpop.xlane.xlu0 %2140
      %2142 = vadd.xlane.f32.xlu0 %v2109
      %v2143 = vpop.xlane.xlu0 %2142
      %2144 = vadd.xlane.f32.xlu0 %v2110
      %v2145 = vpop.xlane.xlu0 %2144
      %2146 = vadd.xlane.f32.xlu0 %v2111
      %v2147 = vpop.xlane.xlu0 %2146
      %v2148 = vmul.f32 %v2117, %v1545
      %v2149 = vmul.f32 %v2119, %v1545
      %v2150 = vmul.f32 %v2121, %v1545
      %v2151 = vmul.f32 %v2123, %v1545
      %v2152 = vmul.f32 %v2125, %v1545
      %v2153 = vmul.f32 %v2127, %v1545
      %v2154 = vmul.f32 %v2129, %v1545
      %v2155 = vmul.f32 %v2131, %v1545
      %v2156 = vmul.f32 %v2133, %v1545
      %v2157 = vmul.f32 %v2135, %v1545
      %v2158 = vmul.f32 %v2137, %v1545
      %v2159 = vmul.f32 %v2139, %v1545
      %v2160 = vmul.f32 %v2141, %v1545
      %v2161 = vmul.f32 %v2143, %v1545
      %v2162 = vmul.f32 %v2145, %v1545
      %v2163 = vmul.f32 %v2147, %v1545
      %v2164 = vmul.f32 %v2096, %v2096
      %v2165 = vmul.f32 %v2097, %v2097
      %v2166 = vmul.f32 %v2098, %v2098
      %v2167 = vmul.f32 %v2099, %v2099
      %v2168 = vmul.f32 %v2100, %v2100
      %v2169 = vmul.f32 %v2101, %v2101
      %v2170 = vmul.f32 %v2102, %v2102
      %v2171 = vmul.f32 %v2103, %v2103
      %v2172 = vmul.f32 %v2104, %v2104
      %v2173 = vmul.f32 %v2105, %v2105
      %v2174 = vmul.f32 %v2106, %v2106
      %v2175 = vmul.f32 %v2107, %v2107
      %v2176 = vmul.f32 %v2108, %v2108
      %v2177 = vmul.f32 %v2109, %v2109
      %v2178 = vmul.f32 %v2110, %v2110
      %v2179 = vmul.f32 %v2111, %v2111
      %2180 = vadd.xlane.f32.xlu0 %v2164
      %v2181 = vpop.xlane.xlu0 %2180
      %2182 = vadd.xlane.f32.xlu0 %v2165
      %v2183 = vpop.xlane.xlu0 %2182
      %2184 = vadd.xlane.f32.xlu0 %v2166
      %v2185 = vpop.xlane.xlu0 %2184
      %2186 = vadd.xlane.f32.xlu0 %v2167
      %v2187 = vpop.xlane.xlu0 %2186
      %2188 = vadd.xlane.f32.xlu0 %v2168
      %v2189 = vpop.xlane.xlu0 %2188
      %2190 = vadd.xlane.f32.xlu0 %v2169
      %v2191 = vpop.xlane.xlu0 %2190
      %2192 = vadd.xlane.f32.xlu0 %v2170
      %v2193 = vpop.xlane.xlu0 %2192
      %2194 = vadd.xlane.f32.xlu0 %v2171
      %v2195 = vpop.xlane.xlu0 %2194
      %2196 = vadd.xlane.f32.xlu0 %v2172
      %v2197 = vpop.xlane.xlu0 %2196
      %2198 = vadd.xlane.f32.xlu0 %v2173
      %v2199 = vpop.xlane.xlu0 %2198
      %2200 = vadd.xlane.f32.xlu0 %v2174
      %v2201 = vpop.xlane.xlu0 %2200
      %2202 = vadd.xlane.f32.xlu0 %v2175
      %v2203 = vpop.xlane.xlu0 %2202
      %2204 = vadd.xlane.f32.xlu0 %v2176
      %v2205 = vpop.xlane.xlu0 %2204
      %2206 = vadd.xlane.f32.xlu0 %v2177
      %v2207 = vpop.xlane.xlu0 %2206
      %2208 = vadd.xlane.f32.xlu0 %v2178
      %v2209 = vpop.xlane.xlu0 %2208
      %2210 = vadd.xlane.f32.xlu0 %v2179
      %v2211 = vpop.xlane.xlu0 %2210
      %v2212 = vmul.f32 %v2181, %v1545
      %v2213 = vmul.f32 %v2183, %v1545
      %v2214 = vmul.f32 %v2185, %v1545
      %v2215 = vmul.f32 %v2187, %v1545
      %v2216 = vmul.f32 %v2189, %v1545
      %v2217 = vmul.f32 %v2191, %v1545
      %v2218 = vmul.f32 %v2193, %v1545
      %v2219 = vmul.f32 %v2195, %v1545
      %v2220 = vmul.f32 %v2197, %v1545
      %v2221 = vmul.f32 %v2199, %v1545
      %v2222 = vmul.f32 %v2201, %v1545
      %v2223 = vmul.f32 %v2203, %v1545
      %v2224 = vmul.f32 %v2205, %v1545
      %v2225 = vmul.f32 %v2207, %v1545
      %v2226 = vmul.f32 %v2209, %v1545
      %v2227 = vmul.f32 %v2211, %v1545
      %v2228 = vmul.f32 %v2148, %v2148
      %v2229 = vmul.f32 %v2149, %v2149
      %v2230 = vmul.f32 %v2150, %v2150
      %v2231 = vmul.f32 %v2151, %v2151
      %v2232 = vmul.f32 %v2152, %v2152
      %v2233 = vmul.f32 %v2153, %v2153
      %v2234 = vmul.f32 %v2154, %v2154
      %v2235 = vmul.f32 %v2155, %v2155
      %v2236 = vmul.f32 %v2156, %v2156
      %v2237 = vmul.f32 %v2157, %v2157
      %v2238 = vmul.f32 %v2158, %v2158
      %v2239 = vmul.f32 %v2159, %v2159
      %v2240 = vmul.f32 %v2160, %v2160
      %v2241 = vmul.f32 %v2161, %v2161
      %v2242 = vmul.f32 %v2162, %v2162
      %v2243 = vmul.f32 %v2163, %v2163
      %v2244 = vsub.f32 %v2212, %v2228
      %v2245 = vsub.f32 %v2213, %v2229
      %v2246 = vsub.f32 %v2214, %v2230
      %v2247 = vsub.f32 %v2215, %v2231
      %v2248 = vsub.f32 %v2216, %v2232
      %v2249 = vsub.f32 %v2217, %v2233
      %v2250 = vsub.f32 %v2218, %v2234
      %v2251 = vsub.f32 %v2219, %v2235
      %v2252 = vsub.f32 %v2220, %v2236
      %v2253 = vsub.f32 %v2221, %v2237
      %v2254 = vsub.f32 %v2222, %v2238
      %v2255 = vsub.f32 %v2223, %v2239
      %v2256 = vsub.f32 %v2224, %v2240
      %v2257 = vsub.f32 %v2225, %v2241
      %v2258 = vsub.f32 %v2226, %v2242
      %v2259 = vsub.f32 %v2227, %v2243
      %v2260 = vsub.f32 %v2096, %v2148
      %v2261 = vsub.f32 %v2097, %v2149
      %v2262 = vsub.f32 %v2098, %v2150
      %v2263 = vsub.f32 %v2099, %v2151
      %v2264 = vsub.f32 %v2100, %v2152
      %v2265 = vsub.f32 %v2101, %v2153
      %v2266 = vsub.f32 %v2102, %v2154
      %v2267 = vsub.f32 %v2103, %v2155
      %v2268 = vsub.f32 %v2104, %v2156
      %v2269 = vsub.f32 %v2105, %v2157
      %v2270 = vsub.f32 %v2106, %v2158
      %v2271 = vsub.f32 %v2107, %v2159
      %v2272 = vsub.f32 %v2108, %v2160
      %v2273 = vsub.f32 %v2109, %v2161
      %v2274 = vsub.f32 %v2110, %v2162
      %v2275 = vsub.f32 %v2111, %v2163
      %v2276 = vadd.f32 %v2244, 1e-05
      %v2277 = vadd.f32 %v2245, 1e-05
      %v2278 = vadd.f32 %v2246, 1e-05
      %v2279 = vadd.f32 %v2247, 1e-05
      %v2280 = vadd.f32 %v2248, 1e-05
      %v2281 = vadd.f32 %v2249, 1e-05
      %v2282 = vadd.f32 %v2250, 1e-05
      %v2283 = vadd.f32 %v2251, 1e-05
      %v2284 = vadd.f32 %v2252, 1e-05
      %v2285 = vadd.f32 %v2253, 1e-05
      %v2286 = vadd.f32 %v2254, 1e-05
      %v2287 = vadd.f32 %v2255, 1e-05
      %v2288 = vadd.f32 %v2256, 1e-05
      %v2289 = vadd.f32 %v2257, 1e-05
      %v2290 = vadd.f32 %v2258, 1e-05
      %v2291 = vadd.f32 %v2259, 1e-05
      %v2292 = vrsqrt.pop %v2276
      %v2293 = vrsqrt.pop %v2277
      %v2294 = vrsqrt.pop %v2278
      %v2295 = vrsqrt.pop %v2279
      %v2296 = vrsqrt.pop %v2280
      %v2297 = vrsqrt.pop %v2281
      %v2298 = vrsqrt.pop %v2282
      %v2299 = vrsqrt.pop %v2283
      %v2300 = vrsqrt.pop %v2284
      %v2301 = vrsqrt.pop %v2285
      %v2302 = vrsqrt.pop %v2286
      %v2303 = vrsqrt.pop %v2287
      %v2304 = vrsqrt.pop %v2288
      %v2305 = vrsqrt.pop %v2289
      %v2306 = vrsqrt.pop %v2290
      %v2307 = vrsqrt.pop %v2291
      %v2308 = vmul.f32 %v2260, %v2292
      %v2309 = vmul.f32 %v2261, %v2293
      %v2310 = vmul.f32 %v2262, %v2294
      %v2311 = vmul.f32 %v2263, %v2295
      %v2312 = vmul.f32 %v2264, %v2296
      %v2313 = vmul.f32 %v2265, %v2297
      %v2314 = vmul.f32 %v2266, %v2298
      %v2315 = vmul.f32 %v2267, %v2299
      %v2316 = vmul.f32 %v2268, %v2300
      %v2317 = vmul.f32 %v2269, %v2301
      %v2318 = vmul.f32 %v2270, %v2302
      %v2319 = vmul.f32 %v2271, %v2303
      %v2320 = vmul.f32 %v2272, %v2304
      %v2321 = vmul.f32 %v2273, %v2305
      %v2322 = vmul.f32 %v2274, %v2306
      %v2323 = vmul.f32 %v2275, %v2307
      %v2325 = vlaneseq
      %v2326 = vshrl.u32 %v2325, 7
      %v2327 = vsub.s32 0, %v2326
      %v2328 = vrot.slane %v2113, %v2327
      %v2330 = vmul.f32 %v2308, %v2328
      %v2331 = vmul.f32 %v2309, %v2328
      %v2332 = vmul.f32 %v2310, %v2328
      %v2333 = vmul.f32 %v2311, %v2328
      %v2334 = vmul.f32 %v2312, %v2328
      %v2335 = vmul.f32 %v2313, %v2328
      %v2336 = vmul.f32 %v2314, %v2328
      %v2337 = vmul.f32 %v2315, %v2328
      %v2338 = vmul.f32 %v2316, %v2328
      %v2339 = vmul.f32 %v2317, %v2328
      %v2340 = vmul.f32 %v2318, %v2328
      %v2341 = vmul.f32 %v2319, %v2328
      %v2342 = vmul.f32 %v2320, %v2328
      %v2343 = vmul.f32 %v2321, %v2328
      %v2344 = vmul.f32 %v2322, %v2328
      %v2345 = vmul.f32 %v2323, %v2328
      %v2347 = vlaneseq
      %v2348 = vshrl.u32 %v2347, 7
      %v2349 = vsub.s32 0, %v2348
      %v2350 = vrot.slane %v2115, %v2349
      %v2352 = vadd.f32 %v2330, %v2350
      %v2353 = vadd.f32 %v2331, %v2350
      %v2354 = vadd.f32 %v2332, %v2350
      %v2355 = vadd.f32 %v2333, %v2350
      %v2356 = vadd.f32 %v2334, %v2350
      %v2357 = vadd.f32 %v2335, %v2350
      %v2358 = vadd.f32 %v2336, %v2350
      %v2359 = vadd.f32 %v2337, %v2350
      %v2360 = vadd.f32 %v2338, %v2350
      %v2361 = vadd.f32 %v2339, %v2350
      %v2362 = vadd.f32 %v2340, %v2350
      %v2363 = vadd.f32 %v2341, %v2350
      %v2364 = vadd.f32 %v2342, %v2350
      %v2365 = vadd.f32 %v2343, %v2350
      %v2366 = vadd.f32 %v2344, %v2350
      %v2367 = vadd.f32 %v2345, %v2350
      %v2368 = vpack.c.bf16 %v2353, %v2352
      %v2369 = vpack.c.bf16 %v2355, %v2354
      %v2370 = vpack.c.bf16 %v2357, %v2356
      %v2371 = vpack.c.bf16 %v2359, %v2358
      %v2372 = vpack.c.bf16 %v2361, %v2360
      %v2373 = vpack.c.bf16 %v2363, %v2362
      %v2374 = vpack.c.bf16 %v2365, %v2364
      %v2375 = vpack.c.bf16 %v2367, %v2366
      %s2376 = smul.u32 %s1895, 32
      %s2377 = smul.addr %s2376, 4
      %s2378 = scalar_lea.vmem %s7, %s2377
      %v2379 = vld [vmem:[%s2378] sm:$0xff]
      %v2380 = vld [vmem:[%s2378 + $0x8] sm:$0xff]
      %v2381 = vld [vmem:[%s2378 + $0x10] sm:$0xff]
      %v2382 = vld [vmem:[%s2378 + $0x18] sm:$0xff]
      %v2383 = vld [vmem:[%s2378 + $0x20] sm:$0xff]
      %v2384 = vld [vmem:[%s2378 + $0x28] sm:$0xff]
      %v2385 = vld [vmem:[%s2378 + $0x30] sm:$0xff]
      %v2386 = vld [vmem:[%s2378 + $0x38] sm:$0xff]
      %v2387 = vld [vmem:[%s2378 + $0x40] sm:$0xff]
      %v2388 = vld [vmem:[%s2378 + $0x48] sm:$0xff]
      %v2389 = vld [vmem:[%s2378 + $0x50] sm:$0xff]
      %v2390 = vld [vmem:[%s2378 + $0x58] sm:$0xff]
      %v2391 = vld [vmem:[%s2378 + $0x60] sm:$0xff]
      %v2392 = vld [vmem:[%s2378 + $0x68] sm:$0xff]
      %v2393 = vld [vmem:[%s2378 + $0x70] sm:$0xff]
      %v2394 = vld [vmem:[%s2378 + $0x78] sm:$0xff]
      %s2395 = smul.u32 %s1895, 2
      %s2396 = scalar_lea.vmem %s8, %s2395
      %v2397 = vld [vmem:[%s2396] sm:$0x3]
      %v2399 = vlaneseq
      %v2400 = vshrl.u32 %v2399, 7
      %v2401 = vsub.s32 0, %v2400
      %v2402 = vrot.slane %v2397, %v2401
      %v2403 = vlaneseq
      %v2404 = vshrl.u32 %v2403, 7
      %v2405 = vsub.s32 1, %v2404
      %v2406 = vrot.slane %v2397, %v2405
      %v2425 = vunpack.c.l.b16 %v2379
      %v2426 = vunpack.c.h.b16 %v2379
      %v2427 = vunpack.c.l.b16 %v2380
      %v2428 = vunpack.c.h.b16 %v2380
      %v2429 = vunpack.c.l.b16 %v2381
      %v2430 = vunpack.c.h.b16 %v2381
      %v2431 = vunpack.c.l.b16 %v2382
      %v2432 = vunpack.c.h.b16 %v2382
      %v2433 = vunpack.c.l.b16 %v2383
      %v2434 = vunpack.c.h.b16 %v2383
      %v2435 = vunpack.c.l.b16 %v2384
      %v2436 = vunpack.c.h.b16 %v2384
      %v2437 = vunpack.c.l.b16 %v2385
      %v2438 = vunpack.c.h.b16 %v2385
      %v2439 = vunpack.c.l.b16 %v2386
      %v2440 = vunpack.c.h.b16 %v2386
      %v2441 = vunpack.c.l.b16 %v2387
      %v2442 = vunpack.c.h.b16 %v2387
      %v2443 = vunpack.c.l.b16 %v2388
      %v2444 = vunpack.c.h.b16 %v2388
      %v2445 = vunpack.c.l.b16 %v2389
      %v2446 = vunpack.c.h.b16 %v2389
      %v2447 = vunpack.c.l.b16 %v2390
      %v2448 = vunpack.c.h.b16 %v2390
      %v2449 = vunpack.c.l.b16 %v2391
      %v2450 = vunpack.c.h.b16 %v2391
      %v2451 = vunpack.c.l.b16 %v2392
      %v2452 = vunpack.c.h.b16 %v2392
      %v2453 = vunpack.c.l.b16 %v2393
      %v2454 = vunpack.c.h.b16 %v2393
      %v2455 = vunpack.c.l.b16 %v2394
      %v2456 = vunpack.c.h.b16 %v2394
      %v2457 = vpack.c.b16 %v2427, %v2425
      %v2458 = vpack.c.b16 %v2428, %v2426
      %v2459 = vpack.c.b16 %v2431, %v2429
      %v2460 = vpack.c.b16 %v2432, %v2430
      %v2461 = vpack.c.b16 %v2435, %v2433
      %v2462 = vpack.c.b16 %v2436, %v2434
      %v2463 = vpack.c.b16 %v2439, %v2437
      %v2464 = vpack.c.b16 %v2440, %v2438
      %v2465 = vpack.c.b16 %v2443, %v2441
      %v2466 = vpack.c.b16 %v2444, %v2442
      %v2467 = vpack.c.b16 %v2447, %v2445
      %v2468 = vpack.c.b16 %v2448, %v2446
      %v2469 = vpack.c.b16 %v2451, %v2449
      %v2470 = vpack.c.b16 %v2452, %v2450
      %v2471 = vpack.c.b16 %v2455, %v2453
      %v2472 = vpack.c.b16 %v2456, %v2454
      %2489 = vmatprep.subr.bf16.mxu0 %v2458
      %2490 = vmatpush1.bf16.msra.mxu0 %v2457
      %2491 = vmatprep.subr.bf16.mxu0 %v2460
      %2492 = vmatpush1.bf16.msra.mxu0 %v2459
      %2493 = vmatprep.subr.bf16.mxu0 %v2462
      %2494 = vmatpush1.bf16.msra.mxu0 %v2461
      %2495 = vmatprep.subr.bf16.mxu0 %v2464
      %2496 = vmatpush1.bf16.msra.mxu0 %v2463
      %2497 = vmatprep.subr.bf16.mxu0 %v2466
      %2498 = vmatpush1.bf16.msra.mxu0 %v2465
      %2499 = vmatprep.subr.bf16.mxu0 %v2468
      %2500 = vmatpush1.bf16.msra.mxu0 %v2467
      %2501 = vmatprep.subr.bf16.mxu0 %v2470
      %2502 = vmatpush1.bf16.msra.mxu0 %v2469
      %2503 = vmatprep.subr.bf16.mxu0 %v2472
      %2504 = vmatpush1.bf16.msra.mxu0 %v2471
      %2505 = vmatprep.subr.bf16.mxu0 0
      %2506 = vmatpush1.bf16.msra.mxu0 0
      %2507 = vmatprep.subr.bf16.mxu0 0
      %2508 = vmatpush1.bf16.msra.mxu0 0
      %2509 = vmatprep.subr.bf16.mxu0 0
      %2510 = vmatpush1.bf16.msra.mxu0 0
      %2511 = vmatprep.subr.bf16.mxu0 0
      %2512 = vmatpush1.bf16.msra.mxu0 0
      %2513 = vmatprep.subr.bf16.mxu0 0
      %2514 = vmatpush1.bf16.msra.mxu0 0
      %2515 = vmatprep.subr.bf16.mxu0 0
      %2516 = vmatpush1.bf16.msra.mxu0 0
      %2517 = vmatprep.subr.bf16.mxu0 0
      %2518 = vmatpush1.bf16.msra.mxu0 0
      %2519 = vmatprep.subr.bf16.mxu0 0
      %2520 = vmatpush1.bf16.msra.mxu0 0
      %2521 = vmatprep.mubr.bf16.mxu0 0
      %2522 = vmatmul.mubr.bf16.gmra.mrb[0].mxu0 %v2368
      %v2523 = vpop.f32.mrb[0].mxu0
      %v2524 = vadd.f32 %v2402, %v2523
      %v2525 = vpop.f32.mrb[0].mxu0
      %v2526 = vadd.f32 %v2406, %v2525
      %v2527 = vpop.f32.mrb[0].mxu0
      %v2528 = vadd.f32 %v2402, %v2527
      %v2529 = vpop.f32.mrb[0].mxu0
      %v2530 = vadd.f32 %v2406, %v2529
      %2531 = vmatprep.mubr.bf16.mxu0 0
      %2532 = vmatmul.mubr.bf16.gmra.mrb[0].mxu0 %v2369
      %v2533 = vpop.f32.mrb[0].mxu0
      %v2534 = vadd.f32 %v2402, %v2533
      %v2535 = vpop.f32.mrb[0].mxu0
      %v2536 = vadd.f32 %v2406, %v2535
      %v2537 = vpop.f32.mrb[0].mxu0
      %v2538 = vadd.f32 %v2402, %v2537
      %v2539 = vpop.f32.mrb[0].mxu0
      %v2540 = vadd.f32 %v2406, %v2539
      %2541 = vmatprep.mubr.bf16.mxu0 0
      %2542 = vmatmul.mubr.bf16.gmra.mrb[0].mxu0 %v2370
      %v2543 = vpop.f32.mrb[0].mxu0
      %v2544 = vadd.f32 %v2402, %v2543
      %v2545 = vpop.f32.mrb[0].mxu0
      %v2546 = vadd.f32 %v2406, %v2545
      %v2547 = vpop.f32.mrb[0].mxu0
      %v2548 = vadd.f32 %v2402, %v2547
      %v2549 = vpop.f32.mrb[0].mxu0
      %v2550 = vadd.f32 %v2406, %v2549
      %2551 = vmatprep.mubr.bf16.mxu0 0
      %2552 = vmatmul.mubr.bf16.gmra.mrb[0].mxu0 %v2371
      %v2553 = vpop.f32.mrb[0].mxu0
      %v2554 = vadd.f32 %v2402, %v2553
      %v2555 = vpop.f32.mrb[0].mxu0
      %v2556 = vadd.f32 %v2406, %v2555
      %v2557 = vpop.f32.mrb[0].mxu0
      %v2558 = vadd.f32 %v2402, %v2557
      %v2559 = vpop.f32.mrb[0].mxu0
      %v2560 = vadd.f32 %v2406, %v2559
      %2561 = vmatprep.mubr.bf16.mxu0 0
      %2562 = vmatmul.mubr.bf16.gmra.mrb[0].mxu0 %v2372
      %v2563 = vpop.f32.mrb[0].mxu0
      %v2564 = vadd.f32 %v2402, %v2563
      %v2565 = vpop.f32.mrb[0].mxu0
      %v2566 = vadd.f32 %v2406, %v2565
      %v2567 = vpop.f32.mrb[0].mxu0
      %v2568 = vadd.f32 %v2402, %v2567
      %v2569 = vpop.f32.mrb[0].mxu0
      %v2570 = vadd.f32 %v2406, %v2569
      %2571 = vmatprep.mubr.bf16.mxu0 0
      %2572 = vmatmul.mubr.bf16.gmra.mrb[0].mxu0 %v2373
      %v2573 = vpop.f32.mrb[0].mxu0
      %v2574 = vadd.f32 %v2402, %v2573
      %v2575 = vpop.f32.mrb[0].mxu0
      %v2576 = vadd.f32 %v2406, %v2575
      %v2577 = vpop.f32.mrb[0].mxu0
      %v2578 = vadd.f32 %v2402, %v2577
      %v2579 = vpop.f32.mrb[0].mxu0
      %v2580 = vadd.f32 %v2406, %v2579
      %2581 = vmatprep.mubr.bf16.mxu0 0
      %2582 = vmatmul.mubr.bf16.gmra.mrb[0].mxu0 %v2374
      %v2583 = vpop.f32.mrb[0].mxu0
      %v2584 = vadd.f32 %v2402, %v2583
      %v2585 = vpop.f32.mrb[0].mxu0
      %v2586 = vadd.f32 %v2406, %v2585
      %v2587 = vpop.f32.mrb[0].mxu0
      %v2588 = vadd.f32 %v2402, %v2587
      %v2589 = vpop.f32.mrb[0].mxu0
      %v2590 = vadd.f32 %v2406, %v2589
      %2591 = vmatprep.mubr.bf16.mxu0 0
      %2592 = vmatmul.mubr.bf16.gmra.mrb[0].mxu0 %v2375
      %v2593 = vpop.f32.mrb[0].mxu0
      %v2594 = vadd.f32 %v2402, %v2593
      %v2595 = vpop.f32.mrb[0].mxu0
      %v2596 = vadd.f32 %v2406, %v2595
      %v2597 = vpop.f32.mrb[0].mxu0
      %v2598 = vadd.f32 %v2402, %v2597
      %v2599 = vpop.f32.mrb[0].mxu0
      %v2600 = vadd.f32 %v2406, %v2599
      %2601 = vdwg.mxu0
      %v2602 = vmax.f32 %v2524, 0.0
      %v2603 = vmax.f32 %v2526, 0.0
      %v2604 = vmax.f32 %v2528, 0.0
      %v2605 = vmax.f32 %v2530, 0.0
      %v2606 = vmax.f32 %v2534, 0.0
      %v2607 = vmax.f32 %v2536, 0.0
      %v2608 = vmax.f32 %v2538, 0.0
      %v2609 = vmax.f32 %v2540, 0.0
      %v2610 = vmax.f32 %v2544, 0.0
      %v2611 = vmax.f32 %v2546, 0.0
      %v2612 = vmax.f32 %v2548, 0.0
      %v2613 = vmax.f32 %v2550, 0.0
      %v2614 = vmax.f32 %v2554, 0.0
      %v2615 = vmax.f32 %v2556, 0.0
      %v2616 = vmax.f32 %v2558, 0.0
      %v2617 = vmax.f32 %v2560, 0.0
      %v2618 = vmax.f32 %v2564, 0.0
      %v2619 = vmax.f32 %v2566, 0.0
      %v2620 = vmax.f32 %v2568, 0.0
      %v2621 = vmax.f32 %v2570, 0.0
      %v2622 = vmax.f32 %v2574, 0.0
      %v2623 = vmax.f32 %v2576, 0.0
      %v2624 = vmax.f32 %v2578, 0.0
      %v2625 = vmax.f32 %v2580, 0.0
      %v2626 = vmax.f32 %v2584, 0.0
      %v2627 = vmax.f32 %v2586, 0.0
      %v2628 = vmax.f32 %v2588, 0.0
      %v2629 = vmax.f32 %v2590, 0.0
      %v2630 = vmax.f32 %v2594, 0.0
      %v2631 = vmax.f32 %v2596, 0.0
      %v2632 = vmax.f32 %v2598, 0.0
      %v2633 = vmax.f32 %v2600, 0.0
      %v2634 = vpack.c.bf16 %v2604, %v2602
      %v2635 = vpack.c.bf16 %v2605, %v2603
      %v2636 = vpack.c.bf16 %v2608, %v2606
      %v2637 = vpack.c.bf16 %v2609, %v2607
      %v2638 = vpack.c.bf16 %v2612, %v2610
      %v2639 = vpack.c.bf16 %v2613, %v2611
      %v2640 = vpack.c.bf16 %v2616, %v2614
      %v2641 = vpack.c.bf16 %v2617, %v2615
      %v2642 = vpack.c.bf16 %v2620, %v2618
      %v2643 = vpack.c.bf16 %v2621, %v2619
      %v2644 = vpack.c.bf16 %v2624, %v2622
      %v2645 = vpack.c.bf16 %v2625, %v2623
      %v2646 = vpack.c.bf16 %v2628, %v2626
      %v2647 = vpack.c.bf16 %v2629, %v2627
      %v2648 = vpack.c.bf16 %v2632, %v2630
      %v2649 = vpack.c.bf16 %v2633, %v2631
      %s2650 = smul.addr %s2376, 4
      %s2651 = scalar_lea.vmem [#allocation2], %s2650
      %v2652 = vld [vmem:[%s2651] sm:$0xf]
      %v2653 = vld [vmem:[%s2651 + $0x4] sm:$0xf]
      %v2654 = vld [vmem:[%s2651 + $0x8] sm:$0xf]
      %v2655 = vld [vmem:[%s2651 + $0xc] sm:$0xf]
      %v2656 = vld [vmem:[%s2651 + $0x10] sm:$0xf]
      %v2657 = vld [vmem:[%s2651 + $0x14] sm:$0xf]
      %v2658 = vld [vmem:[%s2651 + $0x18] sm:$0xf]
      %v2659 = vld [vmem:[%s2651 + $0x1c] sm:$0xf]
      %v2660 = vld [vmem:[%s2651 + $0x20] sm:$0xf]
      %v2661 = vld [vmem:[%s2651 + $0x24] sm:$0xf]
      %v2662 = vld [vmem:[%s2651 + $0x28] sm:$0xf]
      %v2663 = vld [vmem:[%s2651 + $0x2c] sm:$0xf]
      %v2664 = vld [vmem:[%s2651 + $0x30] sm:$0xf]
      %v2665 = vld [vmem:[%s2651 + $0x34] sm:$0xf]
      %v2666 = vld [vmem:[%s2651 + $0x38] sm:$0xf]
      %v2667 = vld [vmem:[%s2651 + $0x3c] sm:$0xf]
      %v2668 = vld [vmem:[%s2651 + $0x40] sm:$0xf]
      %v2669 = vld [vmem:[%s2651 + $0x44] sm:$0xf]
      %v2670 = vld [vmem:[%s2651 + $0x48] sm:$0xf]
      %v2671 = vld [vmem:[%s2651 + $0x4c] sm:$0xf]
      %v2672 = vld [vmem:[%s2651 + $0x50] sm:$0xf]
      %v2673 = vld [vmem:[%s2651 + $0x54] sm:$0xf]
      %v2674 = vld [vmem:[%s2651 + $0x58] sm:$0xf]
      %v2675 = vld [vmem:[%s2651 + $0x5c] sm:$0xf]
      %v2676 = vld [vmem:[%s2651 + $0x60] sm:$0xf]
      %v2677 = vld [vmem:[%s2651 + $0x64] sm:$0xf]
      %v2678 = vld [vmem:[%s2651 + $0x68] sm:$0xf]
      %v2679 = vld [vmem:[%s2651 + $0x6c] sm:$0xf]
      %v2680 = vld [vmem:[%s2651 + $0x70] sm:$0xf]
      %v2681 = vld [vmem:[%s2651 + $0x74] sm:$0xf]
      %v2682 = vld [vmem:[%s2651 + $0x78] sm:$0xf]
      %v2683 = vld [vmem:[%s2651 + $0x7c] sm:$0xf]
      %s2684 = scalar_lea.vmem %s10, %s1895
      %v2685 = vld [vmem:[%s2684] sm:$0x1]
      %v2687 = vlaneseq
      %v2688 = vshrl.u32 %v2687, 7
      %v2689 = vsub.s32 0, %v2688
      %v2690 = vrot.slane %v2685, %v2689
      %v2724 = vunpack.c.l.b16 %v2652
      %v2725 = vunpack.c.l.b16 %v2653
      %v2726 = vunpack.c.l.b16 %v2654
      %v2727 = vunpack.c.l.b16 %v2655
      %v2728 = vunpack.c.l.b16 %v2656
      %v2729 = vunpack.c.l.b16 %v2657
      %v2730 = vunpack.c.l.b16 %v2658
      %v2731 = vunpack.c.l.b16 %v2659
      %v2732 = vunpack.c.l.b16 %v2660
      %v2733 = vunpack.c.l.b16 %v2661
      %v2734 = vunpack.c.l.b16 %v2662
      %v2735 = vunpack.c.l.b16 %v2663
      %v2736 = vunpack.c.l.b16 %v2664
      %v2737 = vunpack.c.l.b16 %v2665
      %v2738 = vunpack.c.l.b16 %v2666
      %v2739 = vunpack.c.l.b16 %v2667
      %v2740 = vunpack.c.l.b16 %v2668
      %v2741 = vunpack.c.l.b16 %v2669
      %v2742 = vunpack.c.l.b16 %v2670
      %v2743 = vunpack.c.l.b16 %v2671
      %v2744 = vunpack.c.l.b16 %v2672
      %v2745 = vunpack.c.l.b16 %v2673
      %v2746 = vunpack.c.l.b16 %v2674
      %v2747 = vunpack.c.l.b16 %v2675
      %v2748 = vunpack.c.l.b16 %v2676
      %v2749 = vunpack.c.l.b16 %v2677
      %v2750 = vunpack.c.l.b16 %v2678
      %v2751 = vunpack.c.l.b16 %v2679
      %v2752 = vunpack.c.l.b16 %v2680
      %v2753 = vunpack.c.l.b16 %v2681
      %v2754 = vunpack.c.l.b16 %v2682
      %v2755 = vunpack.c.l.b16 %v2683
      %v2756 = vpack.c.b16 %v2725, %v2724
      %v2757 = vpack.c.b16 %v2727, %v2726
      %v2758 = vpack.c.b16 %v2729, %v2728
      %v2759 = vpack.c.b16 %v2731, %v2730
      %v2760 = vpack.c.b16 %v2733, %v2732
      %v2761 = vpack.c.b16 %v2735, %v2734
      %v2762 = vpack.c.b16 %v2737, %v2736
      %v2763 = vpack.c.b16 %v2739, %v2738
      %v2764 = vpack.c.b16 %v2741, %v2740
      %v2765 = vpack.c.b16 %v2743, %v2742
      %v2766 = vpack.c.b16 %v2745, %v2744
      %v2767 = vpack.c.b16 %v2747, %v2746
      %v2768 = vpack.c.b16 %v2749, %v2748
      %v2769 = vpack.c.b16 %v2751, %v2750
      %v2770 = vpack.c.b16 %v2753, %v2752
      %v2771 = vpack.c.b16 %v2755, %v2754
      %2788 = vmatprep.subr.bf16.mxu0 0
      %2789 = vmatpush1.bf16.msra.mxu0 %v2756
      %2790 = vmatprep.subr.bf16.mxu0 0
      %2791 = vmatpush1.bf16.msra.mxu0 %v2757
      %2792 = vmatprep.subr.bf16.mxu0 0
      %2793 = vmatpush1.bf16.msra.mxu0 %v2758
      %2794 = vmatprep.subr.bf16.mxu0 0
      %2795 = vmatpush1.bf16.msra.mxu0 %v2759
      %2796 = vmatprep.subr.bf16.mxu0 0
      %2797 = vmatpush1.bf16.msra.mxu0 %v2760
      %2798 = vmatprep.subr.bf16.mxu0 0
      %2799 = vmatpush1.bf16.msra.mxu0 %v2761
      %2800 = vmatprep.subr.bf16.mxu0 0
      %2801 = vmatpush1.bf16.msra.mxu0 %v2762
      %2802 = vmatprep.subr.bf16.mxu0 0
      %2803 = vmatpush1.bf16.msra.mxu0 %v2763
      %2804 = vmatprep.subr.bf16.mxu0 0
      %2805 = vmatpush1.bf16.msra.mxu0 %v2764
      %2806 = vmatprep.subr.bf16.mxu0 0
      %2807 = vmatpush1.bf16.msra.mxu0 %v2765
      %2808 = vmatprep.subr.bf16.mxu0 0
      %2809 = vmatpush1.bf16.msra.mxu0 %v2766
      %2810 = vmatprep.subr.bf16.mxu0 0
      %2811 = vmatpush1.bf16.msra.mxu0 %v2767
      %2812 = vmatprep.subr.bf16.mxu0 0
      %2813 = vmatpush1.bf16.msra.mxu0 %v2768
      %2814 = vmatprep.subr.bf16.mxu0 0
      %2815 = vmatpush1.bf16.msra.mxu0 %v2769
      %2816 = vmatprep.subr.bf16.mxu0 0
      %2817 = vmatpush1.bf16.msra.mxu0 %v2770
      %2818 = vmatprep.subr.bf16.mxu0 0
      %2819 = vmatpush1.bf16.msra.mxu0 %v2771
      %2820 = vmatprep.mubr.bf16.mxu0 %v2635
      %2821 = vmatmul.mubr.bf16.gmra.mrb[0].mxu0 %v2634
      %v2822 = vpop.f32.mrb[0].mxu0
      %v2823 = vadd.f32 %v2690, %v2822
      %v2824 = vpop.f32.mrb[0].mxu0
      %v2825 = vpop.f32.mrb[0].mxu0
      %v2826 = vadd.f32 %v2690, %v2825
      %v2827 = vpop.f32.mrb[0].mxu0
      %2828 = vmatprep.mubr.bf16.mxu0 %v2637
      %2829 = vmatmul.mubr.bf16.gmra.mrb[0].mxu0 %v2636
      %v2830 = vpop.f32.mrb[0].mxu0
      %v2831 = vadd.f32 %v2690, %v2830
      %v2832 = vpop.f32.mrb[0].mxu0
      %v2833 = vpop.f32.mrb[0].mxu0
      %v2834 = vadd.f32 %v2690, %v2833
      %v2835 = vpop.f32.mrb[0].mxu0
      %2836 = vmatprep.mubr.bf16.mxu0 %v2639
      %2837 = vmatmul.mubr.bf16.gmra.mrb[0].mxu0 %v2638
      %v2838 = vpop.f32.mrb[0].mxu0
      %v2839 = vadd.f32 %v2690, %v2838
      %v2840 = vpop.f32.mrb[0].mxu0
      %v2841 = vpop.f32.mrb[0].mxu0
      %v2842 = vadd.f32 %v2690, %v2841
      %v2843 = vpop.f32.mrb[0].mxu0
      %2844 = vmatprep.mubr.bf16.mxu0 %v2641
      %2845 = vmatmul.mubr.bf16.gmra.mrb[0].mxu0 %v2640
      %v2846 = vpop.f32.mrb[0].mxu0
      %v2847 = vadd.f32 %v2690, %v2846
      %v2848 = vpop.f32.mrb[0].mxu0
      %v2849 = vpop.f32.mrb[0].mxu0
      %v2850 = vadd.f32 %v2690, %v2849
      %v2851 = vpop.f32.mrb[0].mxu0
      %2852 = vmatprep.mubr.bf16.mxu0 %v2643
      %2853 = vmatmul.mubr.bf16.gmra.mrb[0].mxu0 %v2642
      %v2854 = vpop.f32.mrb[0].mxu0
      %v2855 = vadd.f32 %v2690, %v2854
      %v2856 = vpop.f32.mrb[0].mxu0
      %v2857 = vpop.f32.mrb[0].mxu0
      %v2858 = vadd.f32 %v2690, %v2857
      %v2859 = vpop.f32.mrb[0].mxu0
      %2860 = vmatprep.mubr.bf16.mxu0 %v2645
      %2861 = vmatmul.mubr.bf16.gmra.mrb[0].mxu0 %v2644
      %v2862 = vpop.f32.mrb[0].mxu0
      %v2863 = vadd.f32 %v2690, %v2862
      %v2864 = vpop.f32.mrb[0].mxu0
      %v2865 = vpop.f32.mrb[0].mxu0
      %v2866 = vadd.f32 %v2690, %v2865
      %v2867 = vpop.f32.mrb[0].mxu0
      %2868 = vmatprep.mubr.bf16.mxu0 %v2647
      %2869 = vmatmul.mubr.bf16.gmra.mrb[0].mxu0 %v2646
      %v2870 = vpop.f32.mrb[0].mxu0
      %v2871 = vadd.f32 %v2690, %v2870
      %v2872 = vpop.f32.mrb[0].mxu0
      %v2873 = vpop.f32.mrb[0].mxu0
      %v2874 = vadd.f32 %v2690, %v2873
      %v2875 = vpop.f32.mrb[0].mxu0
      %2876 = vmatprep.mubr.bf16.mxu0 %v2649
      %2877 = vmatmul.mubr.bf16.gmra.mrb[0].mxu0 %v2648
      %v2878 = vpop.f32.mrb[0].mxu0
      %v2879 = vadd.f32 %v2690, %v2878
      %v2880 = vpop.f32.mrb[0].mxu0
      %v2881 = vpop.f32.mrb[0].mxu0
      %v2882 = vadd.f32 %v2690, %v2881
      %v2883 = vpop.f32.mrb[0].mxu0
      %2884 = vdwg.mxu0
      %v2885 = vadd.f32 %v2352, %v2823
      %v2886 = vadd.f32 %v2353, %v2826
      %v2887 = vadd.f32 %v2354, %v2831
      %v2888 = vadd.f32 %v2355, %v2834
      %v2889 = vadd.f32 %v2356, %v2839
      %v2890 = vadd.f32 %v2357, %v2842
      %v2891 = vadd.f32 %v2358, %v2847
      %v2892 = vadd.f32 %v2359, %v2850
      %v2893 = vadd.f32 %v2360, %v2855
      %v2894 = vadd.f32 %v2361, %v2858
      %v2895 = vadd.f32 %v2362, %v2863
      %v2896 = vadd.f32 %v2363, %v2866
      %v2897 = vadd.f32 %v2364, %v2871
      %v2898 = vadd.f32 %v2365, %v2874
      %v2899 = vadd.f32 %v2366, %v2879
      %v2900 = vadd.f32 %v2367, %v2882
      %s2901 = scalar_lea.vmem %s11, %s1895
      %v2902 = vld [vmem:[%s2901] sm:$0x1]
      %s2903 = scalar_lea.vmem %s12, %s1895
      %v2904 = vld [vmem:[%s2903] sm:$0x1]
      %2905 = vadd.xlane.f32.xlu0 %v2885
      %v2906 = vpop.xlane.xlu0 %2905
      %2907 = vadd.xlane.f32.xlu0 %v2886
      %v2908 = vpop.xlane.xlu0 %2907
      %2909 = vadd.xlane.f32.xlu0 %v2887
      %v2910 = vpop.xlane.xlu0 %2909
      %2911 = vadd.xlane.f32.xlu0 %v2888
      %v2912 = vpop.xlane.xlu0 %2911
      %2913 = vadd.xlane.f32.xlu0 %v2889
      %v2914 = vpop.xlane.xlu0 %2913
      %2915 = vadd.xlane.f32.xlu0 %v2890
      %v2916 = vpop.xlane.xlu0 %2915
      %2917 = vadd.xlane.f32.xlu0 %v2891
      %v2918 = vpop.xlane.xlu0 %2917
      %2919 = vadd.xlane.f32.xlu0 %v2892
      %v2920 = vpop.xlane.xlu0 %2919
      %2921 = vadd.xlane.f32.xlu0 %v2893
      %v2922 = vpop.xlane.xlu0 %2921
      %2923 = vadd.xlane.f32.xlu0 %v2894
      %v2924 = vpop.xlane.xlu0 %2923
      %2925 = vadd.xlane.f32.xlu0 %v2895
      %v2926 = vpop.xlane.xlu0 %2925
      %2927 = vadd.xlane.f32.xlu0 %v2896
      %v2928 = vpop.xlane.xlu0 %2927
      %2929 = vadd.xlane.f32.xlu0 %v2897
      %v2930 = vpop.xlane.xlu0 %2929
      %2931 = vadd.xlane.f32.xlu0 %v2898
      %v2932 = vpop.xlane.xlu0 %2931
      %2933 = vadd.xlane.f32.xlu0 %v2899
      %v2934 = vpop.xlane.xlu0 %2933
      %2935 = vadd.xlane.f32.xlu0 %v2900
      %v2936 = vpop.xlane.xlu0 %2935
      %v2937 = vmul.f32 %v2906, %v1545
      %v2938 = vmul.f32 %v2908, %v1545
      %v2939 = vmul.f32 %v2910, %v1545
      %v2940 = vmul.f32 %v2912, %v1545
      %v2941 = vmul.f32 %v2914, %v1545
      %v2942 = vmul.f32 %v2916, %v1545
      %v2943 = vmul.f32 %v2918, %v1545
      %v2944 = vmul.f32 %v2920, %v1545
      %v2945 = vmul.f32 %v2922, %v1545
      %v2946 = vmul.f32 %v2924, %v1545
      %v2947 = vmul.f32 %v2926, %v1545
      %v2948 = vmul.f32 %v2928, %v1545
      %v2949 = vmul.f32 %v2930, %v1545
      %v2950 = vmul.f32 %v2932, %v1545
      %v2951 = vmul.f32 %v2934, %v1545
      %v2952 = vmul.f32 %v2936, %v1545
      %v2953 = vmul.f32 %v2885, %v2885
      %v2954 = vmul.f32 %v2886, %v2886
      %v2955 = vmul.f32 %v2887, %v2887
      %v2956 = vmul.f32 %v2888, %v2888
      %v2957 = vmul.f32 %v2889, %v2889
      %v2958 = vmul.f32 %v2890, %v2890
      %v2959 = vmul.f32 %v2891, %v2891
      %v2960 = vmul.f32 %v2892, %v2892
      %v2961 = vmul.f32 %v2893, %v2893
      %v2962 = vmul.f32 %v2894, %v2894
      %v2963 = vmul.f32 %v2895, %v2895
      %v2964 = vmul.f32 %v2896, %v2896
      %v2965 = vmul.f32 %v2897, %v2897
      %v2966 = vmul.f32 %v2898, %v2898
      %v2967 = vmul.f32 %v2899, %v2899
      %v2968 = vmul.f32 %v2900, %v2900
      %2969 = vadd.xlane.f32.xlu0 %v2953
      %v2970 = vpop.xlane.xlu0 %2969
      %2971 = vadd.xlane.f32.xlu0 %v2954
      %v2972 = vpop.xlane.xlu0 %2971
      %2973 = vadd.xlane.f32.xlu0 %v2955
      %v2974 = vpop.xlane.xlu0 %2973
      %2975 = vadd.xlane.f32.xlu0 %v2956
      %v2976 = vpop.xlane.xlu0 %2975
      %2977 = vadd.xlane.f32.xlu0 %v2957
      %v2978 = vpop.xlane.xlu0 %2977
      %2979 = vadd.xlane.f32.xlu0 %v2958
      %v2980 = vpop.xlane.xlu0 %2979
      %2981 = vadd.xlane.f32.xlu0 %v2959
      %v2982 = vpop.xlane.xlu0 %2981
      %2983 = vadd.xlane.f32.xlu0 %v2960
      %v2984 = vpop.xlane.xlu0 %2983
      %2985 = vadd.xlane.f32.xlu0 %v2961
      %v2986 = vpop.xlane.xlu0 %2985
      %2987 = vadd.xlane.f32.xlu0 %v2962
      %v2988 = vpop.xlane.xlu0 %2987
      %2989 = vadd.xlane.f32.xlu0 %v2963
      %v2990 = vpop.xlane.xlu0 %2989
      %2991 = vadd.xlane.f32.xlu0 %v2964
      %v2992 = vpop.xlane.xlu0 %2991
      %2993 = vadd.xlane.f32.xlu0 %v2965
      %v2994 = vpop.xlane.xlu0 %2993
      %2995 = vadd.xlane.f32.xlu0 %v2966
      %v2996 = vpop.xlane.xlu0 %2995
      %2997 = vadd.xlane.f32.xlu0 %v2967
      %v2998 = vpop.xlane.xlu0 %2997
      %2999 = vadd.xlane.f32.xlu0 %v2968
      %v3000 = vpop.xlane.xlu0 %2999
      %v3001 = vmul.f32 %v2970, %v1545
      %v3002 = vmul.f32 %v2972, %v1545
      %v3003 = vmul.f32 %v2974, %v1545
      %v3004 = vmul.f32 %v2976, %v1545
      %v3005 = vmul.f32 %v2978, %v1545
      %v3006 = vmul.f32 %v2980, %v1545
      %v3007 = vmul.f32 %v2982, %v1545
      %v3008 = vmul.f32 %v2984, %v1545
      %v3009 = vmul.f32 %v2986, %v1545
      %v3010 = vmul.f32 %v2988, %v1545
      %v3011 = vmul.f32 %v2990, %v1545
      %v3012 = vmul.f32 %v2992, %v1545
      %v3013 = vmul.f32 %v2994, %v1545
      %v3014 = vmul.f32 %v2996, %v1545
      %v3015 = vmul.f32 %v2998, %v1545
      %v3016 = vmul.f32 %v3000, %v1545
      %v3017 = vmul.f32 %v2937, %v2937
      %v3018 = vmul.f32 %v2938, %v2938
      %v3019 = vmul.f32 %v2939, %v2939
      %v3020 = vmul.f32 %v2940, %v2940
      %v3021 = vmul.f32 %v2941, %v2941
      %v3022 = vmul.f32 %v2942, %v2942
      %v3023 = vmul.f32 %v2943, %v2943
      %v3024 = vmul.f32 %v2944, %v2944
      %v3025 = vmul.f32 %v2945, %v2945
      %v3026 = vmul.f32 %v2946, %v2946
      %v3027 = vmul.f32 %v2947, %v2947
      %v3028 = vmul.f32 %v2948, %v2948
      %v3029 = vmul.f32 %v2949, %v2949
      %v3030 = vmul.f32 %v2950, %v2950
      %v3031 = vmul.f32 %v2951, %v2951
      %v3032 = vmul.f32 %v2952, %v2952
      %v3033 = vsub.f32 %v3001, %v3017
      %v3034 = vsub.f32 %v3002, %v3018
      %v3035 = vsub.f32 %v3003, %v3019
      %v3036 = vsub.f32 %v3004, %v3020
      %v3037 = vsub.f32 %v3005, %v3021
      %v3038 = vsub.f32 %v3006, %v3022
      %v3039 = vsub.f32 %v3007, %v3023
      %v3040 = vsub.f32 %v3008, %v3024
      %v3041 = vsub.f32 %v3009, %v3025
      %v3042 = vsub.f32 %v3010, %v3026
      %v3043 = vsub.f32 %v3011, %v3027
      %v3044 = vsub.f32 %v3012, %v3028
      %v3045 = vsub.f32 %v3013, %v3029
      %v3046 = vsub.f32 %v3014, %v3030
      %v3047 = vsub.f32 %v3015, %v3031
      %v3048 = vsub.f32 %v3016, %v3032
      %v3049 = vsub.f32 %v2885, %v2937
      %v3050 = vsub.f32 %v2886, %v2938
      %v3051 = vsub.f32 %v2887, %v2939
      %v3052 = vsub.f32 %v2888, %v2940
      %v3053 = vsub.f32 %v2889, %v2941
      %v3054 = vsub.f32 %v2890, %v2942
      %v3055 = vsub.f32 %v2891, %v2943
      %v3056 = vsub.f32 %v2892, %v2944
      %v3057 = vsub.f32 %v2893, %v2945
      %v3058 = vsub.f32 %v2894, %v2946
      %v3059 = vsub.f32 %v2895, %v2947
      %v3060 = vsub.f32 %v2896, %v2948
      %v3061 = vsub.f32 %v2897, %v2949
      %v3062 = vsub.f32 %v2898, %v2950
      %v3063 = vsub.f32 %v2899, %v2951
      %v3064 = vsub.f32 %v2900, %v2952
      %v3065 = vadd.f32 %v3033, 1e-05
      %v3066 = vadd.f32 %v3034, 1e-05
      %v3067 = vadd.f32 %v3035, 1e-05
      %v3068 = vadd.f32 %v3036, 1e-05
      %v3069 = vadd.f32 %v3037, 1e-05
      %v3070 = vadd.f32 %v3038, 1e-05
      %v3071 = vadd.f32 %v3039, 1e-05
      %v3072 = vadd.f32 %v3040, 1e-05
      %v3073 = vadd.f32 %v3041, 1e-05
      %v3074 = vadd.f32 %v3042, 1e-05
      %v3075 = vadd.f32 %v3043, 1e-05
      %v3076 = vadd.f32 %v3044, 1e-05
      %v3077 = vadd.f32 %v3045, 1e-05
      %v3078 = vadd.f32 %v3046, 1e-05
      %v3079 = vadd.f32 %v3047, 1e-05
      %v3080 = vadd.f32 %v3048, 1e-05
      %v3081 = vrsqrt.pop %v3065
      %v3082 = vrsqrt.pop %v3066
      %v3083 = vrsqrt.pop %v3067
      %v3084 = vrsqrt.pop %v3068
      %v3085 = vrsqrt.pop %v3069
      %v3086 = vrsqrt.pop %v3070
      %v3087 = vrsqrt.pop %v3071
      %v3088 = vrsqrt.pop %v3072
      %v3089 = vrsqrt.pop %v3073
      %v3090 = vrsqrt.pop %v3074
      %v3091 = vrsqrt.pop %v3075
      %v3092 = vrsqrt.pop %v3076
      %v3093 = vrsqrt.pop %v3077
      %v3094 = vrsqrt.pop %v3078
      %v3095 = vrsqrt.pop %v3079
      %v3096 = vrsqrt.pop %v3080
      %v3097 = vmul.f32 %v3049, %v3081
      %v3098 = vmul.f32 %v3050, %v3082
      %v3099 = vmul.f32 %v3051, %v3083
      %v3100 = vmul.f32 %v3052, %v3084
      %v3101 = vmul.f32 %v3053, %v3085
      %v3102 = vmul.f32 %v3054, %v3086
      %v3103 = vmul.f32 %v3055, %v3087
      %v3104 = vmul.f32 %v3056, %v3088
      %v3105 = vmul.f32 %v3057, %v3089
      %v3106 = vmul.f32 %v3058, %v3090
      %v3107 = vmul.f32 %v3059, %v3091
      %v3108 = vmul.f32 %v3060, %v3092
      %v3109 = vmul.f32 %v3061, %v3093
      %v3110 = vmul.f32 %v3062, %v3094
      %v3111 = vmul.f32 %v3063, %v3095
      %v3112 = vmul.f32 %v3064, %v3096
      %v3114 = vlaneseq
      %v3115 = vshrl.u32 %v3114, 7
      %v3116 = vsub.s32 0, %v3115
      %v3117 = vrot.slane %v2902, %v3116
      %v3119 = vmul.f32 %v3097, %v3117
      %v3120 = vmul.f32 %v3098, %v3117
      %v3121 = vmul.f32 %v3099, %v3117
      %v3122 = vmul.f32 %v3100, %v3117
      %v3123 = vmul.f32 %v3101, %v3117
      %v3124 = vmul.f32 %v3102, %v3117
      %v3125 = vmul.f32 %v3103, %v3117
      %v3126 = vmul.f32 %v3104, %v3117
      %v3127 = vmul.f32 %v3105, %v3117
      %v3128 = vmul.f32 %v3106, %v3117
      %v3129 = vmul.f32 %v3107, %v3117
      %v3130 = vmul.f32 %v3108, %v3117
      %v3131 = vmul.f32 %v3109, %v3117
      %v3132 = vmul.f32 %v3110, %v3117
      %v3133 = vmul.f32 %v3111, %v3117
      %v3134 = vmul.f32 %v3112, %v3117
      %v3136 = vlaneseq
      %v3137 = vshrl.u32 %v3136, 7
      %v3138 = vsub.s32 0, %v3137
      %v3139 = vrot.slane %v2904, %v3138
      %v3141 = vadd.f32 %v3119, %v3139
      %v3142 = vadd.f32 %v3120, %v3139
      %v3143 = vadd.f32 %v3121, %v3139
      %v3144 = vadd.f32 %v3122, %v3139
      %v3145 = vadd.f32 %v3123, %v3139
      %v3146 = vadd.f32 %v3124, %v3139
      %v3147 = vadd.f32 %v3125, %v3139
      %v3148 = vadd.f32 %v3126, %v3139
      %v3149 = vadd.f32 %v3127, %v3139
      %v3150 = vadd.f32 %v3128, %v3139
      %v3151 = vadd.f32 %v3129, %v3139
      %v3152 = vadd.f32 %v3130, %v3139
      %v3153 = vadd.f32 %v3131, %v3139
      %v3154 = vadd.f32 %v3132, %v3139
      %v3155 = vadd.f32 %v3133, %v3139
      %v3156 = vadd.f32 %v3134, %v3139
    $region81: #{utransformer_forward.3} parent=1 // loop_footer
      %s1899 = sadd.s32 1, %s1895
    $region82: #{utransformer_forward.3} parent=1 // loop_footer_branch
      %1894 = sbr.rel target = $region78
    $region83: #{utransformer_forward.3} parent=1 // loop_exit
      _
    %3157 = vadd.xlane.f32.xlu0 %v1900
    %v3158 = vpop.xlane.xlu0 %3157
    %3159 = vadd.xlane.f32.xlu0 %v1901
    %v3160 = vpop.xlane.xlu0 %3159
    %3161 = vadd.xlane.f32.xlu0 %v1902
    %v3162 = vpop.xlane.xlu0 %3161
    %3163 = vadd.xlane.f32.xlu0 %v1903
    %v3164 = vpop.xlane.xlu0 %3163
    %3165 = vadd.xlane.f32.xlu0 %v1904
    %v3166 = vpop.xlane.xlu0 %3165
    %3167 = vadd.xlane.f32.xlu0 %v1905
    %v3168 = vpop.xlane.xlu0 %3167
    %3169 = vadd.xlane.f32.xlu0 %v1906
    %v3170 = vpop.xlane.xlu0 %3169
    %3171 = vadd.xlane.f32.xlu0 %v1907
    %v3172 = vpop.xlane.xlu0 %3171
    %3173 = vadd.xlane.f32.xlu0 %v1908
    %v3174 = vpop.xlane.xlu0 %3173
    %3175 = vadd.xlane.f32.xlu0 %v1909
    %v3176 = vpop.xlane.xlu0 %3175
    %3177 = vadd.xlane.f32.xlu0 %v1910
    %v3178 = vpop.xlane.xlu0 %3177
    %3179 = vadd.xlane.f32.xlu0 %v1911
    %v3180 = vpop.xlane.xlu0 %3179
    %3181 = vadd.xlane.f32.xlu0 %v1912
    %v3182 = vpop.xlane.xlu0 %3181
    %3183 = vadd.xlane.f32.xlu0 %v1913
    %v3184 = vpop.xlane.xlu0 %3183
    %3185 = vadd.xlane.f32.xlu0 %v1914
    %v3186 = vpop.xlane.xlu0 %3185
    %3187 = vadd.xlane.f32.xlu0 %v1915
    %v3188 = vpop.xlane.xlu0 %3187
    %v3189 = vmul.f32 %v3158, %v1545
    %v3190 = vmul.f32 %v3160, %v1545
    %v3191 = vmul.f32 %v3162, %v1545
    %v3192 = vmul.f32 %v3164, %v1545
    %v3193 = vmul.f32 %v3166, %v1545
    %v3194 = vmul.f32 %v3168, %v1545
    %v3195 = vmul.f32 %v3170, %v1545
    %v3196 = vmul.f32 %v3172, %v1545
    %v3197 = vmul.f32 %v3174, %v1545
    %v3198 = vmul.f32 %v3176, %v1545
    %v3199 = vmul.f32 %v3178, %v1545
    %v3200 = vmul.f32 %v3180, %v1545
    %v3201 = vmul.f32 %v3182, %v1545
    %v3202 = vmul.f32 %v3184, %v1545
    %v3203 = vmul.f32 %v3186, %v1545
    %v3204 = vmul.f32 %v3188, %v1545
    %v3205 = vmul.f32 %v1900, %v1900
    %v3206 = vmul.f32 %v1901, %v1901
    %v3207 = vmul.f32 %v1902, %v1902
    %v3208 = vmul.f32 %v1903, %v1903
    %v3209 = vmul.f32 %v1904, %v1904
    %v3210 = vmul.f32 %v1905, %v1905
    %v3211 = vmul.f32 %v1906, %v1906
    %v3212 = vmul.f32 %v1907, %v1907
    %v3213 = vmul.f32 %v1908, %v1908
    %v3214 = vmul.f32 %v1909, %v1909
    %v3215 = vmul.f32 %v1910, %v1910
    %v3216 = vmul.f32 %v1911, %v1911
    %v3217 = vmul.f32 %v1912, %v1912
    %v3218 = vmul.f32 %v1913, %v1913
    %v3219 = vmul.f32 %v1914, %v1914
    %v3220 = vmul.f32 %v1915, %v1915
    %3221 = vadd.xlane.f32.xlu0 %v3205
    %v3222 = vpop.xlane.xlu0 %3221
    %3223 = vadd.xlane.f32.xlu0 %v3206
    %v3224 = vpop.xlane.xlu0 %3223
    %3225 = vadd.xlane.f32.xlu0 %v3207
    %v3226 = vpop.xlane.xlu0 %3225
    %3227 = vadd.xlane.f32.xlu0 %v3208
    %v3228 = vpop.xlane.xlu0 %3227
    %3229 = vadd.xlane.f32.xlu0 %v3209
    %v3230 = vpop.xlane.xlu0 %3229
    %3231 = vadd.xlane.f32.xlu0 %v3210
    %v3232 = vpop.xlane.xlu0 %3231
    %3233 = vadd.xlane.f32.xlu0 %v3211
    %v3234 = vpop.xlane.xlu0 %3233
    %3235 = vadd.xlane.f32.xlu0 %v3212
    %v3236 = vpop.xlane.xlu0 %3235
    %3237 = vadd.xlane.f32.xlu0 %v3213
    %v3238 = vpop.xlane.xlu0 %3237
    %3239 = vadd.xlane.f32.xlu0 %v3214
    %v3240 = vpop.xlane.xlu0 %3239
    %3241 = vadd.xlane.f32.xlu0 %v3215
    %v3242 = vpop.xlane.xlu0 %3241
    %3243 = vadd.xlane.f32.xlu0 %v3216
    %v3244 = vpop.xlane.xlu0 %3243
    %3245 = vadd.xlane.f32.xlu0 %v3217
    %v3246 = vpop.xlane.xlu0 %3245
    %3247 = vadd.xlane.f32.xlu0 %v3218
    %v3248 = vpop.xlane.xlu0 %3247
    %3249 = vadd.xlane.f32.xlu0 %v3219
    %v3250 = vpop.xlane.xlu0 %3249
    %3251 = vadd.xlane.f32.xlu0 %v3220
    %v3252 = vpop.xlane.xlu0 %3251
    %v3253 = vmul.f32 %v3222, %v1545
    %v3254 = vmul.f32 %v3224, %v1545
    %v3255 = vmul.f32 %v3226, %v1545
    %v3256 = vmul.f32 %v3228, %v1545
    %v3257 = vmul.f32 %v3230, %v1545
    %v3258 = vmul.f32 %v3232, %v1545
    %v3259 = vmul.f32 %v3234, %v1545
    %v3260 = vmul.f32 %v3236, %v1545
    %v3261 = vmul.f32 %v3238, %v1545
    %v3262 = vmul.f32 %v3240, %v1545
    %v3263 = vmul.f32 %v3242, %v1545
    %v3264 = vmul.f32 %v3244, %v1545
    %v3265 = vmul.f32 %v3246, %v1545
    %v3266 = vmul.f32 %v3248, %v1545
    %v3267 = vmul.f32 %v3250, %v1545
    %v3268 = vmul.f32 %v3252, %v1545
    %v3269 = vmul.f32 %v3189, %v3189
    %v3270 = vmul.f32 %v3190, %v3190
    %v3271 = vmul.f32 %v3191, %v3191
    %v3272 = vmul.f32 %v3192, %v3192
    %v3273 = vmul.f32 %v3193, %v3193
    %v3274 = vmul.f32 %v3194, %v3194
    %v3275 = vmul.f32 %v3195, %v3195
    %v3276 = vmul.f32 %v3196, %v3196
    %v3277 = vmul.f32 %v3197, %v3197
    %v3278 = vmul.f32 %v3198, %v3198
    %v3279 = vmul.f32 %v3199, %v3199
    %v3280 = vmul.f32 %v3200, %v3200
    %v3281 = vmul.f32 %v3201, %v3201
    %v3282 = vmul.f32 %v3202, %v3202
    %v3283 = vmul.f32 %v3203, %v3203
    %v3284 = vmul.f32 %v3204, %v3204
    %v3285 = vsub.f32 %v3253, %v3269
    %v3286 = vsub.f32 %v3254, %v3270
    %v3287 = vsub.f32 %v3255, %v3271
    %v3288 = vsub.f32 %v3256, %v3272
    %v3289 = vsub.f32 %v3257, %v3273
    %v3290 = vsub.f32 %v3258, %v3274
    %v3291 = vsub.f32 %v3259, %v3275
    %v3292 = vsub.f32 %v3260, %v3276
    %v3293 = vsub.f32 %v3261, %v3277
    %v3294 = vsub.f32 %v3262, %v3278
    %v3295 = vsub.f32 %v3263, %v3279
    %v3296 = vsub.f32 %v3264, %v3280
    %v3297 = vsub.f32 %v3265, %v3281
    %v3298 = vsub.f32 %v3266, %v3282
    %v3299 = vsub.f32 %v3267, %v3283
    %v3300 = vsub.f32 %v3268, %v3284
    %v3301 = vsub.f32 %v1900, %v3189
    %v3302 = vsub.f32 %v1901, %v3190
    %v3303 = vsub.f32 %v1902, %v3191
    %v3304 = vsub.f32 %v1903, %v3192
    %v3305 = vsub.f32 %v1904, %v3193
    %v3306 = vsub.f32 %v1905, %v3194
    %v3307 = vsub.f32 %v1906, %v3195
    %v3308 = vsub.f32 %v1907, %v3196
    %v3309 = vsub.f32 %v1908, %v3197
    %v3310 = vsub.f32 %v1909, %v3198
    %v3311 = vsub.f32 %v1910, %v3199
    %v3312 = vsub.f32 %v1911, %v3200
    %v3313 = vsub.f32 %v1912, %v3201
    %v3314 = vsub.f32 %v1913, %v3202
    %v3315 = vsub.f32 %v1914, %v3203
    %v3316 = vsub.f32 %v1915, %v3204
    %v3317 = vadd.f32 %v3285, 1e-05
    %v3318 = vadd.f32 %v3286, 1e-05
    %v3319 = vadd.f32 %v3287, 1e-05
    %v3320 = vadd.f32 %v3288, 1e-05
    %v3321 = vadd.f32 %v3289, 1e-05
    %v3322 = vadd.f32 %v3290, 1e-05
    %v3323 = vadd.f32 %v3291, 1e-05
    %v3324 = vadd.f32 %v3292, 1e-05
    %v3325 = vadd.f32 %v3293, 1e-05
    %v3326 = vadd.f32 %v3294, 1e-05
    %v3327 = vadd.f32 %v3295, 1e-05
    %v3328 = vadd.f32 %v3296, 1e-05
    %v3329 = vadd.f32 %v3297, 1e-05
    %v3330 = vadd.f32 %v3298, 1e-05
    %v3331 = vadd.f32 %v3299, 1e-05
    %v3332 = vadd.f32 %v3300, 1e-05
    %v3333 = vrsqrt.pop %v3317
    %v3334 = vrsqrt.pop %v3318
    %v3335 = vrsqrt.pop %v3319
    %v3336 = vrsqrt.pop %v3320
    %v3337 = vrsqrt.pop %v3321
    %v3338 = vrsqrt.pop %v3322
    %v3339 = vrsqrt.pop %v3323
    %v3340 = vrsqrt.pop %v3324
    %v3341 = vrsqrt.pop %v3325
    %v3342 = vrsqrt.pop %v3326
    %v3343 = vrsqrt.pop %v3327
    %v3344 = vrsqrt.pop %v3328
    %v3345 = vrsqrt.pop %v3329
    %v3346 = vrsqrt.pop %v3330
    %v3347 = vrsqrt.pop %v3331
    %v3348 = vrsqrt.pop %v3332
    %v3349 = vmul.f32 %v3301, %v3333
    %v3350 = vmul.f32 %v3302, %v3334
    %v3351 = vmul.f32 %v3303, %v3335
    %v3352 = vmul.f32 %v3304, %v3336
    %v3353 = vmul.f32 %v3305, %v3337
    %v3354 = vmul.f32 %v3306, %v3338
    %v3355 = vmul.f32 %v3307, %v3339
    %v3356 = vmul.f32 %v3308, %v3340
    %v3357 = vmul.f32 %v3309, %v3341
    %v3358 = vmul.f32 %v3310, %v3342
    %v3359 = vmul.f32 %v3311, %v3343
    %v3360 = vmul.f32 %v3312, %v3344
    %v3361 = vmul.f32 %v3313, %v3345
    %v3362 = vmul.f32 %v3314, %v3346
    %v3363 = vmul.f32 %v3315, %v3347
    %v3364 = vmul.f32 %v3316, %v3348
    %v3365 = vmul.f32 %v3349, %v1726
    %v3366 = vmul.f32 %v3350, %v1726
    %v3367 = vmul.f32 %v3351, %v1726
    %v3368 = vmul.f32 %v3352, %v1726
    %v3369 = vmul.f32 %v3353, %v1726
    %v3370 = vmul.f32 %v3354, %v1726
    %v3371 = vmul.f32 %v3355, %v1726
    %v3372 = vmul.f32 %v3356, %v1726
    %v3373 = vmul.f32 %v3357, %v1726
    %v3374 = vmul.f32 %v3358, %v1726
    %v3375 = vmul.f32 %v3359, %v1726
    %v3376 = vmul.f32 %v3360, %v1726
    %v3377 = vmul.f32 %v3361, %v1726
    %v3378 = vmul.f32 %v3362, %v1726
    %v3379 = vmul.f32 %v3363, %v1726
    %v3380 = vmul.f32 %v3364, %v1726
    %v3381 = vadd.f32 %v3365, %v1748
    %v3382 = vadd.f32 %v3366, %v1748
    %v3383 = vadd.f32 %v3367, %v1748
    %v3384 = vadd.f32 %v3368, %v1748
    %v3385 = vadd.f32 %v3369, %v1748
    %v3386 = vadd.f32 %v3370, %v1748
    %v3387 = vadd.f32 %v3371, %v1748
    %v3388 = vadd.f32 %v3372, %v1748
    %v3389 = vadd.f32 %v3373, %v1748
    %v3390 = vadd.f32 %v3374, %v1748
    %v3391 = vadd.f32 %v3375, %v1748
    %v3392 = vadd.f32 %v3376, %v1748
    %v3393 = vadd.f32 %v3377, %v1748
    %v3394 = vadd.f32 %v3378, %v1748
    %v3395 = vadd.f32 %v3379, %v1748
    %v3396 = vadd.f32 %v3380, %v1748
    %v3397 = vpack.c.bf16 %v3382, %v3381
    %v3398 = vpack.c.bf16 %v3384, %v3383
    %v3399 = vpack.c.bf16 %v3386, %v3385
    %v3400 = vpack.c.bf16 %v3388, %v3387
    %v3401 = vpack.c.bf16 %v3390, %v3389
    %v3402 = vpack.c.bf16 %v3392, %v3391
    %v3403 = vpack.c.bf16 %v3394, %v3393
    %v3404 = vpack.c.bf16 %v3396, %v3395
    %v3405 = vld [vmem:[%s15] sm:$0xf]
    %v3406 = vld [vmem:[%s15 + $0x4] sm:$0xf]
    %v3407 = vld [vmem:[%s15 + $0x8] sm:$0xf]
    %v3408 = vld [vmem:[%s15 + $0xc] sm:$0xf]
    %v3409 = vld [vmem:[%s15 + $0x10] sm:$0xf]
    %v3410 = vld [vmem:[%s15 + $0x14] sm:$0xf]
    %v3411 = vld [vmem:[%s15 + $0x18] sm:$0xf]
    %v3412 = vld [vmem:[%s15 + $0x1c] sm:$0xf]
    %v3413 = vld [vmem:[%s15 + $0x20] sm:$0xf]
    %v3414 = vld [vmem:[%s15 + $0x24] sm:$0xf]
    %v3415 = vld [vmem:[%s15 + $0x28] sm:$0xf]
    %v3416 = vld [vmem:[%s15 + $0x2c] sm:$0xf]
    %v3417 = vld [vmem:[%s15 + $0x30] sm:$0xf]
    %v3418 = vld [vmem:[%s15 + $0x34] sm:$0xf]
    %v3419 = vld [vmem:[%s15 + $0x38] sm:$0xf]
    %v3420 = vld [vmem:[%s15 + $0x3c] sm:$0xf]
    %v3437 = vunpack.c.l.b16 %v3405
    %v3438 = vunpack.c.l.b16 %v3406
    %v3439 = vunpack.c.l.b16 %v3407
    %v3440 = vunpack.c.l.b16 %v3408
    %v3441 = vunpack.c.l.b16 %v3409
    %v3442 = vunpack.c.l.b16 %v3410
    %v3443 = vunpack.c.l.b16 %v3411
    %v3444 = vunpack.c.l.b16 %v3412
    %v3445 = vunpack.c.l.b16 %v3413
    %v3446 = vunpack.c.l.b16 %v3414
    %v3447 = vunpack.c.l.b16 %v3415
    %v3448 = vunpack.c.l.b16 %v3416
    %v3449 = vunpack.c.l.b16 %v3417
    %v3450 = vunpack.c.l.b16 %v3418
    %v3451 = vunpack.c.l.b16 %v3419
    %v3452 = vunpack.c.l.b16 %v3420
    %v3453 = vpack.c.b16 %v3438, %v3437
    %v3454 = vpack.c.b16 %v3440, %v3439
    %v3455 = vpack.c.b16 %v3442, %v3441
    %v3456 = vpack.c.b16 %v3444, %v3443
    %v3457 = vpack.c.b16 %v3446, %v3445
    %v3458 = vpack.c.b16 %v3448, %v3447
    %v3459 = vpack.c.b16 %v3450, %v3449
    %v3460 = vpack.c.b16 %v3452, %v3451
    %3469 = vmatprep.subr.bf16.mxu0 0
    %3470 = vmatpush1.bf16.msra.mxu0 %v3453
    %3471 = vmatprep.subr.bf16.mxu0 0
    %3472 = vmatpush1.bf16.msra.mxu0 %v3454
    %3473 = vmatprep.subr.bf16.mxu0 0
    %3474 = vmatpush1.bf16.msra.mxu0 %v3455
    %3475 = vmatprep.subr.bf16.mxu0 0
    %3476 = vmatpush1.bf16.msra.mxu0 %v3456
    %3477 = vmatprep.subr.bf16.mxu0 0
    %3478 = vmatpush1.bf16.msra.mxu0 %v3457
    %3479 = vmatprep.subr.bf16.mxu0 0
    %3480 = vmatpush1.bf16.msra.mxu0 %v3458
    %3481 = vmatprep.subr.bf16.mxu0 0
    %3482 = vmatpush1.bf16.msra.mxu0 %v3459
    %3483 = vmatprep.subr.bf16.mxu0 0
    %3484 = vmatpush1.bf16.msra.mxu0 %v3460
    %3485 = vmatprep.subr.bf16.mxu0 0
    %3486 = vmatpush1.bf16.msra.mxu0 0
    %3487 = vmatprep.subr.bf16.mxu0 0
    %3488 = vmatpush1.bf16.msra.mxu0 0
    %3489 = vmatprep.subr.bf16.mxu0 0
    %3490 = vmatpush1.bf16.msra.mxu0 0
    %3491 = vmatprep.subr.bf16.mxu0 0
    %3492 = vmatpush1.bf16.msra.mxu0 0
    %3493 = vmatprep.subr.bf16.mxu0 0
    %3494 = vmatpush1.bf16.msra.mxu0 0
    %3495 = vmatprep.subr.bf16.mxu0 0
    %3496 = vmatpush1.bf16.msra.mxu0 0
    %3497 = vmatprep.subr.bf16.mxu0 0
    %3498 = vmatpush1.bf16.msra.mxu0 0
    %3499 = vmatprep.subr.bf16.mxu0 0
    %3500 = vmatpush1.bf16.msra.mxu0 0
    %3501 = vmatprep.mubr.bf16.mxu0 0
    %3502 = vmatmul.mubr.bf16.gmra.mrb[0].mxu0 %v3397
    %v3503 = vpop.f32.mrb[0].mxu0
    %v3504 = vadd.f32 0.0, %v3503
    %v3505 = vpop.f32.mrb[0].mxu0
    %v3506 = vpop.f32.mrb[0].mxu0
    %v3507 = vadd.f32 0.0, %v3506
    %v3508 = vpop.f32.mrb[0].mxu0
    %3509 = vmatprep.mubr.bf16.mxu0 0
    %3510 = vmatmul.mubr.bf16.gmra.mrb[0].mxu0 %v3398
    %v3511 = vpop.f32.mrb[0].mxu0
    %v3512 = vadd.f32 0.0, %v3511
    %v3513 = vpop.f32.mrb[0].mxu0
    %v3514 = vpop.f32.mrb[0].mxu0
    %v3515 = vadd.f32 0.0, %v3514
    %v3516 = vpop.f32.mrb[0].mxu0
    %3517 = vmatprep.mubr.bf16.mxu0 0
    %3518 = vmatmul.mubr.bf16.gmra.mrb[0].mxu0 %v3399
    %v3519 = vpop.f32.mrb[0].mxu0
    %v3520 = vadd.f32 0.0, %v3519
    %v3521 = vpop.f32.mrb[0].mxu0
    %v3522 = vpop.f32.mrb[0].mxu0
    %v3523 = vadd.f32 0.0, %v3522
    %v3524 = vpop.f32.mrb[0].mxu0
    %3525 = vmatprep.mubr.bf16.mxu0 0
    %3526 = vmatmul.mubr.bf16.gmra.mrb[0].mxu0 %v3400
    %v3527 = vpop.f32.mrb[0].mxu0
    %v3528 = vadd.f32 0.0, %v3527
    %v3529 = vpop.f32.mrb[0].mxu0
    %v3530 = vpop.f32.mrb[0].mxu0
    %v3531 = vadd.f32 0.0, %v3530
    %v3532 = vpop.f32.mrb[0].mxu0
    %3533 = vmatprep.mubr.bf16.mxu0 0
    %3534 = vmatmul.mubr.bf16.gmra.mrb[0].mxu0 %v3401
    %v3535 = vpop.f32.mrb[0].mxu0
    %v3536 = vadd.f32 0.0, %v3535
    %v3537 = vpop.f32.mrb[0].mxu0
    %v3538 = vpop.f32.mrb[0].mxu0
    %v3539 = vadd.f32 0.0, %v3538
    %v3540 = vpop.f32.mrb[0].mxu0
    %3541 = vmatprep.mubr.bf16.mxu0 0
    %3542 = vmatmul.mubr.bf16.gmra.mrb[0].mxu0 %v3402
    %v3543 = vpop.f32.mrb[0].mxu0
    %v3544 = vadd.f32 0.0, %v3543
    %v3545 = vpop.f32.mrb[0].mxu0
    %v3546 = vpop.f32.mrb[0].mxu0
    %v3547 = vadd.f32 0.0, %v3546
    %v3548 = vpop.f32.mrb[0].mxu0
    %3549 = vmatprep.mubr.bf16.mxu0 0
    %3550 = vmatmul.mubr.bf16.gmra.mrb[0].mxu0 %v3403
    %v3551 = vpop.f32.mrb[0].mxu0
    %v3552 = vadd.f32 0.0, %v3551
    %v3553 = vpop.f32.mrb[0].mxu0
    %v3554 = vpop.f32.mrb[0].mxu0
    %v3555 = vadd.f32 0.0, %v3554
    %v3556 = vpop.f32.mrb[0].mxu0
    %3557 = vmatprep.mubr.bf16.mxu0 0
    %3558 = vmatmul.mubr.bf16.gmra.mrb[0].mxu0 %v3404
    %v3559 = vpop.f32.mrb[0].mxu0
    %v3560 = vadd.f32 0.0, %v3559
    %v3561 = vpop.f32.mrb[0].mxu0
    %v3562 = vpop.f32.mrb[0].mxu0
    %v3563 = vadd.f32 0.0, %v3562
    %v3564 = vpop.f32.mrb[0].mxu0
    %3565 = vdwg.mxu0
    %3566 = vst [vmem:[%s16] sm:$0xff] %v3504
    %3567 = vst [vmem:[%s16 + $0x8] sm:$0xff] %v3507
    %3568 = vst [vmem:[%s16 + $0x10] sm:$0xff] %v3512
    %3569 = vst [vmem:[%s16 + $0x18] sm:$0xff] %v3515
    %3570 = vst [vmem:[%s16 + $0x20] sm:$0xff] %v3520
    %3571 = vst [vmem:[%s16 + $0x28] sm:$0xff] %v3523
    %3572 = vst [vmem:[%s16 + $0x30] sm:$0xff] %v3528
    %3573 = vst [vmem:[%s16 + $0x38] sm:$0xff] %v3531
    %3574 = vst [vmem:[%s16 + $0x40] sm:$0xff] %v3536
    %3575 = vst [vmem:[%s16 + $0x48] sm:$0xff] %v3539
    %3576 = vst [vmem:[%s16 + $0x50] sm:$0xff] %v3544
    %3577 = vst [vmem:[%s16 + $0x58] sm:$0xff] %v3547
    %3578 = vst [vmem:[%s16 + $0x60] sm:$0xff] %v3552
    %3579 = vst [vmem:[%s16 + $0x68] sm:$0xff] %v3555
    %3580 = vst [vmem:[%s16 + $0x70] sm:$0xff] %v3560
    %3581 = vst [vmem:[%s16 + $0x78] sm:$0xff] %v3563
    // Predicated region
    $region84: #{utransformer_forward.3} parent=1 // pred_check
      _
    $region85: #{utransformer_forward.3} parent=1 // pred_check_branch
      %3583 = sbr.rel (0) target = $region87
    $region86: #{utransformer_forward.3} parent=1 // pred_region
      _
    $region87: #{utransformer_forward.3} parent=1 // pred_fallthru
      _
    // Predicated region
    $region88: #{utransformer_forward.3} parent=1 // pred_check
      _
    $region89: #{utransformer_forward.3} parent=1 // pred_check_branch
      %3585 = sbr.rel (0) target = $region91
    $region90: #{utransformer_forward.3} parent=1 // pred_region
      _
    $region91: #{utransformer_forward.3} parent=1 // pred_fallthru
      _
    %3586 = vsyncpa [#allocation3], 1

</llo_original>
